<compile_context>
chip_gen: v6e
topology: v6e:2x2x1
jax: 0.10.0
libtpu: 0.0.40
codegen_flags: <defaults>
</compile_context>

<pallas_src>
import functools
import math

import jax
import jax.numpy as jnp
import numpy as np
from jax import lax
from jax.experimental import pallas as pl
from jax.experimental.pallas import tpu as pltpu


def _round_up(n, m):
    return ((n + m - 1) // m) * m


def _attn_block(x_ref, wqkv_ref, bqkv_ref, wd_ref, bd_ref, o_ref, *,
                num_heads, depth):
    """One CTRL multi-head self-attention block, all batches in one shot."""
    H = num_heads
    B, S, D = x_ref.shape
    Dp = wqkv_ref.shape[1] // 3                      # lane-padded head-concat width

    # ---- fused QKV projection: native bf16 MXU operands, f32 accumulate ----
    x2 = x_ref[...].reshape(B * S, D).astype(jnp.bfloat16)           # (B*S, D)
    qkv = lax.dot_general(x2, wqkv_ref[...], (((1,), (0,)), ((), ())),
                          preferred_element_type=jnp.float32)
    qkv = (qkv + bqkv_ref[...]).reshape(B, S, 3 * Dp)                # (B, S, 3*Dp)

    q = qkv[:, :, 0:Dp]          # 1/sqrt(depth) already folded into Wq / bq
    k = qkv[:, :, Dp:2 * Dp]     # pad columns of k / v are exactly zero
    v = qkv[:, :, 2 * Dp:3 * Dp]

    # ---- head-column mask from 2-D iotas (no extra input / DMA) ------------
    # mask[h*S + s, c] = 1  iff column c belongs to head h  (0 on pad columns).
    shift = S.bit_length() - 1                       # S is a power of two
    r = lax.broadcasted_iota(jnp.int32, (H * S, Dp), 0)
    c = lax.broadcasted_iota(jnp.int32, (H * S, Dp), 1)
    lo = (r >> shift) * depth                        # head_of_row * depth
    mask = ((c >= lo) & (c < lo + depth)).astype(jnp.float32)        # (H*S, Dp)

    # Head-packed queries: row (h*S + s) of batch b = q[b, s, :] masked to head
    # h's columns.  Only leading-dim broadcasts / reshapes (layout no-ops, S=8).
    q_rep = jnp.broadcast_to(q[:, None, :, :], (B, H, S, Dp)).reshape(B, H * S, Dp)
    qm = q_rep * mask                                                # (B, H*S, Dp)

    # scores[b,(h,s),t] = sum_{c in head h} q[b,s,c]*k[b,t,c]  (one batched matmul)
    scores = lax.dot_general(qm, k, (((2,), (2,)), ((0,), (0,))),
                             preferred_element_type=jnp.float32)     # (B, H*S, S)

    # Softmax over keys (module is called with mask=None / attention_mask=None).
    m = jnp.max(scores, axis=-1, keepdims=True)
    e = jnp.exp(scores - m)
    attn = e * pl.reciprocal(jnp.sum(e, axis=-1, keepdims=True), approx=True)

    # Apply every head's weights to all of v (one batched matmul), then keep
    # each head's own column block via the same mask.
    ctx_all = lax.dot_general(attn, v, (((2,), (1,)), ((0,), (0,))),
                              preferred_element_type=jnp.float32)    # (B, H*S, Dp)
    ctx = jnp.sum((ctx_all * mask).reshape(B, H, S, Dp), axis=1)     # (B, S, Dp)

    # ---- output dense projection (bf16 operands, f32 accumulate) -----------
    ctx2 = ctx.reshape(B * S, Dp).astype(jnp.bfloat16)
    out = lax.dot_general(ctx2, wd_ref[...], (((1,), (0,)), ((), ())),
                          preferred_element_type=jnp.float32)        # (B*S, D)
    o_ref[...] = (out + bd_ref[...]).reshape(B, S, D).astype(o_ref.dtype)


def _fused_kernel(x0_ref, wqkv0_ref, bqkv0_ref, wd0_ref, bd0_ref,
                  x1_ref, wqkv1_ref, bqkv1_ref, wd1_ref, bd1_ref,
                  o0_ref, o1_ref, *, heads0, depth0, heads1, depth1):
    _attn_block(x0_ref, wqkv0_ref, bqkv0_ref, wd0_ref, bd0_ref, o0_ref,
                num_heads=heads0, depth=depth0)
    _attn_block(x1_ref, wqkv1_ref, bqkv1_ref, wd1_ref, bd1_ref, o1_ref,
                num_heads=heads1, depth=depth1)


def ctrl_model_forward(x, y, p0, p1, heads0, heads1):
    """x: (B, S, 192) f32, y: (B, S, 66) f32 -> the two dense outputs."""
    B0, S0, D0 = x.shape
    B1, S1, D1 = y.shape
    assert S0 & (S0 - 1) == 0 and S1 & (S1 - 1) == 0, "seq len must be a power of two"

    kernel = functools.partial(_fused_kernel,
                               heads0=heads0, depth0=p0["depth"],
                               heads1=heads1, depth1=p1["depth"])
    vmem = functools.partial(pl.BlockSpec, memory_space=pltpu.MemorySpace.VMEM)

    # No grid: one invocation computes both attention blocks; every ref is the
    # whole (small) array resident in VMEM (total footprint well under 2 MiB).
    return pl.pallas_call(
        kernel,
        out_shape=(jax.ShapeDtypeStruct((B0, S0, D0), jnp.float32),
                   jax.ShapeDtypeStruct((B1, S1, D1), jnp.float32)),
        in_specs=[vmem()] * 10,
        out_specs=(vmem(), vmem()),
    )(x, p0["wqkv"], p0["bqkv"], p0["wd"], p0["bd"],
      y, p1["wqkv"], p1["bqkv"], p1["wd"], p1["bd"])


def _init_attn_params(key, d_model):
    """Raw f32 parameters in math layout (weights are (D_in, D_out))."""
    ks = jax.random.split(key, 8)
    s = 0.02
    return {
        "wq": s * jax.random.normal(ks[0], (d_model, d_model), jnp.float32),
        "bq": s * jax.random.normal(ks[1], (1, d_model), jnp.float32),
        "wk": s * jax.random.normal(ks[2], (d_model, d_model), jnp.float32),
        "bk": s * jax.random.normal(ks[3], (1, d_model), jnp.float32),
        "wv": s * jax.random.normal(ks[4], (d_model, d_model), jnp.float32),
        "bv": s * jax.random.normal(ks[5], (1, d_model), jnp.float32),
        "wd": s * jax.random.normal(ks[6], (d_model, d_model), jnp.float32),
        "bd": s * jax.random.normal(ks[7], (1, d_model), jnp.float32),
    }


def _prepare_params(raw, num_heads, d_model):
    """Fold 1/sqrt(depth) into Wq/bq, zero-pad q/k/v output columns to a
    lane-aligned width, fuse QKV, store weights in bf16 (f32 biases)."""
    depth = d_model // num_heads
    assert depth * num_heads == d_model
    d_pad = _round_up(d_model, 128)
    pw = d_pad - d_model
    scale = 1.0 / math.sqrt(depth)

    def pad_cols(w):   # (D, D) -> (D, Dp): zero-pad output columns
        return jnp.pad(w, ((0, 0), (0, pw)))

    def pad_b(b):      # (1, D) -> (1, Dp)
        return jnp.pad(b, ((0, 0), (0, pw)))

    wqkv = jnp.concatenate([pad_cols(raw["wq"] * scale),
                            pad_cols(raw["wk"]),
                            pad_cols(raw["wv"])], axis=1)            # (D, 3*Dp)
    bqkv = jnp.concatenate([pad_b(raw["bq"] * scale),
                            pad_b(raw["bk"]),
                            pad_b(raw["bv"])], axis=1)               # (1, 3*Dp)
    wd = jnp.pad(raw["wd"], ((0, pw), (0, 0)))                       # (Dp, D)

    return {
        "wqkv": wqkv.astype(jnp.bfloat16),     # bf16 storage, fed to MXU directly
        "bqkv": bqkv.astype(jnp.float32),
        "wd": wd.astype(jnp.bfloat16),
        "bd": raw["bd"].astype(jnp.float32),   # (1, D)
        "depth": depth,
        "d_pad": d_pad,
    }


def _reference_attention(x, p, num_heads):
    """Pure-JAX f32 reference of transformers' CTRL MultiHeadAttention."""
    B, S, D = x.shape
    depth = D // num_heads
    q = x @ p["wq"] + p["bq"]
    k = x @ p["wk"] + p["bk"]
    v = x @ p["wv"] + p["bv"]

    def split(t):
        return t.reshape(B, S, num_heads, depth).transpose(0, 2, 1, 3)

    qh, kh, vh = split(q), split(k), split(v)
    scores = jnp.einsum("bhsd,bhtd->bhst", qh, kh) / math.sqrt(depth)
    attn = jax.nn.softmax(scores, axis=-1)
    ctx = jnp.einsum("bhst,bhtd->bhsd", attn, vh)
    ctx = ctx.transpose(0, 2, 1, 3).reshape(B, S, D)
    return ctx @ p["wd"] + p["bd"]


class PallasCTRLModel:
    """Mirrors the PyTorch Model: two independent CTRL attention blocks."""

    def __init__(self, key):
        k0, k1 = jax.random.split(key)
        self.num_heads0, self.d0 = 16, 192
        self.num_heads1, self.d1 = 11, 66
        self.raw0 = _init_attn_params(k0, self.d0)
        self.raw1 = _init_attn_params(k1, self.d1)
        self.params0 = _prepare_params(self.raw0, self.num_heads0, self.d0)
        self.params1 = _prepare_params(self.raw1, self.num_heads1, self.d1)

    def __call__(self, x, y):
        return ctrl_model_forward(x, y, self.params0, self.params1,
                                  self.num_heads0, self.num_heads1)


if __name__ == "__main__":
    key = jax.random.PRNGKey(0)
    kp, kx, ky = jax.random.split(key, 3)

    model = PallasCTRLModel(kp)

    B, S = 2, 8
    x = jax.random.normal(kx, (B, S, 192), jnp.float32)   # attn0 input (16 heads)
    y = jax.random.normal(ky, (B, S, 66), jnp.float32)    # attn1 input (11 heads)

    out0, out1 = model(x, y)
    jax.block_until_ready((out0, out1))

    # Sanity check vs. a pure-f32 JAX reference of the module.  The kernel uses
    # bf16 weights/activations on the MXU (f32 accumulation), so a few 1e-4 of
    # absolute error is expected at these output magnitudes (~0.03-0.1).
    ref0 = _reference_attention(x, model.raw0, model.num_heads0)
    ref1 = _reference_attention(y, model.raw1, model.num_heads1)
    np.testing.assert_allclose(np.asarray(out0), np.asarray(ref0), atol=3e-3, rtol=3e-3)
    np.testing.assert_allclose(np.asarray(out1), np.asarray(ref1), atol=3e-3, rtol=3e-3)

    print("KERNEL_OK")
</pallas_src>

<mosaic_0001>
module attributes {stable_mosaic.version = 11 : i64} {
  func.func @_fused_kernel(%arg0: memref<2x8x192xf32, #tpu.memory_space<vmem>>, %arg1: memref<192x768xbf16, #tpu.memory_space<vmem>>, %arg2: memref<1x768xf32, #tpu.memory_space<vmem>>, %arg3: memref<256x192xbf16, #tpu.memory_space<vmem>>, %arg4: memref<1x192xf32, #tpu.memory_space<vmem>>, %arg5: memref<2x8x66xf32, #tpu.memory_space<vmem>>, %arg6: memref<66x384xbf16, #tpu.memory_space<vmem>>, %arg7: memref<1x384xf32, #tpu.memory_space<vmem>>, %arg8: memref<128x66xbf16, #tpu.memory_space<vmem>>, %arg9: memref<1x66xf32, #tpu.memory_space<vmem>>, %arg10: memref<2x8x192xf32, #tpu.memory_space<vmem>>, %arg11: memref<2x8x66xf32, #tpu.memory_space<vmem>>) attributes {dimension_semantics = [], scalar_prefetch = 0 : i64, scratch_operands = 0 : i64, tpu.core_type = #tpu.core_type<tc>} {
    %c0 = arith.constant 0 : index
    %c0_0 = arith.constant 0 : index
    %c0_1 = arith.constant 0 : index
    %0 = vector.load %arg0[%c0, %c0_0, %c0_1] : memref<2x8x192xf32, #tpu.memory_space<vmem>>, vector<2x8x192xf32>
    %1 = vector.shape_cast %0 : vector<2x8x192xf32> to vector<16x192xf32>
    %2 = arith.truncf %1 : vector<16x192xf32> to vector<16x192xbf16>
    %c0_2 = arith.constant 0 : index
    %c0_3 = arith.constant 0 : index
    %3 = vector.load %arg1[%c0_2, %c0_3] : memref<192x768xbf16, #tpu.memory_space<vmem>>, vector<192x768xbf16>
    %cst = arith.constant dense<0.000000e+00> : vector<16x768xf32>
    %4 = tpu.matmul %2, %3, %cst {dimension_numbers = #tpu.dot_dimension_numbers<[1], [0], [0], [1], [0, 0, 1, 1], [], []>} : vector<16x192xbf16>, vector<192x768xbf16>, vector<16x768xf32> -> vector<16x768xf32>
    %c0_4 = arith.constant 0 : index
    %c0_5 = arith.constant 0 : index
    %5 = vector.load %arg2[%c0_4, %c0_5] : memref<1x768xf32, #tpu.memory_space<vmem>>, vector<1x768xf32>
    %6 = vector.broadcast %5 : vector<1x768xf32> to vector<16x768xf32>
    %7 = arith.addf %4, %6 : vector<16x768xf32>
    %8 = vector.shape_cast %7 : vector<16x768xf32> to vector<2x8x768xf32>
    %9 = vector.extract_strided_slice %8 {offsets = [0, 0, 0], sizes = [2, 8, 256], strides = [1, 1, 1]} : vector<2x8x768xf32> to vector<2x8x256xf32>
    %10 = vector.extract_strided_slice %8 {offsets = [0, 0, 256], sizes = [2, 8, 256], strides = [1, 1, 1]} : vector<2x8x768xf32> to vector<2x8x256xf32>
    %11 = vector.extract_strided_slice %8 {offsets = [0, 0, 512], sizes = [2, 8, 256], strides = [1, 1, 1]} : vector<2x8x768xf32> to vector<2x8x256xf32>
    %12 = tpu.iota {dimensions = array<i32: 0>} : vector<128x256xi32>
    %13 = tpu.iota {dimensions = array<i32: 1>} : vector<128x256xi32>
    %c3_i32 = arith.constant 3 : i32
    %14 = vector.broadcast %c3_i32 : i32 to vector<128x256xi32>
    %15 = arith.shrsi %12, %14 : vector<128x256xi32>
    %c12_i32 = arith.constant 12 : i32
    %16 = vector.broadcast %c12_i32 : i32 to vector<128x256xi32>
    %17 = arith.muli %15, %16 : vector<128x256xi32>
    %18 = arith.cmpi sge, %13, %17 : vector<128x256xi32>
    %c12_i32_6 = arith.constant 12 : i32
    %19 = vector.broadcast %c12_i32_6 : i32 to vector<128x256xi32>
    %20 = arith.addi %17, %19 : vector<128x256xi32>
    %21 = arith.cmpi slt, %13, %20 : vector<128x256xi32>
    %22 = arith.andi %18, %21 : vector<128x256xi1>
    %23 = arith.extui %22 : vector<128x256xi1> to vector<128x256xi32>
    %24 = arith.sitofp %23 : vector<128x256xi32> to vector<128x256xf32>
    %25 = vector.shape_cast %9 : vector<2x8x256xf32> to vector<2x1x8x256xf32>
    %26 = vector.shape_cast %25 : vector<2x1x8x256xf32> to vector<2x1x8x256xf32>
    %27 = vector.broadcast %26 : vector<2x1x8x256xf32> to vector<2x16x8x256xf32>
    %28 = vector.shape_cast %27 : vector<2x16x8x256xf32> to vector<2x128x256xf32>
    %29 = vector.shape_cast %24 : vector<128x256xf32> to vector<1x128x256xf32>
    %30 = vector.broadcast %29 : vector<1x128x256xf32> to vector<2x128x256xf32>
    %31 = arith.mulf %28, %30 : vector<2x128x256xf32>
    %cst_7 = arith.constant dense<0.000000e+00> : vector<2x128x8xf32>
    %32 = tpu.matmul %31, %10, %cst_7 {dimension_numbers = #tpu.dot_dimension_numbers<[2], [2], [1], [1], [0, 0, 0, 1, 1, 1], [0], [0]>} : vector<2x128x256xf32>, vector<2x8x256xf32>, vector<2x128x8xf32> -> vector<2x128x8xf32>
    %cst_8 = arith.constant dense<0xFF800000> : vector<2x128xf32>
    %33 = vector.multi_reduction <maximumf>, %32, %cst_8 [2] : vector<2x128x8xf32> to vector<2x128xf32>
    %34 = vector.shape_cast %33 : vector<2x128xf32> to vector<2x128x1xf32>
    %35 = vector.broadcast %34 : vector<2x128x1xf32> to vector<2x128x8xf32>
    %36 = arith.subf %32, %35 : vector<2x128x8xf32>
    %37 = math.exp %36 : vector<2x128x8xf32>
    %cst_9 = arith.constant dense<0.000000e+00> : vector<2x128xf32>
    %38 = vector.multi_reduction <add>, %37, %cst_9 [2] : vector<2x128x8xf32> to vector<2x128xf32>
    %39 = vector.shape_cast %38 : vector<2x128xf32> to vector<2x128x1xf32>
    %40 = tpu.reciprocal %39 {approx = true} : vector<2x128x1xf32> -> vector<2x128x1xf32>
    %41 = vector.broadcast %40 : vector<2x128x1xf32> to vector<2x128x8xf32>
    %42 = arith.mulf %37, %41 : vector<2x128x8xf32>
    %cst_10 = arith.constant dense<0.000000e+00> : vector<2x128x256xf32>
    %43 = tpu.matmul %42, %11, %cst_10 {dimension_numbers = #tpu.dot_dimension_numbers<[2], [1], [1], [2], [0, 0, 0, 1, 1, 2], [0], [0]>} : vector<2x128x8xf32>, vector<2x8x256xf32>, vector<2x128x256xf32> -> vector<2x128x256xf32>
    %44 = vector.shape_cast %24 : vector<128x256xf32> to vector<1x128x256xf32>
    %45 = vector.broadcast %44 : vector<1x128x256xf32> to vector<2x128x256xf32>
    %46 = arith.mulf %43, %45 : vector<2x128x256xf32>
    %47 = vector.shape_cast %46 : vector<2x128x256xf32> to vector<2x16x8x256xf32>
    %cst_11 = arith.constant dense<0.000000e+00> : vector<2x8x256xf32>
    %48 = vector.multi_reduction <add>, %47, %cst_11 [1] : vector<2x16x8x256xf32> to vector<2x8x256xf32>
    %49 = vector.shape_cast %48 : vector<2x8x256xf32> to vector<16x256xf32>
    %50 = arith.truncf %49 : vector<16x256xf32> to vector<16x256xbf16>
    %c0_12 = arith.constant 0 : index
    %c0_13 = arith.constant 0 : index
    %51 = vector.load %arg3[%c0_12, %c0_13] : memref<256x192xbf16, #tpu.memory_space<vmem>>, vector<256x192xbf16>
    %cst_14 = arith.constant dense<0.000000e+00> : vector<16x192xf32>
    %52 = tpu.matmul %50, %51, %cst_14 {dimension_numbers = #tpu.dot_dimension_numbers<[1], [0], [0], [1], [0, 0, 1, 1], [], []>} : vector<16x256xbf16>, vector<256x192xbf16>, vector<16x192xf32> -> vector<16x192xf32>
    %c0_15 = arith.constant 0 : index
    %c0_16 = arith.constant 0 : index
    %53 = vector.load %arg4[%c0_15, %c0_16] : memref<1x192xf32, #tpu.memory_space<vmem>>, vector<1x192xf32>
    %54 = vector.broadcast %53 : vector<1x192xf32> to vector<16x192xf32>
    %55 = arith.addf %52, %54 : vector<16x192xf32>
    %56 = vector.shape_cast %55 : vector<16x192xf32> to vector<2x8x192xf32>
    %c0_17 = arith.constant 0 : index
    %c0_18 = arith.constant 0 : index
    %c0_19 = arith.constant 0 : index
    %57 = vector.load %arg10[%c0_17, %c0_18, %c0_19] : memref<2x8x192xf32, #tpu.memory_space<vmem>>, vector<2x8x192xf32>
    tpu.vector_store %arg10[%c0_17, %c0_18, %c0_19], %56 {strides = array<i32>} : memref<2x8x192xf32, #tpu.memory_space<vmem>>, vector<2x8x192xf32>,
    %c0_20 = arith.constant 0 : index
    %c0_21 = arith.constant 0 : index
    %c0_22 = arith.constant 0 : index
    %58 = vector.load %arg5[%c0_20, %c0_21, %c0_22] : memref<2x8x66xf32, #tpu.memory_space<vmem>>, vector<2x8x66xf32>
    %59 = vector.shape_cast %58 : vector<2x8x66xf32> to vector<16x66xf32>
    %60 = arith.truncf %59 : vector<16x66xf32> to vector<16x66xbf16>
    %c0_23 = arith.constant 0 : index
    %c0_24 = arith.constant 0 : index
    %61 = vector.load %arg6[%c0_23, %c0_24] : memref<66x384xbf16, #tpu.memory_space<vmem>>, vector<66x384xbf16>
    %cst_25 = arith.constant dense<0.000000e+00> : vector<16x384xf32>
    %62 = tpu.matmul %60, %61, %cst_25 {dimension_numbers = #tpu.dot_dimension_numbers<[1], [0], [0], [1], [0, 0, 1, 1], [], []>} : vector<16x66xbf16>, vector<66x384xbf16>, vector<16x384xf32> -> vector<16x384xf32>
    %c0_26 = arith.constant 0 : index
    %c0_27 = arith.constant 0 : index
    %63 = vector.load %arg7[%c0_26, %c0_27] : memref<1x384xf32, #tpu.memory_space<vmem>>, vector<1x384xf32>
    %64 = vector.broadcast %63 : vector<1x384xf32> to vector<16x384xf32>
    %65 = arith.addf %62, %64 : vector<16x384xf32>
    %66 = vector.shape_cast %65 : vector<16x384xf32> to vector<2x8x384xf32>
    %67 = vector.extract_strided_slice %66 {offsets = [0, 0, 0], sizes = [2, 8, 128], strides = [1, 1, 1]} : vector<2x8x384xf32> to vector<2x8x128xf32>
    %68 = vector.extract_strided_slice %66 {offsets = [0, 0, 128], sizes = [2, 8, 128], strides = [1, 1, 1]} : vector<2x8x384xf32> to vector<2x8x128xf32>
    %69 = vector.extract_strided_slice %66 {offsets = [0, 0, 256], sizes = [2, 8, 128], strides = [1, 1, 1]} : vector<2x8x384xf32> to vector<2x8x128xf32>
    %70 = tpu.iota {dimensions = array<i32: 0>} : vector<88x128xi32>
    %71 = tpu.iota {dimensions = array<i32: 1>} : vector<88x128xi32>
    %c3_i32_28 = arith.constant 3 : i32
    %72 = vector.broadcast %c3_i32_28 : i32 to vector<88x128xi32>
    %73 = arith.shrsi %70, %72 : vector<88x128xi32>
    %c6_i32 = arith.constant 6 : i32
    %74 = vector.broadcast %c6_i32 : i32 to vector<88x128xi32>
    %75 = arith.muli %73, %74 : vector<88x128xi32>
    %76 = arith.cmpi sge, %71, %75 : vector<88x128xi32>
    %c6_i32_29 = arith.constant 6 : i32
    %77 = vector.broadcast %c6_i32_29 : i32 to vector<88x128xi32>
    %78 = arith.addi %75, %77 : vector<88x128xi32>
    %79 = arith.cmpi slt, %71, %78 : vector<88x128xi32>
    %80 = arith.andi %76, %79 : vector<88x128xi1>
    %81 = arith.extui %80 : vector<88x128xi1> to vector<88x128xi32>
    %82 = arith.sitofp %81 : vector<88x128xi32> to vector<88x128xf32>
    %83 = vector.shape_cast %67 : vector<2x8x128xf32> to vector<2x1x8x128xf32>
    %84 = vector.shape_cast %83 : vector<2x1x8x128xf32> to vector<2x1x8x128xf32>
    %85 = vector.broadcast %84 : vector<2x1x8x128xf32> to vector<2x11x8x128xf32>
    %86 = vector.shape_cast %85 : vector<2x11x8x128xf32> to vector<2x88x128xf32>
    %87 = vector.shape_cast %82 : vector<88x128xf32> to vector<1x88x128xf32>
    %88 = vector.broadcast %87 : vector<1x88x128xf32> to vector<2x88x128xf32>
    %89 = arith.mulf %86, %88 : vector<2x88x128xf32>
    %cst_30 = arith.constant dense<0.000000e+00> : vector<2x88x8xf32>
    %90 = tpu.matmul %89, %68, %cst_30 {dimension_numbers = #tpu.dot_dimension_numbers<[2], [2], [1], [1], [0, 0, 0, 1, 1, 1], [0], [0]>} : vector<2x88x128xf32>, vector<2x8x128xf32>, vector<2x88x8xf32> -> vector<2x88x8xf32>
    %cst_31 = arith.constant dense<0xFF800000> : vector<2x88xf32>
    %91 = vector.multi_reduction <maximumf>, %90, %cst_31 [2] : vector<2x88x8xf32> to vector<2x88xf32>
    %92 = vector.shape_cast %91 : vector<2x88xf32> to vector<2x88x1xf32>
    %93 = vector.broadcast %92 : vector<2x88x1xf32> to vector<2x88x8xf32>
    %94 = arith.subf %90, %93 : vector<2x88x8xf32>
    %95 = math.exp %94 : vector<2x88x8xf32>
    %cst_32 = arith.constant dense<0.000000e+00> : vector<2x88xf32>
    %96 = vector.multi_reduction <add>, %95, %cst_32 [2] : vector<2x88x8xf32> to vector<2x88xf32>
    %97 = vector.shape_cast %96 : vector<2x88xf32> to vector<2x88x1xf32>
    %98 = tpu.reciprocal %97 {approx = true} : vector<2x88x1xf32> -> vector<2x88x1xf32>
    %99 = vector.broadcast %98 : vector<2x88x1xf32> to vector<2x88x8xf32>
    %100 = arith.mulf %95, %99 : vector<2x88x8xf32>
    %cst_33 = arith.constant dense<0.000000e+00> : vector<2x88x128xf32>
    %101 = tpu.matmul %100, %69, %cst_33 {dimension_numbers = #tpu.dot_dimension_numbers<[2], [1], [1], [2], [0, 0, 0, 1, 1, 2], [0], [0]>} : vector<2x88x8xf32>, vector<2x8x128xf32>, vector<2x88x128xf32> -> vector<2x88x128xf32>
    %102 = vector.shape_cast %82 : vector<88x128xf32> to vector<1x88x128xf32>
    %103 = vector.broadcast %102 : vector<1x88x128xf32> to vector<2x88x128xf32>
    %104 = arith.mulf %101, %103 : vector<2x88x128xf32>
    %105 = vector.shape_cast %104 : vector<2x88x128xf32> to vector<2x11x8x128xf32>
    %cst_34 = arith.constant dense<0.000000e+00> : vector<2x8x128xf32>
    %106 = vector.multi_reduction <add>, %105, %cst_34 [1] : vector<2x11x8x128xf32> to vector<2x8x128xf32>
    %107 = vector.shape_cast %106 : vector<2x8x128xf32> to vector<16x128xf32>
    %108 = arith.truncf %107 : vector<16x128xf32> to vector<16x128xbf16>
    %c0_35 = arith.constant 0 : index
    %c0_36 = arith.constant 0 : index
    %109 = vector.load %arg8[%c0_35, %c0_36] : memref<128x66xbf16, #tpu.memory_space<vmem>>, vector<128x66xbf16>
    %cst_37 = arith.constant dense<0.000000e+00> : vector<16x66xf32>
    %110 = tpu.matmul %108, %109, %cst_37 {dimension_numbers = #tpu.dot_dimension_numbers<[1], [0], [0], [1], [0, 0, 1, 1], [], []>} : vector<16x128xbf16>, vector<128x66xbf16>, vector<16x66xf32> -> vector<16x66xf32>
    %c0_38 = arith.constant 0 : index
    %c0_39 = arith.constant 0 : index
    %111 = vector.load %arg9[%c0_38, %c0_39] : memref<1x66xf32, #tpu.memory_space<vmem>>, vector<1x66xf32>
    %112 = vector.broadcast %111 : vector<1x66xf32> to vector<16x66xf32>
    %113 = arith.addf %110, %112 : vector<16x66xf32>
    %114 = vector.shape_cast %113 : vector<16x66xf32> to vector<2x8x66xf32>
    %c0_40 = arith.constant 0 : index
    %c0_41 = arith.constant 0 : index
    %c0_42 = arith.constant 0 : index
    %115 = vector.load %arg11[%c0_40, %c0_41, %c0_42] : memref<2x8x66xf32, #tpu.memory_space<vmem>>, vector<2x8x66xf32>
    tpu.vector_store %arg11[%c0_40, %c0_41, %c0_42], %114 {strides = array<i32>} : memref<2x8x66xf32, #tpu.memory_space<vmem>>, vector<2x8x66xf32>,
    return
  }
}

</mosaic_0001>

<llo_original>
// kernel: tpu_custom_call.1
$region0: #{tpu_custom_call.1}
  #allocation0 [shape = 'u32[]', space=smem, size = 0x4, offset = 0x4, fixed_abs, tag = 'smem constant byte address 0x4 - core index']
  #allocation1 [shape = 'u32[144,128]{1,0:T(1,128)}', space=vmem, size = 0x12000, scoped, tag = 'internal scratch']
  %s0 = inlined_call_operand.vmem [shape: f32[2,8,192], index: 0, kind: input, shape index: {}]
  %s1 = inlined_call_operand.hbm [shape: bf16[192,768], index: 1, kind: input, shape index: {}]
  %s2 = inlined_call_operand.vmem [shape: f32[1,768], index: 2, kind: input, shape index: {}]
  %s3 = inlined_call_operand.vmem [shape: bf16[256,192], index: 3, kind: input, shape index: {}]
  %s4 = inlined_call_operand.vmem [shape: f32[1,192], index: 4, kind: input, shape index: {}]
  %s5 = inlined_call_operand.vmem [shape: f32[2,8,66], index: 5, kind: input, shape index: {}]
  %s6 = inlined_call_operand.vmem [shape: bf16[66,384], index: 6, kind: input, shape index: {}]
  %s7 = inlined_call_operand.vmem [shape: f32[1,384], index: 7, kind: input, shape index: {}]
  %s8 = inlined_call_operand.vmem [shape: bf16[128,66], index: 8, kind: input, shape index: {}]
  %s9 = inlined_call_operand.vmem [shape: f32[1,66], index: 9, kind: input, shape index: {}]
  %s10 = inlined_call_operand.hbm [shape: f32[2,8,192], index: 10, kind: output, shape index: {0}]
  %s11 = inlined_call_operand.hbm [shape: f32[2,8,66], index: 11, kind: output, shape index: {1}]
  %12 = xla_tuple %s10, %s11
  %s13 = sld [smem:[#allocation0]]
  $region62: #{tpu_custom_call.1} parent=0
    _
  %s15 = ssub.s32 1, %s13
  %s16 = scalar_select 0, %s15, %s13
  $region1: #{tpu_custom_call.1} parent=0
    #allocation2 [shape = 'u8[294912]{0}', space=vmem, size = 0x48000, scoped, tag = 'input window, operand 1, single buffered']
    #allocation3 [shape = 's32[1]{0}', space=sflag, size = 0x4, scoped, tag = 'scoped memory for tpu_custom_call.1']
    #allocation4 [shape = 's32[1]{0}', space=sflag, size = 0x4, scoped, tag = 'scoped memory for tpu_custom_call.1']
    #allocation5 [shape = 'u8[16384]{0}', space=vmem, size = 0x4000, scoped, tag = 'output window, operand 0, single buffered']
    #allocation6 [shape = 'u8[8192]{0}', space=vmem, size = 0x2000, scoped, tag = 'output window, operand 1, single buffered']
    #allocation7 [shape = 's32[1]{0}', space=sflag, size = 0x4, scoped, tag = 'scoped memory for tpu_custom_call.1']
    %17 = vsyncpa [#allocation3], 0
    %18 = vsyncpa [#allocation4], 0
    %19 = vsyncpa [#allocation7], 0
    // Predicated region
    $region2: #{tpu_custom_call.1} parent=1 // pred_check
      _
    $region3: #{tpu_custom_call.1} parent=1 // pred_check_branch
      %21 = sbr.rel (0) target = $region5
    $region4: #{tpu_custom_call.1} parent=1 // pred_region
      _
    $region5: #{tpu_custom_call.1} parent=1 // pred_fallthru
      _
    // Predicated region
    $region6: #{tpu_custom_call.1} parent=1 // pred_check
      _
    $region7: #{tpu_custom_call.1} parent=1 // pred_check_branch
      %23 = sbr.rel (0) target = $region9
    $region8: #{tpu_custom_call.1} parent=1 // pred_region
      %s25 = ssub.s32 9216, 9216
      %26 = vsyncadd [#allocation3], %s25
      %s27 = sshll.u32 [#allocation2], 4
      %s28 = int_to_ptr.vmem [resolvable:$true] %s27
      %33 = dma.hbm_to_vmem [thread:$0]  %s1, 9216, %s28, [#allocation3], 384, 384, 24
    $region9: #{tpu_custom_call.1} parent=1 // pred_fallthru
      _
    // Predicated region
    $region10: #{tpu_custom_call.1} parent=1 // pred_check
      _
    $region11: #{tpu_custom_call.1} parent=1 // pred_check_branch
      %35 = sbr.rel (0) target = $region13
    $region12: #{tpu_custom_call.1} parent=1 // pred_region
      _
    $region13: #{tpu_custom_call.1} parent=1 // pred_fallthru
      _
    // Predicated region
    $region14: #{tpu_custom_call.1} parent=1 // pred_check
      _
    $region15: #{tpu_custom_call.1} parent=1 // pred_check_branch
      %37 = sbr.rel (0) target = $region17
    $region16: #{tpu_custom_call.1} parent=1 // pred_region
      _
    $region17: #{tpu_custom_call.1} parent=1 // pred_fallthru
      _
    // Predicated region
    $region18: #{tpu_custom_call.1} parent=1 // pred_check
      _
    $region19: #{tpu_custom_call.1} parent=1 // pred_check_branch
      %39 = sbr.rel (0) target = $region21
    $region20: #{tpu_custom_call.1} parent=1 // pred_region
      _
    $region21: #{tpu_custom_call.1} parent=1 // pred_fallthru
      _
    // Predicated region
    $region22: #{tpu_custom_call.1} parent=1 // pred_check
      _
    $region23: #{tpu_custom_call.1} parent=1 // pred_check_branch
      %41 = sbr.rel (0) target = $region25
    $region24: #{tpu_custom_call.1} parent=1 // pred_region
      _
    $region25: #{tpu_custom_call.1} parent=1 // pred_fallthru
      _
    // Predicated region
    $region26: #{tpu_custom_call.1} parent=1 // pred_check
      _
    $region27: #{tpu_custom_call.1} parent=1 // pred_check_branch
      %43 = sbr.rel (0) target = $region29
    $region28: #{tpu_custom_call.1} parent=1 // pred_region
      _
    $region29: #{tpu_custom_call.1} parent=1 // pred_fallthru
      _
    // Predicated region
    $region30: #{tpu_custom_call.1} parent=1 // pred_check
      _
    $region31: #{tpu_custom_call.1} parent=1 // pred_check_branch
      %45 = sbr.rel (0) target = $region33
    $region32: #{tpu_custom_call.1} parent=1 // pred_region
      _
    $region33: #{tpu_custom_call.1} parent=1 // pred_fallthru
      _
    // Predicated region
    $region34: #{tpu_custom_call.1} parent=1 // pred_check
      _
    $region35: #{tpu_custom_call.1} parent=1 // pred_check_branch
      %47 = sbr.rel (0) target = $region37
    $region36: #{tpu_custom_call.1} parent=1 // pred_region
      _
    $region37: #{tpu_custom_call.1} parent=1 // pred_fallthru
      _
    // Predicated region
    $region38: #{tpu_custom_call.1} parent=1 // pred_check
      _
    $region39: #{tpu_custom_call.1} parent=1 // pred_check_branch
      %49 = sbr.rel (0) target = $region41
    $region40: #{tpu_custom_call.1} parent=1 // pred_region
      _
    $region41: #{tpu_custom_call.1} parent=1 // pred_fallthru
      _
    // Predicated region
    $region42: #{tpu_custom_call.1} parent=1 // pred_check
      _
    $region43: #{tpu_custom_call.1} parent=1 // pred_check_branch
      %51 = sbr.rel (0) target = $region45
    $region44: #{tpu_custom_call.1} parent=1 // pred_region
      %52 = dma.done [#allocation3], 9216
    $region45: #{tpu_custom_call.1} parent=1 // pred_fallthru
      _
    %v54 = vld [vmem:[%s0] sm:$0xff]
    %v55 = vld [vmem:[%s0 + $0x8] sm:$0xff]
    %v56 = vld [vmem:[%s0 + $0x10] sm:$0xff]
    %v57 = vld [vmem:[%s0 + $0x18] sm:$0xff]
    %v58 = vpack.c.bf16 %v56, %v54
    %v59 = vpack.c.bf16 %v57, %v55
    %v60 = vld [vmem:[#allocation2] sm:$0xff]
    %v61 = vld [vmem:[#allocation2 + $0x8] sm:$0xff]
    %v62 = vld [vmem:[#allocation2 + $0x10] sm:$0xff]
    %v63 = vld [vmem:[#allocation2 + $0x18] sm:$0xff]
    %v64 = vld [vmem:[#allocation2 + $0x20] sm:$0xff]
    %v65 = vld [vmem:[#allocation2 + $0x28] sm:$0xff]
    %v66 = vld [vmem:[#allocation2 + $0x30] sm:$0xff]
    %v67 = vld [vmem:[#allocation2 + $0x38] sm:$0xff]
    %v68 = vld [vmem:[#allocation2 + $0x40] sm:$0xff]
    %v69 = vld [vmem:[#allocation2 + $0x48] sm:$0xff]
    %v70 = vld [vmem:[#allocation2 + $0x50] sm:$0xff]
    %v71 = vld [vmem:[#allocation2 + $0x58] sm:$0xff]
    %v72 = vld [vmem:[#allocation2 + $0x60] sm:$0xff]
    %v73 = vld [vmem:[#allocation2 + $0x68] sm:$0xff]
    %v74 = vld [vmem:[#allocation2 + $0x70] sm:$0xff]
    %v75 = vld [vmem:[#allocation2 + $0x78] sm:$0xff]
    %v76 = vld [vmem:[#allocation2 + $0x80] sm:$0xff]
    %v77 = vld [vmem:[#allocation2 + $0x88] sm:$0xff]
    %v78 = vld [vmem:[#allocation2 + $0x90] sm:$0xff]
    %v79 = vld [vmem:[#allocation2 + $0x98] sm:$0xff]
    %v80 = vld [vmem:[#allocation2 + $0xa0] sm:$0xff]
    %v81 = vld [vmem:[#allocation2 + $0xa8] sm:$0xff]
    %v82 = vld [vmem:[#allocation2 + $0xb0] sm:$0xff]
    %v83 = vld [vmem:[#allocation2 + $0xb8] sm:$0xff]
    %v84 = vld [vmem:[#allocation2 + $0xc0] sm:$0xff]
    %v85 = vld [vmem:[#allocation2 + $0xc8] sm:$0xff]
    %v86 = vld [vmem:[#allocation2 + $0xd0] sm:$0xff]
    %v87 = vld [vmem:[#allocation2 + $0xd8] sm:$0xff]
    %v88 = vld [vmem:[#allocation2 + $0xe0] sm:$0xff]
    %v89 = vld [vmem:[#allocation2 + $0xe8] sm:$0xff]
    %v90 = vld [vmem:[#allocation2 + $0xf0] sm:$0xff]
    %v91 = vld [vmem:[#allocation2 + $0xf8] sm:$0xff]
    %v92 = vld [vmem:[#allocation2 + $0x100] sm:$0xff]
    %v93 = vld [vmem:[#allocation2 + $0x108] sm:$0xff]
    %v94 = vld [vmem:[#allocation2 + $0x110] sm:$0xff]
    %v95 = vld [vmem:[#allocation2 + $0x118] sm:$0xff]
    %v96 = vld [vmem:[#allocation2 + $0x120] sm:$0xff]
    %v97 = vld [vmem:[#allocation2 + $0x128] sm:$0xff]
    %v98 = vld [vmem:[#allocation2 + $0x130] sm:$0xff]
    %v99 = vld [vmem:[#allocation2 + $0x138] sm:$0xff]
    %v100 = vld [vmem:[#allocation2 + $0x140] sm:$0xff]
    %v101 = vld [vmem:[#allocation2 + $0x148] sm:$0xff]
    %v102 = vld [vmem:[#allocation2 + $0x150] sm:$0xff]
    %v103 = vld [vmem:[#allocation2 + $0x158] sm:$0xff]
    %v104 = vld [vmem:[#allocation2 + $0x160] sm:$0xff]
    %v105 = vld [vmem:[#allocation2 + $0x168] sm:$0xff]
    %v106 = vld [vmem:[#allocation2 + $0x170] sm:$0xff]
    %v107 = vld [vmem:[#allocation2 + $0x178] sm:$0xff]
    %v108 = vld [vmem:[#allocation2 + $0x180] sm:$0xff]
    %v109 = vld [vmem:[#allocation2 + $0x188] sm:$0xff]
    %v110 = vld [vmem:[#allocation2 + $0x190] sm:$0xff]
    %v111 = vld [vmem:[#allocation2 + $0x198] sm:$0xff]
    %v112 = vld [vmem:[#allocation2 + $0x1a0] sm:$0xff]
    %v113 = vld [vmem:[#allocation2 + $0x1a8] sm:$0xff]
    %v114 = vld [vmem:[#allocation2 + $0x1b0] sm:$0xff]
    %v115 = vld [vmem:[#allocation2 + $0x1b8] sm:$0xff]
    %v116 = vld [vmem:[#allocation2 + $0x1c0] sm:$0xff]
    %v117 = vld [vmem:[#allocation2 + $0x1c8] sm:$0xff]
    %v118 = vld [vmem:[#allocation2 + $0x1d0] sm:$0xff]
    %v119 = vld [vmem:[#allocation2 + $0x1d8] sm:$0xff]
    %v120 = vld [vmem:[#allocation2 + $0x1e0] sm:$0xff]
    %v121 = vld [vmem:[#allocation2 + $0x1e8] sm:$0xff]
    %v122 = vld [vmem:[#allocation2 + $0x1f0] sm:$0xff]
    %v123 = vld [vmem:[#allocation2 + $0x1f8] sm:$0xff]
    %v124 = vld [vmem:[#allocation2 + $0x200] sm:$0xff]
    %v125 = vld [vmem:[#allocation2 + $0x208] sm:$0xff]
    %v126 = vld [vmem:[#allocation2 + $0x210] sm:$0xff]
    %v127 = vld [vmem:[#allocation2 + $0x218] sm:$0xff]
    %v128 = vld [vmem:[#allocation2 + $0x220] sm:$0xff]
    %v129 = vld [vmem:[#allocation2 + $0x228] sm:$0xff]
    %v130 = vld [vmem:[#allocation2 + $0x230] sm:$0xff]
    %v131 = vld [vmem:[#allocation2 + $0x238] sm:$0xff]
    %v132 = vld [vmem:[%s2] sm:$0x3f]
    %v134 = vlaneseq
    %v135 = vshrl.u32 %v134, 7
    %v136 = vsub.s32 0, %v135
    %v137 = vrot.slane %v132, %v136
    %v138 = vlaneseq
    %v139 = vshrl.u32 %v138, 7
    %v140 = vsub.s32 1, %v139
    %v141 = vrot.slane %v132, %v140
    %v142 = vlaneseq
    %v143 = vshrl.u32 %v142, 7
    %v144 = vsub.s32 2, %v143
    %v145 = vrot.slane %v132, %v144
    %v146 = vlaneseq
    %v147 = vshrl.u32 %v146, 7
    %v148 = vsub.s32 3, %v147
    %v149 = vrot.slane %v132, %v148
    %v150 = vlaneseq
    %v151 = vshrl.u32 %v150, 7
    %v152 = vsub.s32 4, %v151
    %v153 = vrot.slane %v132, %v152
    %v154 = vlaneseq
    %v155 = vshrl.u32 %v154, 7
    %v156 = vsub.s32 5, %v155
    %v157 = vrot.slane %v132, %v156
    %v236 = vunpack.c.l.b16 %v60
    %v237 = vunpack.c.h.b16 %v60
    %v238 = vunpack.c.l.b16 %v61
    %v239 = vunpack.c.h.b16 %v61
    %v240 = vunpack.c.l.b16 %v62
    %v241 = vunpack.c.h.b16 %v62
    %v242 = vunpack.c.l.b16 %v63
    %v243 = vunpack.c.h.b16 %v63
    %v244 = vunpack.c.l.b16 %v64
    %v245 = vunpack.c.h.b16 %v64
    %v246 = vunpack.c.l.b16 %v65
    %v247 = vunpack.c.h.b16 %v65
    %v248 = vunpack.c.l.b16 %v66
    %v249 = vunpack.c.h.b16 %v66
    %v250 = vunpack.c.l.b16 %v67
    %v251 = vunpack.c.h.b16 %v67
    %v252 = vunpack.c.l.b16 %v68
    %v253 = vunpack.c.h.b16 %v68
    %v254 = vunpack.c.l.b16 %v69
    %v255 = vunpack.c.h.b16 %v69
    %v256 = vunpack.c.l.b16 %v70
    %v257 = vunpack.c.h.b16 %v70
    %v258 = vunpack.c.l.b16 %v71
    %v259 = vunpack.c.h.b16 %v71
    %v260 = vunpack.c.l.b16 %v72
    %v261 = vunpack.c.h.b16 %v72
    %v262 = vunpack.c.l.b16 %v73
    %v263 = vunpack.c.h.b16 %v73
    %v264 = vunpack.c.l.b16 %v74
    %v265 = vunpack.c.h.b16 %v74
    %v266 = vunpack.c.l.b16 %v75
    %v267 = vunpack.c.h.b16 %v75
    %v268 = vunpack.c.l.b16 %v76
    %v269 = vunpack.c.h.b16 %v76
    %v270 = vunpack.c.l.b16 %v77
    %v271 = vunpack.c.h.b16 %v77
    %v272 = vunpack.c.l.b16 %v78
    %v273 = vunpack.c.h.b16 %v78
    %v274 = vunpack.c.l.b16 %v79
    %v275 = vunpack.c.h.b16 %v79
    %v276 = vunpack.c.l.b16 %v80
    %v277 = vunpack.c.h.b16 %v80
    %v278 = vunpack.c.l.b16 %v81
    %v279 = vunpack.c.h.b16 %v81
    %v280 = vunpack.c.l.b16 %v82
    %v281 = vunpack.c.h.b16 %v82
    %v282 = vunpack.c.l.b16 %v83
    %v283 = vunpack.c.h.b16 %v83
    %v284 = vunpack.c.l.b16 %v84
    %v285 = vunpack.c.h.b16 %v84
    %v286 = vunpack.c.l.b16 %v85
    %v287 = vunpack.c.h.b16 %v85
    %v288 = vunpack.c.l.b16 %v86
    %v289 = vunpack.c.h.b16 %v86
    %v290 = vunpack.c.l.b16 %v87
    %v291 = vunpack.c.h.b16 %v87
    %v292 = vunpack.c.l.b16 %v88
    %v293 = vunpack.c.h.b16 %v88
    %v294 = vunpack.c.l.b16 %v89
    %v295 = vunpack.c.h.b16 %v89
    %v296 = vunpack.c.l.b16 %v90
    %v297 = vunpack.c.h.b16 %v90
    %v298 = vunpack.c.l.b16 %v91
    %v299 = vunpack.c.h.b16 %v91
    %v300 = vunpack.c.l.b16 %v92
    %v301 = vunpack.c.h.b16 %v92
    %v302 = vunpack.c.l.b16 %v93
    %v303 = vunpack.c.h.b16 %v93
    %v304 = vunpack.c.l.b16 %v94
    %v305 = vunpack.c.h.b16 %v94
    %v306 = vunpack.c.l.b16 %v95
    %v307 = vunpack.c.h.b16 %v95
    %v308 = vunpack.c.l.b16 %v96
    %v309 = vunpack.c.h.b16 %v96
    %v310 = vunpack.c.l.b16 %v97
    %v311 = vunpack.c.h.b16 %v97
    %v312 = vunpack.c.l.b16 %v98
    %v313 = vunpack.c.h.b16 %v98
    %v314 = vunpack.c.l.b16 %v99
    %v315 = vunpack.c.h.b16 %v99
    %v316 = vunpack.c.l.b16 %v100
    %v317 = vunpack.c.h.b16 %v100
    %v318 = vunpack.c.l.b16 %v101
    %v319 = vunpack.c.h.b16 %v101
    %v320 = vunpack.c.l.b16 %v102
    %v321 = vunpack.c.h.b16 %v102
    %v322 = vunpack.c.l.b16 %v103
    %v323 = vunpack.c.h.b16 %v103
    %v324 = vunpack.c.l.b16 %v104
    %v325 = vunpack.c.h.b16 %v104
    %v326 = vunpack.c.l.b16 %v105
    %v327 = vunpack.c.h.b16 %v105
    %v328 = vunpack.c.l.b16 %v106
    %v329 = vunpack.c.h.b16 %v106
    %v330 = vunpack.c.l.b16 %v107
    %v331 = vunpack.c.h.b16 %v107
    %v332 = vunpack.c.l.b16 %v108
    %v333 = vunpack.c.h.b16 %v108
    %v334 = vunpack.c.l.b16 %v109
    %v335 = vunpack.c.h.b16 %v109
    %v336 = vunpack.c.l.b16 %v110
    %v337 = vunpack.c.h.b16 %v110
    %v338 = vunpack.c.l.b16 %v111
    %v339 = vunpack.c.h.b16 %v111
    %v340 = vunpack.c.l.b16 %v112
    %v341 = vunpack.c.h.b16 %v112
    %v342 = vunpack.c.l.b16 %v113
    %v343 = vunpack.c.h.b16 %v113
    %v344 = vunpack.c.l.b16 %v114
    %v345 = vunpack.c.h.b16 %v114
    %v346 = vunpack.c.l.b16 %v115
    %v347 = vunpack.c.h.b16 %v115
    %v348 = vunpack.c.l.b16 %v116
    %v349 = vunpack.c.h.b16 %v116
    %v350 = vunpack.c.l.b16 %v117
    %v351 = vunpack.c.h.b16 %v117
    %v352 = vunpack.c.l.b16 %v118
    %v353 = vunpack.c.h.b16 %v118
    %v354 = vunpack.c.l.b16 %v119
    %v355 = vunpack.c.h.b16 %v119
    %v356 = vunpack.c.l.b16 %v120
    %v357 = vunpack.c.h.b16 %v120
    %v358 = vunpack.c.l.b16 %v121
    %v359 = vunpack.c.h.b16 %v121
    %v360 = vunpack.c.l.b16 %v122
    %v361 = vunpack.c.h.b16 %v122
    %v362 = vunpack.c.l.b16 %v123
    %v363 = vunpack.c.h.b16 %v123
    %v364 = vunpack.c.l.b16 %v124
    %v365 = vunpack.c.h.b16 %v124
    %v366 = vunpack.c.l.b16 %v125
    %v367 = vunpack.c.h.b16 %v125
    %v368 = vunpack.c.l.b16 %v126
    %v369 = vunpack.c.h.b16 %v126
    %v370 = vunpack.c.l.b16 %v127
    %v371 = vunpack.c.h.b16 %v127
    %v372 = vunpack.c.l.b16 %v128
    %v373 = vunpack.c.h.b16 %v128
    %v374 = vunpack.c.l.b16 %v129
    %v375 = vunpack.c.h.b16 %v129
    %v376 = vunpack.c.l.b16 %v130
    %v377 = vunpack.c.h.b16 %v130
    %v378 = vunpack.c.l.b16 %v131
    %v379 = vunpack.c.h.b16 %v131
    %v380 = vpack.c.b16 %v242, %v236
    %v381 = vpack.c.b16 %v243, %v237
    %v382 = vpack.c.b16 %v244, %v238
    %v383 = vpack.c.b16 %v245, %v239
    %v384 = vpack.c.b16 %v246, %v240
    %v385 = vpack.c.b16 %v247, %v241
    %v386 = vpack.c.b16 %v254, %v248
    %v387 = vpack.c.b16 %v255, %v249
    %v388 = vpack.c.b16 %v256, %v250
    %v389 = vpack.c.b16 %v257, %v251
    %v390 = vpack.c.b16 %v258, %v252
    %v391 = vpack.c.b16 %v259, %v253
    %v392 = vpack.c.b16 %v266, %v260
    %v393 = vpack.c.b16 %v267, %v261
    %v394 = vpack.c.b16 %v268, %v262
    %v395 = vpack.c.b16 %v269, %v263
    %v396 = vpack.c.b16 %v270, %v264
    %v397 = vpack.c.b16 %v271, %v265
    %v398 = vpack.c.b16 %v278, %v272
    %v399 = vpack.c.b16 %v279, %v273
    %v400 = vpack.c.b16 %v280, %v274
    %v401 = vpack.c.b16 %v281, %v275
    %v402 = vpack.c.b16 %v282, %v276
    %v403 = vpack.c.b16 %v283, %v277
    %v404 = vpack.c.b16 %v290, %v284
    %v405 = vpack.c.b16 %v291, %v285
    %v406 = vpack.c.b16 %v292, %v286
    %v407 = vpack.c.b16 %v293, %v287
    %v408 = vpack.c.b16 %v294, %v288
    %v409 = vpack.c.b16 %v295, %v289
    %v410 = vpack.c.b16 %v302, %v296
    %v411 = vpack.c.b16 %v303, %v297
    %v412 = vpack.c.b16 %v304, %v298
    %v413 = vpack.c.b16 %v305, %v299
    %v414 = vpack.c.b16 %v306, %v300
    %v415 = vpack.c.b16 %v307, %v301
    %v416 = vpack.c.b16 %v314, %v308
    %v417 = vpack.c.b16 %v315, %v309
    %v418 = vpack.c.b16 %v316, %v310
    %v419 = vpack.c.b16 %v317, %v311
    %v420 = vpack.c.b16 %v318, %v312
    %v421 = vpack.c.b16 %v319, %v313
    %v422 = vpack.c.b16 %v326, %v320
    %v423 = vpack.c.b16 %v327, %v321
    %v424 = vpack.c.b16 %v328, %v322
    %v425 = vpack.c.b16 %v329, %v323
    %v426 = vpack.c.b16 %v330, %v324
    %v427 = vpack.c.b16 %v331, %v325
    %v428 = vpack.c.b16 %v338, %v332
    %v429 = vpack.c.b16 %v339, %v333
    %v430 = vpack.c.b16 %v340, %v334
    %v431 = vpack.c.b16 %v341, %v335
    %v432 = vpack.c.b16 %v342, %v336
    %v433 = vpack.c.b16 %v343, %v337
    %v434 = vpack.c.b16 %v350, %v344
    %v435 = vpack.c.b16 %v351, %v345
    %v436 = vpack.c.b16 %v352, %v346
    %v437 = vpack.c.b16 %v353, %v347
    %v438 = vpack.c.b16 %v354, %v348
    %v439 = vpack.c.b16 %v355, %v349
    %v440 = vpack.c.b16 %v362, %v356
    %v441 = vpack.c.b16 %v363, %v357
    %v442 = vpack.c.b16 %v364, %v358
    %v443 = vpack.c.b16 %v365, %v359
    %v444 = vpack.c.b16 %v366, %v360
    %v445 = vpack.c.b16 %v367, %v361
    %v446 = vpack.c.b16 %v374, %v368
    %v447 = vpack.c.b16 %v375, %v369
    %v448 = vpack.c.b16 %v376, %v370
    %v449 = vpack.c.b16 %v377, %v371
    %v450 = vpack.c.b16 %v378, %v372
    %v451 = vpack.c.b16 %v379, %v373
    %vm524 = vcmask 523264
    %v526 = vsel %vm524, %v59, 0
    %528 = vmatprep.subr.bf16.mxu0 %v423
    %529 = vmatpush1.bf16.msra.mxu0 %v422
    %530 = vmatprep.subr.bf16.mxu0 %v417
    %531 = vmatpush1.bf16.msra.mxu0 %v416
    %532 = vmatprep.subr.bf16.mxu0 %v411
    %533 = vmatpush1.bf16.msra.mxu0 %v410
    %534 = vmatprep.subr.bf16.mxu0 %v405
    %535 = vmatpush1.bf16.msra.mxu0 %v404
    %536 = vmatprep.subr.bf16.mxu0 %v399
    %537 = vmatpush1.bf16.msra.mxu0 %v398
    %538 = vmatprep.subr.bf16.mxu0 %v393
    %539 = vmatpush1.bf16.msra.mxu0 %v392
    %540 = vmatprep.subr.bf16.mxu0 %v387
    %541 = vmatpush1.bf16.msra.mxu0 %v386
    %542 = vmatprep.subr.bf16.mxu0 %v381
    %543 = vmatpush1.bf16.msra.mxu0 %v380
    %544 = vmatprep.subr.bf16.mxu0 0
    %545 = vmatpush2.bf16.msra.mxu0 0
    %546 = vmatprep.subr.bf16.mxu0 0
    %547 = vmatpush2.bf16.msra.mxu0 0
    %548 = vmatprep.subr.bf16.mxu0 0
    %549 = vmatpush2.bf16.msra.mxu0 0
    %550 = vmatprep.subr.bf16.mxu0 0
    %551 = vmatpush2.bf16.msra.mxu0 0
    %552 = vmatprep.subr.bf16.mxu0 %v447
    %553 = vmatpush2.bf16.msra.mxu0 %v446
    %554 = vmatprep.subr.bf16.mxu0 %v441
    %555 = vmatpush2.bf16.msra.mxu0 %v440
    %556 = vmatprep.subr.bf16.mxu0 %v435
    %557 = vmatpush2.bf16.msra.mxu0 %v434
    %558 = vmatprep.subr.bf16.mxu0 %v429
    %559 = vmatpush2.bf16.msra.mxu0 %v428
    %560 = vmatprep.mubr.bf16.mxu0 %v526
    %561 = vmatmul.mubr.bf16.gmra.mxu0 %v58
    %v562 = vpop.f32.mrf.mxu0
    %v563 = vadd.f32 %v137, %v562
    %v564 = vpop.f32.mrf.mxu0
    %v565 = vadd.f32 %v141, %v564
    %v566 = vpop.f32.mrf.mxu0
    %v567 = vadd.f32 %v137, %v566
    %v568 = vpop.f32.mrf.mxu0
    %v569 = vadd.f32 %v141, %v568
    %570 = vdwg.mxu0
    %571 = vmatprep.subr.bf16.mxu0 %v425
    %572 = vmatpush1.bf16.msra.mxu0 %v424
    %573 = vmatprep.subr.bf16.mxu0 %v419
    %574 = vmatpush1.bf16.msra.mxu0 %v418
    %575 = vmatprep.subr.bf16.mxu0 %v413
    %576 = vmatpush1.bf16.msra.mxu0 %v412
    %577 = vmatprep.subr.bf16.mxu0 %v407
    %578 = vmatpush1.bf16.msra.mxu0 %v406
    %579 = vmatprep.subr.bf16.mxu0 %v401
    %580 = vmatpush1.bf16.msra.mxu0 %v400
    %581 = vmatprep.subr.bf16.mxu0 %v395
    %582 = vmatpush1.bf16.msra.mxu0 %v394
    %583 = vmatprep.subr.bf16.mxu0 %v389
    %584 = vmatpush1.bf16.msra.mxu0 %v388
    %585 = vmatprep.subr.bf16.mxu0 %v383
    %586 = vmatpush1.bf16.msra.mxu0 %v382
    %587 = vmatprep.subr.bf16.mxu0 0
    %588 = vmatpush2.bf16.msra.mxu0 0
    %589 = vmatprep.subr.bf16.mxu0 0
    %590 = vmatpush2.bf16.msra.mxu0 0
    %591 = vmatprep.subr.bf16.mxu0 0
    %592 = vmatpush2.bf16.msra.mxu0 0
    %593 = vmatprep.subr.bf16.mxu0 0
    %594 = vmatpush2.bf16.msra.mxu0 0
    %595 = vmatprep.subr.bf16.mxu0 %v449
    %596 = vmatpush2.bf16.msra.mxu0 %v448
    %597 = vmatprep.subr.bf16.mxu0 %v443
    %598 = vmatpush2.bf16.msra.mxu0 %v442
    %599 = vmatprep.subr.bf16.mxu0 %v437
    %600 = vmatpush2.bf16.msra.mxu0 %v436
    %601 = vmatprep.subr.bf16.mxu0 %v431
    %602 = vmatpush2.bf16.msra.mxu0 %v430
    %603 = vmatprep.mubr.bf16.mxu0 %v526
    %604 = vmatmul.mubr.bf16.gmra.mxu0 %v58
    %v605 = vpop.f32.mrf.mxu0
    %v606 = vadd.f32 %v145, %v605
    %v607 = vpop.f32.mrf.mxu0
    %v608 = vadd.f32 %v149, %v607
    %v609 = vpop.f32.mrf.mxu0
    %v610 = vadd.f32 %v145, %v609
    %v611 = vpop.f32.mrf.mxu0
    %v612 = vadd.f32 %v149, %v611
    %613 = vdwg.mxu0
    %614 = vmatprep.subr.bf16.mxu0 %v427
    %615 = vmatpush1.bf16.msra.mxu0 %v426
    %616 = vmatprep.subr.bf16.mxu0 %v421
    %617 = vmatpush1.bf16.msra.mxu0 %v420
    %618 = vmatprep.subr.bf16.mxu0 %v415
    %619 = vmatpush1.bf16.msra.mxu0 %v414
    %620 = vmatprep.subr.bf16.mxu0 %v409
    %621 = vmatpush1.bf16.msra.mxu0 %v408
    %622 = vmatprep.subr.bf16.mxu0 %v403
    %623 = vmatpush1.bf16.msra.mxu0 %v402
    %624 = vmatprep.subr.bf16.mxu0 %v397
    %625 = vmatpush1.bf16.msra.mxu0 %v396
    %626 = vmatprep.subr.bf16.mxu0 %v391
    %627 = vmatpush1.bf16.msra.mxu0 %v390
    %628 = vmatprep.subr.bf16.mxu0 %v385
    %629 = vmatpush1.bf16.msra.mxu0 %v384
    %630 = vmatprep.subr.bf16.mxu0 0
    %631 = vmatpush2.bf16.msra.mxu0 0
    %632 = vmatprep.subr.bf16.mxu0 0
    %633 = vmatpush2.bf16.msra.mxu0 0
    %634 = vmatprep.subr.bf16.mxu0 0
    %635 = vmatpush2.bf16.msra.mxu0 0
    %636 = vmatprep.subr.bf16.mxu0 0
    %637 = vmatpush2.bf16.msra.mxu0 0
    %638 = vmatprep.subr.bf16.mxu0 %v451
    %639 = vmatpush2.bf16.msra.mxu0 %v450
    %640 = vmatprep.subr.bf16.mxu0 %v445
    %641 = vmatpush2.bf16.msra.mxu0 %v444
    %642 = vmatprep.subr.bf16.mxu0 %v439
    %643 = vmatpush2.bf16.msra.mxu0 %v438
    %644 = vmatprep.subr.bf16.mxu0 %v433
    %645 = vmatpush2.bf16.msra.mxu0 %v432
    %646 = vmatprep.mubr.bf16.mxu0 %v526
    %647 = vmatmul.mubr.bf16.gmra.mxu0 %v58
    %v648 = vpop.f32.mrf.mxu0
    %v649 = vadd.f32 %v153, %v648
    %v650 = vpop.f32.mrf.mxu0
    %v651 = vadd.f32 %v157, %v650
    %v652 = vpop.f32.mrf.mxu0
    %v653 = vadd.f32 %v153, %v652
    %v654 = vpop.f32.mrf.mxu0
    %v655 = vadd.f32 %v157, %v654
    %656 = vdwg.mxu0
    %v657 = vlaneseq
    %v658 = vshrl.u32 %v657, 7
    %v659 = vadd.s32 %v658, 8
    %v660 = vadd.s32 %v658, 16
    %v661 = vadd.s32 %v658, 24
    %v662 = vadd.s32 %v658, 32
    %v663 = vadd.s32 %v658, 40
    %v664 = vadd.s32 %v658, 48
    %v665 = vadd.s32 %v658, 56
    %v666 = vadd.s32 %v658, 64
    %v667 = vadd.s32 %v658, 72
    %v668 = vadd.s32 %v658, 80
    %v669 = vadd.s32 %v658, 88
    %v670 = vadd.s32 %v658, 96
    %v671 = vadd.s32 %v658, 104
    %v672 = vadd.s32 %v658, 112
    %v673 = vadd.s32 %v658, 120
    %v674 = vlaneseq
    %v675 = vand.u32 %v674, 127
    %v676 = vadd.s32 %v675, 128
    %v677 = vshra.s32 %v658, 3
    %v678 = vshra.s32 %v659, 3
    %v679 = vshra.s32 %v660, 3
    %v680 = vshra.s32 %v661, 3
    %v681 = vshra.s32 %v662, 3
    %v682 = vshra.s32 %v663, 3
    %v683 = vshra.s32 %v664, 3
    %v684 = vshra.s32 %v665, 3
    %v685 = vshra.s32 %v666, 3
    %v686 = vshra.s32 %v667, 3
    %v687 = vshra.s32 %v668, 3
    %v688 = vshra.s32 %v669, 3
    %v689 = vshra.s32 %v670, 3
    %v690 = vshra.s32 %v671, 3
    %v691 = vshra.s32 %v672, 3
    %v692 = vshra.s32 %v673, 3
    %v693 = vmul.u32 %v677, 12
    %v694 = vmul.u32 %v678, 12
    %v695 = vmul.u32 %v679, 12
    %v696 = vmul.u32 %v680, 12
    %v697 = vmul.u32 %v681, 12
    %v698 = vmul.u32 %v682, 12
    %v699 = vmul.u32 %v683, 12
    %v700 = vmul.u32 %v684, 12
    %v701 = vmul.u32 %v685, 12
    %v702 = vmul.u32 %v686, 12
    %v703 = vmul.u32 %v687, 12
    %v704 = vmul.u32 %v688, 12
    %v705 = vmul.u32 %v689, 12
    %v706 = vmul.u32 %v690, 12
    %v707 = vmul.u32 %v691, 12
    %v708 = vmul.u32 %v692, 12
    %vm709 = vcmp.ge.s32.totalorder %v675, %v693
    %vm710 = vcmp.ge.s32.totalorder %v676, %v693
    %vm711 = vcmp.ge.s32.totalorder %v675, %v694
    %vm712 = vcmp.ge.s32.totalorder %v676, %v694
    %vm713 = vcmp.ge.s32.totalorder %v675, %v695
    %vm714 = vcmp.ge.s32.totalorder %v676, %v695
    %vm715 = vcmp.ge.s32.totalorder %v675, %v696
    %vm716 = vcmp.ge.s32.totalorder %v676, %v696
    %vm717 = vcmp.ge.s32.totalorder %v675, %v697
    %vm718 = vcmp.ge.s32.totalorder %v676, %v697
    %vm719 = vcmp.ge.s32.totalorder %v675, %v698
    %vm720 = vcmp.ge.s32.totalorder %v676, %v698
    %vm721 = vcmp.ge.s32.totalorder %v675, %v699
    %vm722 = vcmp.ge.s32.totalorder %v676, %v699
    %vm723 = vcmp.ge.s32.totalorder %v675, %v700
    %vm724 = vcmp.ge.s32.totalorder %v676, %v700
    %vm725 = vcmp.ge.s32.totalorder %v675, %v701
    %vm726 = vcmp.ge.s32.totalorder %v676, %v701
    %vm727 = vcmp.ge.s32.totalorder %v675, %v702
    %vm728 = vcmp.ge.s32.totalorder %v676, %v702
    %vm729 = vcmp.ge.s32.totalorder %v675, %v703
    %vm730 = vcmp.ge.s32.totalorder %v676, %v703
    %vm731 = vcmp.ge.s32.totalorder %v675, %v704
    %vm732 = vcmp.ge.s32.totalorder %v676, %v704
    %vm733 = vcmp.ge.s32.totalorder %v675, %v705
    %vm734 = vcmp.ge.s32.totalorder %v676, %v705
    %vm735 = vcmp.ge.s32.totalorder %v675, %v706
    %vm736 = vcmp.ge.s32.totalorder %v676, %v706
    %vm737 = vcmp.ge.s32.totalorder %v675, %v707
    %vm738 = vcmp.ge.s32.totalorder %v676, %v707
    %vm739 = vcmp.ge.s32.totalorder %v675, %v708
    %vm740 = vcmp.ge.s32.totalorder %v676, %v708
    %v741 = vadd.s32 %v693, 12
    %v742 = vadd.s32 %v694, 12
    %v743 = vadd.s32 %v695, 12
    %v744 = vadd.s32 %v696, 12
    %v745 = vadd.s32 %v697, 12
    %v746 = vadd.s32 %v698, 12
    %v747 = vadd.s32 %v699, 12
    %v748 = vadd.s32 %v700, 12
    %v749 = vadd.s32 %v701, 12
    %v750 = vadd.s32 %v702, 12
    %v751 = vadd.s32 %v703, 12
    %v752 = vadd.s32 %v704, 12
    %v753 = vadd.s32 %v705, 12
    %v754 = vadd.s32 %v706, 12
    %v755 = vadd.s32 %v707, 12
    %v756 = vadd.s32 %v708, 12
    %vm757 = vcmp.lt.s32.totalorder %v675, %v741
    %vm758 = vcmp.lt.s32.totalorder %v676, %v741
    %vm759 = vcmp.lt.s32.totalorder %v675, %v742
    %vm760 = vcmp.lt.s32.totalorder %v676, %v742
    %vm761 = vcmp.lt.s32.totalorder %v675, %v743
    %vm762 = vcmp.lt.s32.totalorder %v676, %v743
    %vm763 = vcmp.lt.s32.totalorder %v675, %v744
    %vm764 = vcmp.lt.s32.totalorder %v676, %v744
    %vm765 = vcmp.lt.s32.totalorder %v675, %v745
    %vm766 = vcmp.lt.s32.totalorder %v676, %v745
    %vm767 = vcmp.lt.s32.totalorder %v675, %v746
    %vm768 = vcmp.lt.s32.totalorder %v676, %v746
    %vm769 = vcmp.lt.s32.totalorder %v675, %v747
    %vm770 = vcmp.lt.s32.totalorder %v676, %v747
    %vm771 = vcmp.lt.s32.totalorder %v675, %v748
    %vm772 = vcmp.lt.s32.totalorder %v676, %v748
    %vm773 = vcmp.lt.s32.totalorder %v675, %v749
    %vm774 = vcmp.lt.s32.totalorder %v676, %v749
    %vm775 = vcmp.lt.s32.totalorder %v675, %v750
    %vm776 = vcmp.lt.s32.totalorder %v676, %v750
    %vm777 = vcmp.lt.s32.totalorder %v675, %v751
    %vm778 = vcmp.lt.s32.totalorder %v676, %v751
    %vm779 = vcmp.lt.s32.totalorder %v675, %v752
    %vm780 = vcmp.lt.s32.totalorder %v676, %v752
    %vm781 = vcmp.lt.s32.totalorder %v675, %v753
    %vm782 = vcmp.lt.s32.totalorder %v676, %v753
    %vm783 = vcmp.lt.s32.totalorder %v675, %v754
    %vm784 = vcmp.lt.s32.totalorder %v676, %v754
    %vm785 = vcmp.lt.s32.totalorder %v675, %v755
    %vm786 = vcmp.lt.s32.totalorder %v676, %v755
    %vm787 = vcmp.lt.s32.totalorder %v675, %v756
    %vm788 = vcmp.lt.s32.totalorder %v676, %v756
    %vm789 = vmand %vm709, %vm757
    %vm790 = vmand %vm710, %vm758
    %vm791 = vmand %vm711, %vm759
    %vm792 = vmand %vm712, %vm760
    %vm793 = vmand %vm713, %vm761
    %vm794 = vmand %vm714, %vm762
    %vm795 = vmand %vm715, %vm763
    %vm796 = vmand %vm716, %vm764
    %vm797 = vmand %vm717, %vm765
    %vm798 = vmand %vm718, %vm766
    %vm799 = vmand %vm719, %vm767
    %vm800 = vmand %vm720, %vm768
    %vm801 = vmand %vm721, %vm769
    %vm802 = vmand %vm722, %vm770
    %vm803 = vmand %vm723, %vm771
    %vm804 = vmand %vm724, %vm772
    %vm805 = vmand %vm725, %vm773
    %vm806 = vmand %vm726, %vm774
    %vm807 = vmand %vm727, %vm775
    %vm808 = vmand %vm728, %vm776
    %vm809 = vmand %vm729, %vm777
    %vm810 = vmand %vm730, %vm778
    %vm811 = vmand %vm731, %vm779
    %vm812 = vmand %vm732, %vm780
    %vm813 = vmand %vm733, %vm781
    %vm814 = vmand %vm734, %vm782
    %vm815 = vmand %vm735, %vm783
    %vm816 = vmand %vm736, %vm784
    %vm817 = vmand %vm737, %vm785
    %vm818 = vmand %vm738, %vm786
    %vm819 = vmand %vm739, %vm787
    %vm820 = vmand %vm740, %vm788
    %v821 = vsel %vm789, 1, 0
    %v822 = vsel %vm790, 1, 0
    %v823 = vsel %vm791, 1, 0
    %v824 = vsel %vm792, 1, 0
    %v825 = vsel %vm793, 1, 0
    %v826 = vsel %vm794, 1, 0
    %v827 = vsel %vm795, 1, 0
    %v828 = vsel %vm796, 1, 0
    %v829 = vsel %vm797, 1, 0
    %v830 = vsel %vm798, 1, 0
    %v831 = vsel %vm799, 1, 0
    %v832 = vsel %vm800, 1, 0
    %v833 = vsel %vm801, 1, 0
    %v834 = vsel %vm802, 1, 0
    %v835 = vsel %vm803, 1, 0
    %v836 = vsel %vm804, 1, 0
    %v837 = vsel %vm805, 1, 0
    %v838 = vsel %vm806, 1, 0
    %v839 = vsel %vm807, 1, 0
    %v840 = vsel %vm808, 1, 0
    %v841 = vsel %vm809, 1, 0
    %v842 = vsel %vm810, 1, 0
    %v843 = vsel %vm811, 1, 0
    %v844 = vsel %vm812, 1, 0
    %v845 = vsel %vm813, 1, 0
    %v846 = vsel %vm814, 1, 0
    %v847 = vsel %vm815, 1, 0
    %v848 = vsel %vm816, 1, 0
    %v849 = vsel %vm817, 1, 0
    %v850 = vsel %vm818, 1, 0
    %v851 = vsel %vm819, 1, 0
    %v852 = vsel %vm820, 1, 0
    %v853 = vcvt.s32.f32 %v821
    %v854 = vcvt.s32.f32 %v822
    %v855 = vcvt.s32.f32 %v823
    %v856 = vcvt.s32.f32 %v824
    %v857 = vcvt.s32.f32 %v825
    %v858 = vcvt.s32.f32 %v826
    %v859 = vcvt.s32.f32 %v827
    %v860 = vcvt.s32.f32 %v828
    %v861 = vcvt.s32.f32 %v829
    %v862 = vcvt.s32.f32 %v830
    %v863 = vcvt.s32.f32 %v831
    %v864 = vcvt.s32.f32 %v832
    %v865 = vcvt.s32.f32 %v833
    %v866 = vcvt.s32.f32 %v834
    %v867 = vcvt.s32.f32 %v835
    %v868 = vcvt.s32.f32 %v836
    %v869 = vcvt.s32.f32 %v837
    %v870 = vcvt.s32.f32 %v838
    %v871 = vcvt.s32.f32 %v839
    %v872 = vcvt.s32.f32 %v840
    %v873 = vcvt.s32.f32 %v841
    %v874 = vcvt.s32.f32 %v842
    %v875 = vcvt.s32.f32 %v843
    %v876 = vcvt.s32.f32 %v844
    %v877 = vcvt.s32.f32 %v845
    %v878 = vcvt.s32.f32 %v846
    %v879 = vcvt.s32.f32 %v847
    %v880 = vcvt.s32.f32 %v848
    %v881 = vcvt.s32.f32 %v849
    %v882 = vcvt.s32.f32 %v850
    %v883 = vcvt.s32.f32 %v851
    %v884 = vcvt.s32.f32 %v852
    %v885 = vmul.f32 %v563, %v853
    %v886 = vmul.f32 %v565, %v854
    %v887 = vmul.f32 %v563, %v855
    %v888 = vmul.f32 %v565, %v856
    %v889 = vmul.f32 %v563, %v857
    %v890 = vmul.f32 %v565, %v858
    %v891 = vmul.f32 %v563, %v859
    %v892 = vmul.f32 %v565, %v860
    %v893 = vmul.f32 %v563, %v861
    %v894 = vmul.f32 %v565, %v862
    %v895 = vmul.f32 %v563, %v863
    %v896 = vmul.f32 %v565, %v864
    %v897 = vmul.f32 %v563, %v865
    %v898 = vmul.f32 %v565, %v866
    %v899 = vmul.f32 %v563, %v867
    %v900 = vmul.f32 %v565, %v868
    %v901 = vmul.f32 %v563, %v869
    %v902 = vmul.f32 %v565, %v870
    %v903 = vmul.f32 %v563, %v871
    %v904 = vmul.f32 %v565, %v872
    %v905 = vmul.f32 %v563, %v873
    %v906 = vmul.f32 %v565, %v874
    %v907 = vmul.f32 %v563, %v875
    %v908 = vmul.f32 %v565, %v876
    %v909 = vmul.f32 %v563, %v877
    %v910 = vmul.f32 %v565, %v878
    %v911 = vmul.f32 %v563, %v879
    %v912 = vmul.f32 %v565, %v880
    %v913 = vmul.f32 %v563, %v881
    %v914 = vmul.f32 %v565, %v882
    %v915 = vmul.f32 %v563, %v883
    %v916 = vmul.f32 %v565, %v884
    %v917 = vmul.f32 %v567, %v853
    %v918 = vmul.f32 %v569, %v854
    %v919 = vmul.f32 %v567, %v855
    %v920 = vmul.f32 %v569, %v856
    %v921 = vmul.f32 %v567, %v857
    %v922 = vmul.f32 %v569, %v858
    %v923 = vmul.f32 %v567, %v859
    %v924 = vmul.f32 %v569, %v860
    %v925 = vmul.f32 %v567, %v861
    %v926 = vmul.f32 %v569, %v862
    %v927 = vmul.f32 %v567, %v863
    %v928 = vmul.f32 %v569, %v864
    %v929 = vmul.f32 %v567, %v865
    %v930 = vmul.f32 %v569, %v866
    %v931 = vmul.f32 %v567, %v867
    %v932 = vmul.f32 %v569, %v868
    %v933 = vmul.f32 %v567, %v869
    %v934 = vmul.f32 %v569, %v870
    %v935 = vmul.f32 %v567, %v871
    %v936 = vmul.f32 %v569, %v872
    %v937 = vmul.f32 %v567, %v873
    %v938 = vmul.f32 %v569, %v874
    %v939 = vmul.f32 %v567, %v875
    %v940 = vmul.f32 %v569, %v876
    %v941 = vmul.f32 %v567, %v877
    %v942 = vmul.f32 %v569, %v878
    %v943 = vmul.f32 %v567, %v879
    %v944 = vmul.f32 %v569, %v880
    %v945 = vmul.f32 %v567, %v881
    %v946 = vmul.f32 %v569, %v882
    %v947 = vmul.f32 %v567, %v883
    %v948 = vmul.f32 %v569, %v884
    %949 = vmatprep.subr.mxu0 0.0
    %950 = vmatpush1.xpose.msra.mxu0 0.0
    %951 = vmatprep.subr.mxu0 0.0
    %952 = vmatpush1.xpose.msra.mxu0 0.0
    %953 = vmatprep.subr.mxu0 0.0
    %954 = vmatpush1.xpose.msra.mxu0 0.0
    %955 = vmatprep.subr.mxu0 0.0
    %956 = vmatpush1.xpose.msra.mxu0 0.0
    %957 = vmatprep.subr.mxu0 0.0
    %958 = vmatpush1.xpose.msra.mxu0 0.0
    %959 = vmatprep.subr.mxu0 0.0
    %960 = vmatpush1.xpose.msra.mxu0 0.0
    %961 = vmatprep.subr.mxu0 0.0
    %962 = vmatpush1.xpose.msra.mxu0 0.0
    %963 = vmatprep.subr.mxu0 0.0
    %964 = vmatpush1.xpose.msra.mxu0 0.0
    %965 = vmatprep.subr.mxu0 0.0
    %966 = vmatpush1.xpose.msra.mxu0 0.0
    %967 = vmatprep.subr.mxu0 0.0
    %968 = vmatpush1.xpose.msra.mxu0 0.0
    %969 = vmatprep.subr.mxu0 0.0
    %970 = vmatpush1.xpose.msra.mxu0 0.0
    %971 = vmatprep.subr.mxu0 0.0
    %972 = vmatpush1.xpose.msra.mxu0 0.0
    %973 = vmatprep.subr.mxu0 0.0
    %974 = vmatpush1.xpose.msra.mxu0 0.0
    %975 = vmatprep.subr.mxu0 0.0
    %976 = vmatpush1.xpose.msra.mxu0 0.0
    %977 = vmatprep.subr.mxu0 0.0
    %978 = vmatpush1.xpose.msra.mxu0 0.0
    %979 = vmatprep.subr.mxu0 %v608
    %980 = vmatpush1.xpose.msra.mxu0 %v606
    %981 = vmatprep.subr.mxu0 0.0
    %982 = vmatpush2.xpose.msra.mxu0 0.0
    %983 = vmatprep.subr.mxu0 0.0
    %984 = vmatpush2.xpose.msra.mxu0 0.0
    %985 = vmatprep.subr.mxu0 0.0
    %986 = vmatpush2.xpose.msra.mxu0 0.0
    %987 = vmatprep.subr.mxu0 0.0
    %988 = vmatpush2.xpose.msra.mxu0 0.0
    %989 = vmatprep.subr.mxu0 0.0
    %990 = vmatpush2.xpose.msra.mxu0 0.0
    %991 = vmatprep.subr.mxu0 0.0
    %992 = vmatpush2.xpose.msra.mxu0 0.0
    %993 = vmatprep.subr.mxu0 0.0
    %994 = vmatpush2.xpose.msra.mxu0 0.0
    %995 = vmatprep.subr.mxu0 0.0
    %996 = vmatpush2.xpose.msra.mxu0 0.0
    %997 = vmatprep.subr.mxu0 0.0
    %998 = vmatpush2.xpose.msra.mxu0 0.0
    %999 = vmatprep.subr.mxu0 0.0
    %1000 = vmatpush2.xpose.msra.mxu0 0.0
    %1001 = vmatprep.subr.mxu0 0.0
    %1002 = vmatpush2.xpose.msra.mxu0 0.0
    %1003 = vmatprep.subr.mxu0 0.0
    %1004 = vmatpush2.xpose.msra.mxu0 0.0
    %1005 = vmatprep.subr.mxu0 0.0
    %1006 = vmatpush2.xpose.msra.mxu0 0.0
    %1007 = vmatprep.subr.mxu0 0.0
    %1008 = vmatpush2.xpose.msra.mxu0 0.0
    %1009 = vmatprep.subr.mxu0 0.0
    %1010 = vmatpush2.xpose.msra.mxu0 0.0
    %1011 = vmatprep.subr.mxu0 0.0
    %1012 = vmatpush2.xpose.msra.mxu0 0.0
    %1013 = vmatprep.mubr.f32.mxu0 %v886
    %1014 = vmatmul.mubr.f32.gmra.mxu0 %v885
    %v1015 = vpop.f32.mrf.mxu0
    %v1016 = vadd.f32 0.0, %v1015
    %v1017 = vpop.f32.mrf.mxu0
    %1018 = vmatprep.mubr.f32.mxu0 %v888
    %1019 = vmatmul.mubr.f32.gmra.mxu0 %v887
    %v1020 = vpop.f32.mrf.mxu0
    %v1021 = vadd.f32 0.0, %v1020
    %v1022 = vpop.f32.mrf.mxu0
    %1023 = vmatprep.mubr.f32.mxu0 %v890
    %1024 = vmatmul.mubr.f32.gmra.mxu0 %v889
    %v1025 = vpop.f32.mrf.mxu0
    %v1026 = vadd.f32 0.0, %v1025
    %v1027 = vpop.f32.mrf.mxu0
    %1028 = vmatprep.mubr.f32.mxu0 %v892
    %1029 = vmatmul.mubr.f32.gmra.mxu0 %v891
    %v1030 = vpop.f32.mrf.mxu0
    %v1031 = vadd.f32 0.0, %v1030
    %v1032 = vpop.f32.mrf.mxu0
    %1033 = vmatprep.mubr.f32.mxu0 %v894
    %1034 = vmatmul.mubr.f32.gmra.mxu0 %v893
    %v1035 = vpop.f32.mrf.mxu0
    %v1036 = vadd.f32 0.0, %v1035
    %v1037 = vpop.f32.mrf.mxu0
    %1038 = vmatprep.mubr.f32.mxu0 %v896
    %1039 = vmatmul.mubr.f32.gmra.mxu0 %v895
    %v1040 = vpop.f32.mrf.mxu0
    %v1041 = vadd.f32 0.0, %v1040
    %v1042 = vpop.f32.mrf.mxu0
    %1043 = vmatprep.mubr.f32.mxu0 %v898
    %1044 = vmatmul.mubr.f32.gmra.mxu0 %v897
    %v1045 = vpop.f32.mrf.mxu0
    %v1046 = vadd.f32 0.0, %v1045
    %v1047 = vpop.f32.mrf.mxu0
    %1048 = vmatprep.mubr.f32.mxu0 %v900
    %1049 = vmatmul.mubr.f32.gmra.mxu0 %v899
    %v1050 = vpop.f32.mrf.mxu0
    %v1051 = vadd.f32 0.0, %v1050
    %v1052 = vpop.f32.mrf.mxu0
    %1053 = vmatprep.mubr.f32.mxu0 %v902
    %1054 = vmatmul.mubr.f32.gmra.mxu0 %v901
    %v1055 = vpop.f32.mrf.mxu0
    %v1056 = vadd.f32 0.0, %v1055
    %v1057 = vpop.f32.mrf.mxu0
    %1058 = vmatprep.mubr.f32.mxu0 %v904
    %1059 = vmatmul.mubr.f32.gmra.mxu0 %v903
    %v1060 = vpop.f32.mrf.mxu0
    %v1061 = vadd.f32 0.0, %v1060
    %v1062 = vpop.f32.mrf.mxu0
    %1063 = vmatprep.mubr.f32.mxu0 %v906
    %1064 = vmatmul.mubr.f32.gmra.mxu0 %v905
    %v1065 = vpop.f32.mrf.mxu0
    %v1066 = vadd.f32 0.0, %v1065
    %v1067 = vpop.f32.mrf.mxu0
    %1068 = vmatprep.mubr.f32.mxu0 %v908
    %1069 = vmatmul.mubr.f32.gmra.mxu0 %v907
    %v1070 = vpop.f32.mrf.mxu0
    %v1071 = vadd.f32 0.0, %v1070
    %v1072 = vpop.f32.mrf.mxu0
    %1073 = vmatprep.mubr.f32.mxu0 %v910
    %1074 = vmatmul.mubr.f32.gmra.mxu0 %v909
    %v1075 = vpop.f32.mrf.mxu0
    %v1076 = vadd.f32 0.0, %v1075
    %v1077 = vpop.f32.mrf.mxu0
    %1078 = vmatprep.mubr.f32.mxu0 %v912
    %1079 = vmatmul.mubr.f32.gmra.mxu0 %v911
    %v1080 = vpop.f32.mrf.mxu0
    %v1081 = vadd.f32 0.0, %v1080
    %v1082 = vpop.f32.mrf.mxu0
    %1083 = vmatprep.mubr.f32.mxu0 %v914
    %1084 = vmatmul.mubr.f32.gmra.mxu0 %v913
    %v1085 = vpop.f32.mrf.mxu0
    %v1086 = vadd.f32 0.0, %v1085
    %v1087 = vpop.f32.mrf.mxu0
    %1088 = vmatprep.mubr.f32.mxu0 %v916
    %1089 = vmatmul.mubr.f32.gmra.mxu0 %v915
    %v1090 = vpop.f32.mrf.mxu0
    %v1091 = vadd.f32 0.0, %v1090
    %v1092 = vpop.f32.mrf.mxu0
    %1093 = vdwg.mxu0
    %1094 = vmatprep.subr.mxu0 0.0
    %1095 = vmatpush1.xpose.msra.mxu0 0.0
    %1096 = vmatprep.subr.mxu0 0.0
    %1097 = vmatpush1.xpose.msra.mxu0 0.0
    %1098 = vmatprep.subr.mxu0 0.0
    %1099 = vmatpush1.xpose.msra.mxu0 0.0
    %1100 = vmatprep.subr.mxu0 0.0
    %1101 = vmatpush1.xpose.msra.mxu0 0.0
    %1102 = vmatprep.subr.mxu0 0.0
    %1103 = vmatpush1.xpose.msra.mxu0 0.0
    %1104 = vmatprep.subr.mxu0 0.0
    %1105 = vmatpush1.xpose.msra.mxu0 0.0
    %1106 = vmatprep.subr.mxu0 0.0
    %1107 = vmatpush1.xpose.msra.mxu0 0.0
    %1108 = vmatprep.subr.mxu0 0.0
    %1109 = vmatpush1.xpose.msra.mxu0 0.0
    %1110 = vmatprep.subr.mxu0 0.0
    %1111 = vmatpush1.xpose.msra.mxu0 0.0
    %1112 = vmatprep.subr.mxu0 0.0
    %1113 = vmatpush1.xpose.msra.mxu0 0.0
    %1114 = vmatprep.subr.mxu0 0.0
    %1115 = vmatpush1.xpose.msra.mxu0 0.0
    %1116 = vmatprep.subr.mxu0 0.0
    %1117 = vmatpush1.xpose.msra.mxu0 0.0
    %1118 = vmatprep.subr.mxu0 0.0
    %1119 = vmatpush1.xpose.msra.mxu0 0.0
    %1120 = vmatprep.subr.mxu0 0.0
    %1121 = vmatpush1.xpose.msra.mxu0 0.0
    %1122 = vmatprep.subr.mxu0 0.0
    %1123 = vmatpush1.xpose.msra.mxu0 0.0
    %1124 = vmatprep.subr.mxu0 %v612
    %1125 = vmatpush1.xpose.msra.mxu0 %v610
    %1126 = vmatprep.subr.mxu0 0.0
    %1127 = vmatpush2.xpose.msra.mxu0 0.0
    %1128 = vmatprep.subr.mxu0 0.0
    %1129 = vmatpush2.xpose.msra.mxu0 0.0
    %1130 = vmatprep.subr.mxu0 0.0
    %1131 = vmatpush2.xpose.msra.mxu0 0.0
    %1132 = vmatprep.subr.mxu0 0.0
    %1133 = vmatpush2.xpose.msra.mxu0 0.0
    %1134 = vmatprep.subr.mxu0 0.0
    %1135 = vmatpush2.xpose.msra.mxu0 0.0
    %1136 = vmatprep.subr.mxu0 0.0
    %1137 = vmatpush2.xpose.msra.mxu0 0.0
    %1138 = vmatprep.subr.mxu0 0.0
    %1139 = vmatpush2.xpose.msra.mxu0 0.0
    %1140 = vmatprep.subr.mxu0 0.0
    %1141 = vmatpush2.xpose.msra.mxu0 0.0
    %1142 = vmatprep.subr.mxu0 0.0
    %1143 = vmatpush2.xpose.msra.mxu0 0.0
    %1144 = vmatprep.subr.mxu0 0.0
    %1145 = vmatpush2.xpose.msra.mxu0 0.0
    %1146 = vmatprep.subr.mxu0 0.0
    %1147 = vmatpush2.xpose.msra.mxu0 0.0
    %1148 = vmatprep.subr.mxu0 0.0
    %1149 = vmatpush2.xpose.msra.mxu0 0.0
    %1150 = vmatprep.subr.mxu0 0.0
    %1151 = vmatpush2.xpose.msra.mxu0 0.0
    %1152 = vmatprep.subr.mxu0 0.0
    %1153 = vmatpush2.xpose.msra.mxu0 0.0
    %1154 = vmatprep.subr.mxu0 0.0
    %1155 = vmatpush2.xpose.msra.mxu0 0.0
    %1156 = vmatprep.subr.mxu0 0.0
    %1157 = vmatpush2.xpose.msra.mxu0 0.0
    %1158 = vmatprep.mubr.f32.mxu0 %v918
    %1159 = vmatmul.mubr.f32.gmra.mxu0 %v917
    %v1160 = vpop.f32.mrf.mxu0
    %v1161 = vadd.f32 0.0, %v1160
    %v1162 = vpop.f32.mrf.mxu0
    %1163 = vmatprep.mubr.f32.mxu0 %v920
    %1164 = vmatmul.mubr.f32.gmra.mxu0 %v919
    %v1165 = vpop.f32.mrf.mxu0
    %v1166 = vadd.f32 0.0, %v1165
    %v1167 = vpop.f32.mrf.mxu0
    %1168 = vmatprep.mubr.f32.mxu0 %v922
    %1169 = vmatmul.mubr.f32.gmra.mxu0 %v921
    %v1170 = vpop.f32.mrf.mxu0
    %v1171 = vadd.f32 0.0, %v1170
    %v1172 = vpop.f32.mrf.mxu0
    %1173 = vmatprep.mubr.f32.mxu0 %v924
    %1174 = vmatmul.mubr.f32.gmra.mxu0 %v923
    %v1175 = vpop.f32.mrf.mxu0
    %v1176 = vadd.f32 0.0, %v1175
    %v1177 = vpop.f32.mrf.mxu0
    %1178 = vmatprep.mubr.f32.mxu0 %v926
    %1179 = vmatmul.mubr.f32.gmra.mxu0 %v925
    %v1180 = vpop.f32.mrf.mxu0
    %v1181 = vadd.f32 0.0, %v1180
    %v1182 = vpop.f32.mrf.mxu0
    %1183 = vmatprep.mubr.f32.mxu0 %v928
    %1184 = vmatmul.mubr.f32.gmra.mxu0 %v927
    %v1185 = vpop.f32.mrf.mxu0
    %v1186 = vadd.f32 0.0, %v1185
    %v1187 = vpop.f32.mrf.mxu0
    %1188 = vmatprep.mubr.f32.mxu0 %v930
    %1189 = vmatmul.mubr.f32.gmra.mxu0 %v929
    %v1190 = vpop.f32.mrf.mxu0
    %v1191 = vadd.f32 0.0, %v1190
    %v1192 = vpop.f32.mrf.mxu0
    %1193 = vmatprep.mubr.f32.mxu0 %v932
    %1194 = vmatmul.mubr.f32.gmra.mxu0 %v931
    %v1195 = vpop.f32.mrf.mxu0
    %v1196 = vadd.f32 0.0, %v1195
    %v1197 = vpop.f32.mrf.mxu0
    %1198 = vmatprep.mubr.f32.mxu0 %v934
    %1199 = vmatmul.mubr.f32.gmra.mxu0 %v933
    %v1200 = vpop.f32.mrf.mxu0
    %v1201 = vadd.f32 0.0, %v1200
    %v1202 = vpop.f32.mrf.mxu0
    %1203 = vmatprep.mubr.f32.mxu0 %v936
    %1204 = vmatmul.mubr.f32.gmra.mxu0 %v935
    %v1205 = vpop.f32.mrf.mxu0
    %v1206 = vadd.f32 0.0, %v1205
    %v1207 = vpop.f32.mrf.mxu0
    %1208 = vmatprep.mubr.f32.mxu0 %v938
    %1209 = vmatmul.mubr.f32.gmra.mxu0 %v937
    %v1210 = vpop.f32.mrf.mxu0
    %v1211 = vadd.f32 0.0, %v1210
    %v1212 = vpop.f32.mrf.mxu0
    %1213 = vmatprep.mubr.f32.mxu0 %v940
    %1214 = vmatmul.mubr.f32.gmra.mxu0 %v939
    %v1215 = vpop.f32.mrf.mxu0
    %v1216 = vadd.f32 0.0, %v1215
    %v1217 = vpop.f32.mrf.mxu0
    %1218 = vmatprep.mubr.f32.mxu0 %v942
    %1219 = vmatmul.mubr.f32.gmra.mxu0 %v941
    %v1220 = vpop.f32.mrf.mxu0
    %v1221 = vadd.f32 0.0, %v1220
    %v1222 = vpop.f32.mrf.mxu0
    %1223 = vmatprep.mubr.f32.mxu0 %v944
    %1224 = vmatmul.mubr.f32.gmra.mxu0 %v943
    %v1225 = vpop.f32.mrf.mxu0
    %v1226 = vadd.f32 0.0, %v1225
    %v1227 = vpop.f32.mrf.mxu0
    %1228 = vmatprep.mubr.f32.mxu0 %v946
    %1229 = vmatmul.mubr.f32.gmra.mxu0 %v945
    %v1230 = vpop.f32.mrf.mxu0
    %v1231 = vadd.f32 0.0, %v1230
    %v1232 = vpop.f32.mrf.mxu0
    %1233 = vmatprep.mubr.f32.mxu0 %v948
    %1234 = vmatmul.mubr.f32.gmra.mxu0 %v947
    %v1235 = vpop.f32.mrf.mxu0
    %v1236 = vadd.f32 0.0, %v1235
    %v1237 = vpop.f32.mrf.mxu0
    %1238 = vdwg.mxu0
    %vm1239 = vcmask 64512
    %v1240 = vsel %vm1239, %v1016, -inf
    %1241 = vmax.xlane.f32.xlu0 %v1240
    %v1242 = vpop.xlane.xlu0 %1241
    %v1243 = vsel %vm1239, %v1021, -inf
    %1244 = vmax.xlane.f32.xlu0 %v1243
    %v1245 = vpop.xlane.xlu0 %1244
    %v1246 = vsel %vm1239, %v1026, -inf
    %1247 = vmax.xlane.f32.xlu0 %v1246
    %v1248 = vpop.xlane.xlu0 %1247
    %v1249 = vsel %vm1239, %v1031, -inf
    %1250 = vmax.xlane.f32.xlu0 %v1249
    %v1251 = vpop.xlane.xlu0 %1250
    %v1252 = vsel %vm1239, %v1036, -inf
    %1253 = vmax.xlane.f32.xlu0 %v1252
    %v1254 = vpop.xlane.xlu0 %1253
    %v1255 = vsel %vm1239, %v1041, -inf
    %1256 = vmax.xlane.f32.xlu0 %v1255
    %v1257 = vpop.xlane.xlu0 %1256
    %v1258 = vsel %vm1239, %v1046, -inf
    %1259 = vmax.xlane.f32.xlu0 %v1258
    %v1260 = vpop.xlane.xlu0 %1259
    %v1261 = vsel %vm1239, %v1051, -inf
    %1262 = vmax.xlane.f32.xlu0 %v1261
    %v1263 = vpop.xlane.xlu0 %1262
    %v1264 = vsel %vm1239, %v1056, -inf
    %1265 = vmax.xlane.f32.xlu0 %v1264
    %v1266 = vpop.xlane.xlu0 %1265
    %v1267 = vsel %vm1239, %v1061, -inf
    %1268 = vmax.xlane.f32.xlu0 %v1267
    %v1269 = vpop.xlane.xlu0 %1268
    %v1270 = vsel %vm1239, %v1066, -inf
    %1271 = vmax.xlane.f32.xlu0 %v1270
    %v1272 = vpop.xlane.xlu0 %1271
    %v1273 = vsel %vm1239, %v1071, -inf
    %1274 = vmax.xlane.f32.xlu0 %v1273
    %v1275 = vpop.xlane.xlu0 %1274
    %v1276 = vsel %vm1239, %v1076, -inf
    %1277 = vmax.xlane.f32.xlu0 %v1276
    %v1278 = vpop.xlane.xlu0 %1277
    %v1279 = vsel %vm1239, %v1081, -inf
    %1280 = vmax.xlane.f32.xlu0 %v1279
    %v1281 = vpop.xlane.xlu0 %1280
    %v1282 = vsel %vm1239, %v1086, -inf
    %1283 = vmax.xlane.f32.xlu0 %v1282
    %v1284 = vpop.xlane.xlu0 %1283
    %v1285 = vsel %vm1239, %v1091, -inf
    %1286 = vmax.xlane.f32.xlu0 %v1285
    %v1287 = vpop.xlane.xlu0 %1286
    %v1288 = vsel %vm1239, %v1161, -inf
    %1289 = vmax.xlane.f32.xlu0 %v1288
    %v1290 = vpop.xlane.xlu0 %1289
    %v1291 = vsel %vm1239, %v1166, -inf
    %1292 = vmax.xlane.f32.xlu0 %v1291
    %v1293 = vpop.xlane.xlu0 %1292
    %v1294 = vsel %vm1239, %v1171, -inf
    %1295 = vmax.xlane.f32.xlu0 %v1294
    %v1296 = vpop.xlane.xlu0 %1295
    %v1297 = vsel %vm1239, %v1176, -inf
    %1298 = vmax.xlane.f32.xlu0 %v1297
    %v1299 = vpop.xlane.xlu0 %1298
    %v1300 = vsel %vm1239, %v1181, -inf
    %1301 = vmax.xlane.f32.xlu0 %v1300
    %v1302 = vpop.xlane.xlu0 %1301
    %v1303 = vsel %vm1239, %v1186, -inf
    %1304 = vmax.xlane.f32.xlu0 %v1303
    %v1305 = vpop.xlane.xlu0 %1304
    %v1306 = vsel %vm1239, %v1191, -inf
    %1307 = vmax.xlane.f32.xlu0 %v1306
    %v1308 = vpop.xlane.xlu0 %1307
    %v1309 = vsel %vm1239, %v1196, -inf
    %1310 = vmax.xlane.f32.xlu0 %v1309
    %v1311 = vpop.xlane.xlu0 %1310
    %v1312 = vsel %vm1239, %v1201, -inf
    %1313 = vmax.xlane.f32.xlu0 %v1312
    %v1314 = vpop.xlane.xlu0 %1313
    %v1315 = vsel %vm1239, %v1206, -inf
    %1316 = vmax.xlane.f32.xlu0 %v1315
    %v1317 = vpop.xlane.xlu0 %1316
    %v1318 = vsel %vm1239, %v1211, -inf
    %1319 = vmax.xlane.f32.xlu0 %v1318
    %v1320 = vpop.xlane.xlu0 %1319
    %v1321 = vsel %vm1239, %v1216, -inf
    %1322 = vmax.xlane.f32.xlu0 %v1321
    %v1323 = vpop.xlane.xlu0 %1322
    %v1324 = vsel %vm1239, %v1221, -inf
    %1325 = vmax.xlane.f32.xlu0 %v1324
    %v1326 = vpop.xlane.xlu0 %1325
    %v1327 = vsel %vm1239, %v1226, -inf
    %1328 = vmax.xlane.f32.xlu0 %v1327
    %v1329 = vpop.xlane.xlu0 %1328
    %v1330 = vsel %vm1239, %v1231, -inf
    %1331 = vmax.xlane.f32.xlu0 %v1330
    %v1332 = vpop.xlane.xlu0 %1331
    %v1333 = vsel %vm1239, %v1236, -inf
    %1334 = vmax.xlane.f32.xlu0 %v1333
    %v1335 = vpop.xlane.xlu0 %1334
    %v1336 = vsub.f32 %v1016, %v1242
    %v1337 = vsub.f32 %v1021, %v1245
    %v1338 = vsub.f32 %v1026, %v1248
    %v1339 = vsub.f32 %v1031, %v1251
    %v1340 = vsub.f32 %v1036, %v1254
    %v1341 = vsub.f32 %v1041, %v1257
    %v1342 = vsub.f32 %v1046, %v1260
    %v1343 = vsub.f32 %v1051, %v1263
    %v1344 = vsub.f32 %v1056, %v1266
    %v1345 = vsub.f32 %v1061, %v1269
    %v1346 = vsub.f32 %v1066, %v1272
    %v1347 = vsub.f32 %v1071, %v1275
    %v1348 = vsub.f32 %v1076, %v1278
    %v1349 = vsub.f32 %v1081, %v1281
    %v1350 = vsub.f32 %v1086, %v1284
    %v1351 = vsub.f32 %v1091, %v1287
    %v1352 = vsub.f32 %v1161, %v1290
    %v1353 = vsub.f32 %v1166, %v1293
    %v1354 = vsub.f32 %v1171, %v1296
    %v1355 = vsub.f32 %v1176, %v1299
    %v1356 = vsub.f32 %v1181, %v1302
    %v1357 = vsub.f32 %v1186, %v1305
    %v1358 = vsub.f32 %v1191, %v1308
    %v1359 = vsub.f32 %v1196, %v1311
    %v1360 = vsub.f32 %v1201, %v1314
    %v1361 = vsub.f32 %v1206, %v1317
    %v1362 = vsub.f32 %v1211, %v1320
    %v1363 = vsub.f32 %v1216, %v1323
    %v1364 = vsub.f32 %v1221, %v1326
    %v1365 = vsub.f32 %v1226, %v1329
    %v1366 = vsub.f32 %v1231, %v1332
    %v1367 = vsub.f32 %v1236, %v1335
    %v1368 = vmul.f32 %v1336, 1.442695
    %v1369 = vpow.pop %v1368
    %v1370 = vmul.f32 %v1337, 1.442695
    %v1371 = vpow.pop %v1370
    %v1372 = vmul.f32 %v1338, 1.442695
    %v1373 = vpow.pop %v1372
    %v1374 = vmul.f32 %v1339, 1.442695
    %v1375 = vpow.pop %v1374
    %v1376 = vmul.f32 %v1340, 1.442695
    %v1377 = vpow.pop %v1376
    %v1378 = vmul.f32 %v1341, 1.442695
    %v1379 = vpow.pop %v1378
    %v1380 = vmul.f32 %v1342, 1.442695
    %v1381 = vpow.pop %v1380
    %v1382 = vmul.f32 %v1343, 1.442695
    %v1383 = vpow.pop %v1382
    %v1384 = vmul.f32 %v1344, 1.442695
    %v1385 = vpow.pop %v1384
    %v1386 = vmul.f32 %v1345, 1.442695
    %v1387 = vpow.pop %v1386
    %v1388 = vmul.f32 %v1346, 1.442695
    %v1389 = vpow.pop %v1388
    %v1390 = vmul.f32 %v1347, 1.442695
    %v1391 = vpow.pop %v1390
    %v1392 = vmul.f32 %v1348, 1.442695
    %v1393 = vpow.pop %v1392
    %v1394 = vmul.f32 %v1349, 1.442695
    %v1395 = vpow.pop %v1394
    %v1396 = vmul.f32 %v1350, 1.442695
    %v1397 = vpow.pop %v1396
    %v1398 = vmul.f32 %v1351, 1.442695
    %v1399 = vpow.pop %v1398
    %v1400 = vmul.f32 %v1352, 1.442695
    %v1401 = vpow.pop %v1400
    %v1402 = vmul.f32 %v1353, 1.442695
    %v1403 = vpow.pop %v1402
    %v1404 = vmul.f32 %v1354, 1.442695
    %v1405 = vpow.pop %v1404
    %v1406 = vmul.f32 %v1355, 1.442695
    %v1407 = vpow.pop %v1406
    %v1408 = vmul.f32 %v1356, 1.442695
    %v1409 = vpow.pop %v1408
    %v1410 = vmul.f32 %v1357, 1.442695
    %v1411 = vpow.pop %v1410
    %v1412 = vmul.f32 %v1358, 1.442695
    %v1413 = vpow.pop %v1412
    %v1414 = vmul.f32 %v1359, 1.442695
    %v1415 = vpow.pop %v1414
    %v1416 = vmul.f32 %v1360, 1.442695
    %v1417 = vpow.pop %v1416
    %v1418 = vmul.f32 %v1361, 1.442695
    %v1419 = vpow.pop %v1418
    %v1420 = vmul.f32 %v1362, 1.442695
    %v1421 = vpow.pop %v1420
    %v1422 = vmul.f32 %v1363, 1.442695
    %v1423 = vpow.pop %v1422
    %v1424 = vmul.f32 %v1364, 1.442695
    %v1425 = vpow.pop %v1424
    %v1426 = vmul.f32 %v1365, 1.442695
    %v1427 = vpow.pop %v1426
    %v1428 = vmul.f32 %v1366, 1.442695
    %v1429 = vpow.pop %v1428
    %v1430 = vmul.f32 %v1367, 1.442695
    %v1431 = vpow.pop %v1430
    %v1432 = vsel %vm1239, %v1369, 0.0
    %1433 = vadd.xlane.f32.xlu0 %v1432
    %v1434 = vpop.xlane.xlu0 %1433
    %v1435 = vsel %vm1239, %v1371, 0.0
    %1436 = vadd.xlane.f32.xlu0 %v1435
    %v1437 = vpop.xlane.xlu0 %1436
    %v1438 = vsel %vm1239, %v1373, 0.0
    %1439 = vadd.xlane.f32.xlu0 %v1438
    %v1440 = vpop.xlane.xlu0 %1439
    %v1441 = vsel %vm1239, %v1375, 0.0
    %1442 = vadd.xlane.f32.xlu0 %v1441
    %v1443 = vpop.xlane.xlu0 %1442
    %v1444 = vsel %vm1239, %v1377, 0.0
    %1445 = vadd.xlane.f32.xlu0 %v1444
    %v1446 = vpop.xlane.xlu0 %1445
    %v1447 = vsel %vm1239, %v1379, 0.0
    %1448 = vadd.xlane.f32.xlu0 %v1447
    %v1449 = vpop.xlane.xlu0 %1448
    %v1450 = vsel %vm1239, %v1381, 0.0
    %1451 = vadd.xlane.f32.xlu0 %v1450
    %v1452 = vpop.xlane.xlu0 %1451
    %v1453 = vsel %vm1239, %v1383, 0.0
    %1454 = vadd.xlane.f32.xlu0 %v1453
    %v1455 = vpop.xlane.xlu0 %1454
    %v1456 = vsel %vm1239, %v1385, 0.0
    %1457 = vadd.xlane.f32.xlu0 %v1456
    %v1458 = vpop.xlane.xlu0 %1457
    %v1459 = vsel %vm1239, %v1387, 0.0
    %1460 = vadd.xlane.f32.xlu0 %v1459
    %v1461 = vpop.xlane.xlu0 %1460
    %v1462 = vsel %vm1239, %v1389, 0.0
    %1463 = vadd.xlane.f32.xlu0 %v1462
    %v1464 = vpop.xlane.xlu0 %1463
    %v1465 = vsel %vm1239, %v1391, 0.0
    %1466 = vadd.xlane.f32.xlu0 %v1465
    %v1467 = vpop.xlane.xlu0 %1466
    %v1468 = vsel %vm1239, %v1393, 0.0
    %1469 = vadd.xlane.f32.xlu0 %v1468
    %v1470 = vpop.xlane.xlu0 %1469
    %v1471 = vsel %vm1239, %v1395, 0.0
    %1472 = vadd.xlane.f32.xlu0 %v1471
    %v1473 = vpop.xlane.xlu0 %1472
    %v1474 = vsel %vm1239, %v1397, 0.0
    %1475 = vadd.xlane.f32.xlu0 %v1474
    %v1476 = vpop.xlane.xlu0 %1475
    %v1477 = vsel %vm1239, %v1399, 0.0
    %1478 = vadd.xlane.f32.xlu0 %v1477
    %v1479 = vpop.xlane.xlu0 %1478
    %v1480 = vsel %vm1239, %v1401, 0.0
    %1481 = vadd.xlane.f32.xlu0 %v1480
    %v1482 = vpop.xlane.xlu0 %1481
    %v1483 = vsel %vm1239, %v1403, 0.0
    %1484 = vadd.xlane.f32.xlu0 %v1483
    %v1485 = vpop.xlane.xlu0 %1484
    %v1486 = vsel %vm1239, %v1405, 0.0
    %1487 = vadd.xlane.f32.xlu0 %v1486
    %v1488 = vpop.xlane.xlu0 %1487
    %v1489 = vsel %vm1239, %v1407, 0.0
    %1490 = vadd.xlane.f32.xlu0 %v1489
    %v1491 = vpop.xlane.xlu0 %1490
    %v1492 = vsel %vm1239, %v1409, 0.0
    %1493 = vadd.xlane.f32.xlu0 %v1492
    %v1494 = vpop.xlane.xlu0 %1493
    %v1495 = vsel %vm1239, %v1411, 0.0
    %1496 = vadd.xlane.f32.xlu0 %v1495
    %v1497 = vpop.xlane.xlu0 %1496
    %v1498 = vsel %vm1239, %v1413, 0.0
    %1499 = vadd.xlane.f32.xlu0 %v1498
    %v1500 = vpop.xlane.xlu0 %1499
    %v1501 = vsel %vm1239, %v1415, 0.0
    %1502 = vadd.xlane.f32.xlu0 %v1501
    %v1503 = vpop.xlane.xlu0 %1502
    %v1504 = vsel %vm1239, %v1417, 0.0
    %1505 = vadd.xlane.f32.xlu0 %v1504
    %v1506 = vpop.xlane.xlu0 %1505
    %v1507 = vsel %vm1239, %v1419, 0.0
    %1508 = vadd.xlane.f32.xlu0 %v1507
    %v1509 = vpop.xlane.xlu0 %1508
    %v1510 = vsel %vm1239, %v1421, 0.0
    %1511 = vadd.xlane.f32.xlu0 %v1510
    %v1512 = vpop.xlane.xlu0 %1511
    %v1513 = vsel %vm1239, %v1423, 0.0
    %1514 = vadd.xlane.f32.xlu0 %v1513
    %v1515 = vpop.xlane.xlu0 %1514
    %v1516 = vsel %vm1239, %v1425, 0.0
    %1517 = vadd.xlane.f32.xlu0 %v1516
    %v1518 = vpop.xlane.xlu0 %1517
    %v1519 = vsel %vm1239, %v1427, 0.0
    %1520 = vadd.xlane.f32.xlu0 %v1519
    %v1521 = vpop.xlane.xlu0 %1520
    %v1522 = vsel %vm1239, %v1429, 0.0
    %1523 = vadd.xlane.f32.xlu0 %v1522
    %v1524 = vpop.xlane.xlu0 %1523
    %v1525 = vsel %vm1239, %v1431, 0.0
    %1526 = vadd.xlane.f32.xlu0 %v1525
    %v1527 = vpop.xlane.xlu0 %1526
    %v1528 = vrcp.pop %v1434
    %v1529 = vrcp.pop %v1437
    %v1530 = vrcp.pop %v1440
    %v1531 = vrcp.pop %v1443
    %v1532 = vrcp.pop %v1446
    %v1533 = vrcp.pop %v1449
    %v1534 = vrcp.pop %v1452
    %v1535 = vrcp.pop %v1455
    %v1536 = vrcp.pop %v1458
    %v1537 = vrcp.pop %v1461
    %v1538 = vrcp.pop %v1464
    %v1539 = vrcp.pop %v1467
    %v1540 = vrcp.pop %v1470
    %v1541 = vrcp.pop %v1473
    %v1542 = vrcp.pop %v1476
    %v1543 = vrcp.pop %v1479
    %v1544 = vrcp.pop %v1482
    %v1545 = vrcp.pop %v1485
    %v1546 = vrcp.pop %v1488
    %v1547 = vrcp.pop %v1491
    %v1548 = vrcp.pop %v1494
    %v1549 = vrcp.pop %v1497
    %v1550 = vrcp.pop %v1500
    %v1551 = vrcp.pop %v1503
    %v1552 = vrcp.pop %v1506
    %v1553 = vrcp.pop %v1509
    %v1554 = vrcp.pop %v1512
    %v1555 = vrcp.pop %v1515
    %v1556 = vrcp.pop %v1518
    %v1557 = vrcp.pop %v1521
    %v1558 = vrcp.pop %v1524
    %v1559 = vrcp.pop %v1527
    %v1560 = vmul.f32 %v1369, %v1528
    %v1561 = vmul.f32 %v1371, %v1529
    %v1562 = vmul.f32 %v1373, %v1530
    %v1563 = vmul.f32 %v1375, %v1531
    %v1564 = vmul.f32 %v1377, %v1532
    %v1565 = vmul.f32 %v1379, %v1533
    %v1566 = vmul.f32 %v1381, %v1534
    %v1567 = vmul.f32 %v1383, %v1535
    %v1568 = vmul.f32 %v1385, %v1536
    %v1569 = vmul.f32 %v1387, %v1537
    %v1570 = vmul.f32 %v1389, %v1538
    %v1571 = vmul.f32 %v1391, %v1539
    %v1572 = vmul.f32 %v1393, %v1540
    %v1573 = vmul.f32 %v1395, %v1541
    %v1574 = vmul.f32 %v1397, %v1542
    %v1575 = vmul.f32 %v1399, %v1543
    %v1576 = vmul.f32 %v1401, %v1544
    %v1577 = vmul.f32 %v1403, %v1545
    %v1578 = vmul.f32 %v1405, %v1546
    %v1579 = vmul.f32 %v1407, %v1547
    %v1580 = vmul.f32 %v1409, %v1548
    %v1581 = vmul.f32 %v1411, %v1549
    %v1582 = vmul.f32 %v1413, %v1550
    %v1583 = vmul.f32 %v1415, %v1551
    %v1584 = vmul.f32 %v1417, %v1552
    %v1585 = vmul.f32 %v1419, %v1553
    %v1586 = vmul.f32 %v1421, %v1554
    %v1587 = vmul.f32 %v1423, %v1555
    %v1588 = vmul.f32 %v1425, %v1556
    %v1589 = vmul.f32 %v1427, %v1557
    %v1590 = vmul.f32 %v1429, %v1558
    %v1591 = vmul.f32 %v1431, %v1559
    %v1593 = vsel %vm1239, %v1560, 0
    %v1596 = vsel %vm1239, %v1561, 0
    %v1599 = vsel %vm1239, %v1562, 0
    %v1602 = vsel %vm1239, %v1563, 0
    %v1605 = vsel %vm1239, %v1564, 0
    %v1608 = vsel %vm1239, %v1565, 0
    %v1611 = vsel %vm1239, %v1566, 0
    %v1614 = vsel %vm1239, %v1567, 0
    %v1617 = vsel %vm1239, %v1568, 0
    %v1620 = vsel %vm1239, %v1569, 0
    %v1623 = vsel %vm1239, %v1570, 0
    %v1626 = vsel %vm1239, %v1571, 0
    %v1629 = vsel %vm1239, %v1572, 0
    %v1632 = vsel %vm1239, %v1573, 0
    %v1635 = vsel %vm1239, %v1574, 0
    %v1638 = vsel %vm1239, %v1575, 0
    %1640 = vmatprep.subr.mxu0 0.0
    %1641 = vmatpush1.msra.mxu0 0.0
    %1642 = vmatprep.subr.mxu0 0.0
    %1643 = vmatpush1.msra.mxu0 0.0
    %1644 = vmatprep.subr.mxu0 0.0
    %1645 = vmatpush1.msra.mxu0 0.0
    %1646 = vmatprep.subr.mxu0 0.0
    %1647 = vmatpush1.msra.mxu0 0.0
    %1648 = vmatprep.subr.mxu0 0.0
    %1649 = vmatpush1.msra.mxu0 0.0
    %1650 = vmatprep.subr.mxu0 0.0
    %1651 = vmatpush1.msra.mxu0 0.0
    %1652 = vmatprep.subr.mxu0 0.0
    %1653 = vmatpush1.msra.mxu0 0.0
    %1654 = vmatprep.subr.mxu0 0.0
    %1655 = vmatpush1.msra.mxu0 0.0
    %1656 = vmatprep.subr.mxu0 0.0
    %1657 = vmatpush1.msra.mxu0 0.0
    %1658 = vmatprep.subr.mxu0 0.0
    %1659 = vmatpush1.msra.mxu0 0.0
    %1660 = vmatprep.subr.mxu0 0.0
    %1661 = vmatpush1.msra.mxu0 0.0
    %1662 = vmatprep.subr.mxu0 0.0
    %1663 = vmatpush1.msra.mxu0 0.0
    %1664 = vmatprep.subr.mxu0 0.0
    %1665 = vmatpush1.msra.mxu0 0.0
    %1666 = vmatprep.subr.mxu0 0.0
    %1667 = vmatpush1.msra.mxu0 0.0
    %1668 = vmatprep.subr.mxu0 0.0
    %1669 = vmatpush1.msra.mxu0 0.0
    %1670 = vmatprep.subr.mxu0 %v651
    %1671 = vmatpush1.msra.mxu0 %v649
    %1672 = vmatprep.subr.mxu0 0.0
    %1673 = vmatpush2.msra.mxu0 0.0
    %1674 = vmatprep.subr.mxu0 0.0
    %1675 = vmatpush2.msra.mxu0 0.0
    %1676 = vmatprep.subr.mxu0 0.0
    %1677 = vmatpush2.msra.mxu0 0.0
    %1678 = vmatprep.subr.mxu0 0.0
    %1679 = vmatpush2.msra.mxu0 0.0
    %1680 = vmatprep.subr.mxu0 0.0
    %1681 = vmatpush2.msra.mxu0 0.0
    %1682 = vmatprep.subr.mxu0 0.0
    %1683 = vmatpush2.msra.mxu0 0.0
    %1684 = vmatprep.subr.mxu0 0.0
    %1685 = vmatpush2.msra.mxu0 0.0
    %1686 = vmatprep.subr.mxu0 0.0
    %1687 = vmatpush2.msra.mxu0 0.0
    %1688 = vmatprep.subr.mxu0 0.0
    %1689 = vmatpush2.msra.mxu0 0.0
    %1690 = vmatprep.subr.mxu0 0.0
    %1691 = vmatpush2.msra.mxu0 0.0
    %1692 = vmatprep.subr.mxu0 0.0
    %1693 = vmatpush2.msra.mxu0 0.0
    %1694 = vmatprep.subr.mxu0 0.0
    %1695 = vmatpush2.msra.mxu0 0.0
    %1696 = vmatprep.subr.mxu0 0.0
    %1697 = vmatpush2.msra.mxu0 0.0
    %1698 = vmatprep.subr.mxu0 0.0
    %1699 = vmatpush2.msra.mxu0 0.0
    %1700 = vmatprep.subr.mxu0 0.0
    %1701 = vmatpush2.msra.mxu0 0.0
    %1702 = vmatprep.subr.mxu0 0.0
    %1703 = vmatpush2.msra.mxu0 0.0
    %1704 = vmatprep.mubr.f32.mxu0 0.0
    %1705 = vmatmul.mubr.f32.gmra.mxu0 %v1593
    %v1706 = vpop.f32.mrf.mxu0
    %v1707 = vadd.f32 0.0, %v1706
    %v1708 = vpop.f32.mrf.mxu0
    %v1709 = vadd.f32 0.0, %v1708
    %1710 = vmatprep.mubr.f32.mxu0 0.0
    %1711 = vmatmul.mubr.f32.gmra.mxu0 %v1596
    %v1712 = vpop.f32.mrf.mxu0
    %v1713 = vadd.f32 0.0, %v1712
    %v1714 = vpop.f32.mrf.mxu0
    %v1715 = vadd.f32 0.0, %v1714
    %1716 = vmatprep.mubr.f32.mxu0 0.0
    %1717 = vmatmul.mubr.f32.gmra.mxu0 %v1599
    %v1718 = vpop.f32.mrf.mxu0
    %v1719 = vadd.f32 0.0, %v1718
    %v1720 = vpop.f32.mrf.mxu0
    %v1721 = vadd.f32 0.0, %v1720
    %1722 = vmatprep.mubr.f32.mxu0 0.0
    %1723 = vmatmul.mubr.f32.gmra.mxu0 %v1602
    %v1724 = vpop.f32.mrf.mxu0
    %v1725 = vadd.f32 0.0, %v1724
    %v1726 = vpop.f32.mrf.mxu0
    %v1727 = vadd.f32 0.0, %v1726
    %1728 = vmatprep.mubr.f32.mxu0 0.0
    %1729 = vmatmul.mubr.f32.gmra.mxu0 %v1605
    %v1730 = vpop.f32.mrf.mxu0
    %v1731 = vadd.f32 0.0, %v1730
    %v1732 = vpop.f32.mrf.mxu0
    %v1733 = vadd.f32 0.0, %v1732
    %1734 = vmatprep.mubr.f32.mxu0 0.0
    %1735 = vmatmul.mubr.f32.gmra.mxu0 %v1608
    %v1736 = vpop.f32.mrf.mxu0
    %v1737 = vadd.f32 0.0, %v1736
    %v1738 = vpop.f32.mrf.mxu0
    %v1739 = vadd.f32 0.0, %v1738
    %1740 = vmatprep.mubr.f32.mxu0 0.0
    %1741 = vmatmul.mubr.f32.gmra.mxu0 %v1611
    %v1742 = vpop.f32.mrf.mxu0
    %v1743 = vadd.f32 0.0, %v1742
    %v1744 = vpop.f32.mrf.mxu0
    %v1745 = vadd.f32 0.0, %v1744
    %1746 = vmatprep.mubr.f32.mxu0 0.0
    %1747 = vmatmul.mubr.f32.gmra.mxu0 %v1614
    %v1748 = vpop.f32.mrf.mxu0
    %v1749 = vadd.f32 0.0, %v1748
    %v1750 = vpop.f32.mrf.mxu0
    %v1751 = vadd.f32 0.0, %v1750
    %1752 = vmatprep.mubr.f32.mxu0 0.0
    %1753 = vmatmul.mubr.f32.gmra.mxu0 %v1617
    %v1754 = vpop.f32.mrf.mxu0
    %v1755 = vadd.f32 0.0, %v1754
    %v1756 = vpop.f32.mrf.mxu0
    %v1757 = vadd.f32 0.0, %v1756
    %1758 = vmatprep.mubr.f32.mxu0 0.0
    %1759 = vmatmul.mubr.f32.gmra.mxu0 %v1620
    %v1760 = vpop.f32.mrf.mxu0
    %v1761 = vadd.f32 0.0, %v1760
    %v1762 = vpop.f32.mrf.mxu0
    %v1763 = vadd.f32 0.0, %v1762
    %1764 = vmatprep.mubr.f32.mxu0 0.0
    %1765 = vmatmul.mubr.f32.gmra.mxu0 %v1623
    %v1766 = vpop.f32.mrf.mxu0
    %v1767 = vadd.f32 0.0, %v1766
    %v1768 = vpop.f32.mrf.mxu0
    %v1769 = vadd.f32 0.0, %v1768
    %1770 = vmatprep.mubr.f32.mxu0 0.0
    %1771 = vmatmul.mubr.f32.gmra.mxu0 %v1626
    %v1772 = vpop.f32.mrf.mxu0
    %v1773 = vadd.f32 0.0, %v1772
    %v1774 = vpop.f32.mrf.mxu0
    %v1775 = vadd.f32 0.0, %v1774
    %1776 = vmatprep.mubr.f32.mxu0 0.0
    %1777 = vmatmul.mubr.f32.gmra.mxu0 %v1629
    %v1778 = vpop.f32.mrf.mxu0
    %v1779 = vadd.f32 0.0, %v1778
    %v1780 = vpop.f32.mrf.mxu0
    %v1781 = vadd.f32 0.0, %v1780
    %1782 = vmatprep.mubr.f32.mxu0 0.0
    %1783 = vmatmul.mubr.f32.gmra.mxu0 %v1632
    %v1784 = vpop.f32.mrf.mxu0
    %v1785 = vadd.f32 0.0, %v1784
    %v1786 = vpop.f32.mrf.mxu0
    %v1787 = vadd.f32 0.0, %v1786
    %1788 = vmatprep.mubr.f32.mxu0 0.0
    %1789 = vmatmul.mubr.f32.gmra.mxu0 %v1635
    %v1790 = vpop.f32.mrf.mxu0
    %v1791 = vadd.f32 0.0, %v1790
    %v1792 = vpop.f32.mrf.mxu0
    %v1793 = vadd.f32 0.0, %v1792
    %1794 = vmatprep.mubr.f32.mxu0 0.0
    %1795 = vmatmul.mubr.f32.gmra.mxu0 %v1638
    %v1796 = vpop.f32.mrf.mxu0
    %v1797 = vadd.f32 0.0, %v1796
    %v1798 = vpop.f32.mrf.mxu0
    %v1799 = vadd.f32 0.0, %v1798
    %1800 = vdwg.mxu0
    %v1802 = vsel %vm1239, %v1576, 0
    %v1805 = vsel %vm1239, %v1577, 0
    %v1808 = vsel %vm1239, %v1578, 0
    %v1811 = vsel %vm1239, %v1579, 0
    %v1814 = vsel %vm1239, %v1580, 0
    %v1817 = vsel %vm1239, %v1581, 0
    %v1820 = vsel %vm1239, %v1582, 0
    %v1823 = vsel %vm1239, %v1583, 0
    %v1826 = vsel %vm1239, %v1584, 0
    %v1829 = vsel %vm1239, %v1585, 0
    %v1832 = vsel %vm1239, %v1586, 0
    %v1835 = vsel %vm1239, %v1587, 0
    %v1838 = vsel %vm1239, %v1588, 0
    %v1841 = vsel %vm1239, %v1589, 0
    %v1844 = vsel %vm1239, %v1590, 0
    %v1847 = vsel %vm1239, %v1591, 0
    %1849 = vmatprep.subr.mxu0 0.0
    %1850 = vmatpush1.msra.mxu0 0.0
    %1851 = vmatprep.subr.mxu0 0.0
    %1852 = vmatpush1.msra.mxu0 0.0
    %1853 = vmatprep.subr.mxu0 0.0
    %1854 = vmatpush1.msra.mxu0 0.0
    %1855 = vmatprep.subr.mxu0 0.0
    %1856 = vmatpush1.msra.mxu0 0.0
    %1857 = vmatprep.subr.mxu0 0.0
    %1858 = vmatpush1.msra.mxu0 0.0
    %1859 = vmatprep.subr.mxu0 0.0
    %1860 = vmatpush1.msra.mxu0 0.0
    %1861 = vmatprep.subr.mxu0 0.0
    %1862 = vmatpush1.msra.mxu0 0.0
    %1863 = vmatprep.subr.mxu0 0.0
    %1864 = vmatpush1.msra.mxu0 0.0
    %1865 = vmatprep.subr.mxu0 0.0
    %1866 = vmatpush1.msra.mxu0 0.0
    %1867 = vmatprep.subr.mxu0 0.0
    %1868 = vmatpush1.msra.mxu0 0.0
    %1869 = vmatprep.subr.mxu0 0.0
    %1870 = vmatpush1.msra.mxu0 0.0
    %1871 = vmatprep.subr.mxu0 0.0
    %1872 = vmatpush1.msra.mxu0 0.0
    %1873 = vmatprep.subr.mxu0 0.0
    %1874 = vmatpush1.msra.mxu0 0.0
    %1875 = vmatprep.subr.mxu0 0.0
    %1876 = vmatpush1.msra.mxu0 0.0
    %1877 = vmatprep.subr.mxu0 0.0
    %1878 = vmatpush1.msra.mxu0 0.0
    %1879 = vmatprep.subr.mxu0 %v655
    %1880 = vmatpush1.msra.mxu0 %v653
    %1881 = vmatprep.subr.mxu0 0.0
    %1882 = vmatpush2.msra.mxu0 0.0
    %1883 = vmatprep.subr.mxu0 0.0
    %1884 = vmatpush2.msra.mxu0 0.0
    %1885 = vmatprep.subr.mxu0 0.0
    %1886 = vmatpush2.msra.mxu0 0.0
    %1887 = vmatprep.subr.mxu0 0.0
    %1888 = vmatpush2.msra.mxu0 0.0
    %1889 = vmatprep.subr.mxu0 0.0
    %1890 = vmatpush2.msra.mxu0 0.0
    %1891 = vmatprep.subr.mxu0 0.0
    %1892 = vmatpush2.msra.mxu0 0.0
    %1893 = vmatprep.subr.mxu0 0.0
    %1894 = vmatpush2.msra.mxu0 0.0
    %1895 = vmatprep.subr.mxu0 0.0
    %1896 = vmatpush2.msra.mxu0 0.0
    %1897 = vmatprep.subr.mxu0 0.0
    %1898 = vmatpush2.msra.mxu0 0.0
    %1899 = vmatprep.subr.mxu0 0.0
    %1900 = vmatpush2.msra.mxu0 0.0
    %1901 = vmatprep.subr.mxu0 0.0
    %1902 = vmatpush2.msra.mxu0 0.0
    %1903 = vmatprep.subr.mxu0 0.0
    %1904 = vmatpush2.msra.mxu0 0.0
    %1905 = vmatprep.subr.mxu0 0.0
    %1906 = vmatpush2.msra.mxu0 0.0
    %1907 = vmatprep.subr.mxu0 0.0
    %1908 = vmatpush2.msra.mxu0 0.0
    %1909 = vmatprep.subr.mxu0 0.0
    %1910 = vmatpush2.msra.mxu0 0.0
    %1911 = vmatprep.subr.mxu0 0.0
    %1912 = vmatpush2.msra.mxu0 0.0
    %1913 = vmatprep.mubr.f32.mxu0 0.0
    %1914 = vmatmul.mubr.f32.gmra.mxu0 %v1802
    %v1915 = vpop.f32.mrf.mxu0
    %v1916 = vadd.f32 0.0, %v1915
    %v1917 = vpop.f32.mrf.mxu0
    %v1918 = vadd.f32 0.0, %v1917
    %1919 = vmatprep.mubr.f32.mxu0 0.0
    %1920 = vmatmul.mubr.f32.gmra.mxu0 %v1805
    %v1921 = vpop.f32.mrf.mxu0
    %v1922 = vadd.f32 0.0, %v1921
    %v1923 = vpop.f32.mrf.mxu0
    %v1924 = vadd.f32 0.0, %v1923
    %1925 = vmatprep.mubr.f32.mxu0 0.0
    %1926 = vmatmul.mubr.f32.gmra.mxu0 %v1808
    %v1927 = vpop.f32.mrf.mxu0
    %v1928 = vadd.f32 0.0, %v1927
    %v1929 = vpop.f32.mrf.mxu0
    %v1930 = vadd.f32 0.0, %v1929
    %1931 = vmatprep.mubr.f32.mxu0 0.0
    %1932 = vmatmul.mubr.f32.gmra.mxu0 %v1811
    %v1933 = vpop.f32.mrf.mxu0
    %v1934 = vadd.f32 0.0, %v1933
    %v1935 = vpop.f32.mrf.mxu0
    %v1936 = vadd.f32 0.0, %v1935
    %1937 = vmatprep.mubr.f32.mxu0 0.0
    %1938 = vmatmul.mubr.f32.gmra.mxu0 %v1814
    %v1939 = vpop.f32.mrf.mxu0
    %v1940 = vadd.f32 0.0, %v1939
    %v1941 = vpop.f32.mrf.mxu0
    %v1942 = vadd.f32 0.0, %v1941
    %1943 = vmatprep.mubr.f32.mxu0 0.0
    %1944 = vmatmul.mubr.f32.gmra.mxu0 %v1817
    %v1945 = vpop.f32.mrf.mxu0
    %v1946 = vadd.f32 0.0, %v1945
    %v1947 = vpop.f32.mrf.mxu0
    %v1948 = vadd.f32 0.0, %v1947
    %1949 = vmatprep.mubr.f32.mxu0 0.0
    %1950 = vmatmul.mubr.f32.gmra.mxu0 %v1820
    %v1951 = vpop.f32.mrf.mxu0
    %v1952 = vadd.f32 0.0, %v1951
    %v1953 = vpop.f32.mrf.mxu0
    %v1954 = vadd.f32 0.0, %v1953
    %1955 = vmatprep.mubr.f32.mxu0 0.0
    %1956 = vmatmul.mubr.f32.gmra.mxu0 %v1823
    %v1957 = vpop.f32.mrf.mxu0
    %v1958 = vadd.f32 0.0, %v1957
    %v1959 = vpop.f32.mrf.mxu0
    %v1960 = vadd.f32 0.0, %v1959
    %1961 = vmatprep.mubr.f32.mxu0 0.0
    %1962 = vmatmul.mubr.f32.gmra.mxu0 %v1826
    %v1963 = vpop.f32.mrf.mxu0
    %v1964 = vadd.f32 0.0, %v1963
    %v1965 = vpop.f32.mrf.mxu0
    %v1966 = vadd.f32 0.0, %v1965
    %1967 = vmatprep.mubr.f32.mxu0 0.0
    %1968 = vmatmul.mubr.f32.gmra.mxu0 %v1829
    %v1969 = vpop.f32.mrf.mxu0
    %v1970 = vadd.f32 0.0, %v1969
    %v1971 = vpop.f32.mrf.mxu0
    %v1972 = vadd.f32 0.0, %v1971
    %1973 = vmatprep.mubr.f32.mxu0 0.0
    %1974 = vmatmul.mubr.f32.gmra.mxu0 %v1832
    %v1975 = vpop.f32.mrf.mxu0
    %v1976 = vadd.f32 0.0, %v1975
    %v1977 = vpop.f32.mrf.mxu0
    %v1978 = vadd.f32 0.0, %v1977
    %1979 = vmatprep.mubr.f32.mxu0 0.0
    %1980 = vmatmul.mubr.f32.gmra.mxu0 %v1835
    %v1981 = vpop.f32.mrf.mxu0
    %v1982 = vadd.f32 0.0, %v1981
    %v1983 = vpop.f32.mrf.mxu0
    %v1984 = vadd.f32 0.0, %v1983
    %1985 = vmatprep.mubr.f32.mxu0 0.0
    %1986 = vmatmul.mubr.f32.gmra.mxu0 %v1838
    %v1987 = vpop.f32.mrf.mxu0
    %v1988 = vadd.f32 0.0, %v1987
    %v1989 = vpop.f32.mrf.mxu0
    %v1990 = vadd.f32 0.0, %v1989
    %1991 = vmatprep.mubr.f32.mxu0 0.0
    %1992 = vmatmul.mubr.f32.gmra.mxu0 %v1841
    %v1993 = vpop.f32.mrf.mxu0
    %v1994 = vadd.f32 0.0, %v1993
    %v1995 = vpop.f32.mrf.mxu0
    %v1996 = vadd.f32 0.0, %v1995
    %1997 = vmatprep.mubr.f32.mxu0 0.0
    %1998 = vmatmul.mubr.f32.gmra.mxu0 %v1844
    %v1999 = vpop.f32.mrf.mxu0
    %v2000 = vadd.f32 0.0, %v1999
    %v2001 = vpop.f32.mrf.mxu0
    %v2002 = vadd.f32 0.0, %v2001
    %2003 = vmatprep.mubr.f32.mxu0 0.0
    %2004 = vmatmul.mubr.f32.gmra.mxu0 %v1847
    %v2005 = vpop.f32.mrf.mxu0
    %v2006 = vadd.f32 0.0, %v2005
    %v2007 = vpop.f32.mrf.mxu0
    %v2008 = vadd.f32 0.0, %v2007
    %2009 = vdwg.mxu0
    %v2010 = vmul.f32 %v1707, %v853
    %v2011 = vmul.f32 %v1709, %v854
    %v2012 = vmul.f32 %v1713, %v855
    %v2013 = vmul.f32 %v1715, %v856
    %v2014 = vmul.f32 %v1719, %v857
    %v2015 = vmul.f32 %v1721, %v858
    %v2016 = vmul.f32 %v1725, %v859
    %v2017 = vmul.f32 %v1727, %v860
    %v2018 = vmul.f32 %v1731, %v861
    %v2019 = vmul.f32 %v1733, %v862
    %v2020 = vmul.f32 %v1737, %v863
    %v2021 = vmul.f32 %v1739, %v864
    %v2022 = vmul.f32 %v1743, %v865
    %v2023 = vmul.f32 %v1745, %v866
    %v2024 = vmul.f32 %v1749, %v867
    %v2025 = vmul.f32 %v1751, %v868
    %v2026 = vmul.f32 %v1755, %v869
    %v2027 = vmul.f32 %v1757, %v870
    %v2028 = vmul.f32 %v1761, %v871
    %v2029 = vmul.f32 %v1763, %v872
    %v2030 = vmul.f32 %v1767, %v873
    %v2031 = vmul.f32 %v1769, %v874
    %v2032 = vmul.f32 %v1773, %v875
    %v2033 = vmul.f32 %v1775, %v876
    %v2034 = vmul.f32 %v1779, %v877
    %v2035 = vmul.f32 %v1781, %v878
    %v2036 = vmul.f32 %v1785, %v879
    %v2037 = vmul.f32 %v1787, %v880
    %v2038 = vmul.f32 %v1791, %v881
    %v2039 = vmul.f32 %v1793, %v882
    %v2040 = vmul.f32 %v1797, %v883
    %v2041 = vmul.f32 %v1799, %v884
    %v2042 = vmul.f32 %v1916, %v853
    %v2043 = vmul.f32 %v1918, %v854
    %v2044 = vmul.f32 %v1922, %v855
    %v2045 = vmul.f32 %v1924, %v856
    %v2046 = vmul.f32 %v1928, %v857
    %v2047 = vmul.f32 %v1930, %v858
    %v2048 = vmul.f32 %v1934, %v859
    %v2049 = vmul.f32 %v1936, %v860
    %v2050 = vmul.f32 %v1940, %v861
    %v2051 = vmul.f32 %v1942, %v862
    %v2052 = vmul.f32 %v1946, %v863
    %v2053 = vmul.f32 %v1948, %v864
    %v2054 = vmul.f32 %v1952, %v865
    %v2055 = vmul.f32 %v1954, %v866
    %v2056 = vmul.f32 %v1958, %v867
    %v2057 = vmul.f32 %v1960, %v868
    %v2058 = vmul.f32 %v1964, %v869
    %v2059 = vmul.f32 %v1966, %v870
    %v2060 = vmul.f32 %v1970, %v871
    %v2061 = vmul.f32 %v1972, %v872
    %v2062 = vmul.f32 %v1976, %v873
    %v2063 = vmul.f32 %v1978, %v874
    %v2064 = vmul.f32 %v1982, %v875
    %v2065 = vmul.f32 %v1984, %v876
    %v2066 = vmul.f32 %v1988, %v877
    %v2067 = vmul.f32 %v1990, %v878
    %v2068 = vmul.f32 %v1994, %v879
    %v2069 = vmul.f32 %v1996, %v880
    %v2070 = vmul.f32 %v2000, %v881
    %v2071 = vmul.f32 %v2002, %v882
    %v2072 = vmul.f32 %v2006, %v883
    %v2073 = vmul.f32 %v2008, %v884
    %v2074 = vadd.f32 %v2010, %v2012
    %v2075 = vadd.f32 %v2074, %v2014
    %v2076 = vadd.f32 %v2075, %v2016
    %v2077 = vadd.f32 %v2076, %v2018
    %v2078 = vadd.f32 %v2077, %v2020
    %v2079 = vadd.f32 %v2078, %v2022
    %v2080 = vadd.f32 %v2079, %v2024
    %v2081 = vadd.f32 %v2080, %v2026
    %v2082 = vadd.f32 %v2081, %v2028
    %v2083 = vadd.f32 %v2082, %v2030
    %v2084 = vadd.f32 %v2083, %v2032
    %v2085 = vadd.f32 %v2084, %v2034
    %v2086 = vadd.f32 %v2085, %v2036
    %v2087 = vadd.f32 %v2086, %v2038
    %v2088 = vadd.f32 %v2087, %v2040
    %v2089 = vadd.f32 %v2011, %v2013
    %v2090 = vadd.f32 %v2089, %v2015
    %v2091 = vadd.f32 %v2090, %v2017
    %v2092 = vadd.f32 %v2091, %v2019
    %v2093 = vadd.f32 %v2092, %v2021
    %v2094 = vadd.f32 %v2093, %v2023
    %v2095 = vadd.f32 %v2094, %v2025
    %v2096 = vadd.f32 %v2095, %v2027
    %v2097 = vadd.f32 %v2096, %v2029
    %v2098 = vadd.f32 %v2097, %v2031
    %v2099 = vadd.f32 %v2098, %v2033
    %v2100 = vadd.f32 %v2099, %v2035
    %v2101 = vadd.f32 %v2100, %v2037
    %v2102 = vadd.f32 %v2101, %v2039
    %v2103 = vadd.f32 %v2102, %v2041
    %v2104 = vadd.f32 %v2042, %v2044
    %v2105 = vadd.f32 %v2104, %v2046
    %v2106 = vadd.f32 %v2105, %v2048
    %v2107 = vadd.f32 %v2106, %v2050
    %v2108 = vadd.f32 %v2107, %v2052
    %v2109 = vadd.f32 %v2108, %v2054
    %v2110 = vadd.f32 %v2109, %v2056
    %v2111 = vadd.f32 %v2110, %v2058
    %v2112 = vadd.f32 %v2111, %v2060
    %v2113 = vadd.f32 %v2112, %v2062
    %v2114 = vadd.f32 %v2113, %v2064
    %v2115 = vadd.f32 %v2114, %v2066
    %v2116 = vadd.f32 %v2115, %v2068
    %v2117 = vadd.f32 %v2116, %v2070
    %v2118 = vadd.f32 %v2117, %v2072
    %v2119 = vadd.f32 %v2043, %v2045
    %v2120 = vadd.f32 %v2119, %v2047
    %v2121 = vadd.f32 %v2120, %v2049
    %v2122 = vadd.f32 %v2121, %v2051
    %v2123 = vadd.f32 %v2122, %v2053
    %v2124 = vadd.f32 %v2123, %v2055
    %v2125 = vadd.f32 %v2124, %v2057
    %v2126 = vadd.f32 %v2125, %v2059
    %v2127 = vadd.f32 %v2126, %v2061
    %v2128 = vadd.f32 %v2127, %v2063
    %v2129 = vadd.f32 %v2128, %v2065
    %v2130 = vadd.f32 %v2129, %v2067
    %v2131 = vadd.f32 %v2130, %v2069
    %v2132 = vadd.f32 %v2131, %v2071
    %v2133 = vadd.f32 %v2132, %v2073
    %v2134 = vpack.c.bf16 %v2118, %v2088
    %v2135 = vpack.c.bf16 %v2133, %v2103
    %v2136 = vld [vmem:[%s3] sm:$0xff]
    %v2137 = vld [vmem:[%s3 + $0x8] sm:$0xff]
    %v2138 = vld [vmem:[%s3 + $0x10] sm:$0xff]
    %v2139 = vld [vmem:[%s3 + $0x18] sm:$0xff]
    %v2140 = vld [vmem:[%s3 + $0x20] sm:$0xff]
    %v2141 = vld [vmem:[%s3 + $0x28] sm:$0xff]
    %v2142 = vld [vmem:[%s3 + $0x30] sm:$0xff]
    %v2143 = vld [vmem:[%s3 + $0x38] sm:$0xff]
    %v2144 = vld [vmem:[%s3 + $0x40] sm:$0xff]
    %v2145 = vld [vmem:[%s3 + $0x48] sm:$0xff]
    %v2146 = vld [vmem:[%s3 + $0x50] sm:$0xff]
    %v2147 = vld [vmem:[%s3 + $0x58] sm:$0xff]
    %v2148 = vld [vmem:[%s3 + $0x60] sm:$0xff]
    %v2149 = vld [vmem:[%s3 + $0x68] sm:$0xff]
    %v2150 = vld [vmem:[%s3 + $0x70] sm:$0xff]
    %v2151 = vld [vmem:[%s3 + $0x78] sm:$0xff]
    %v2152 = vld [vmem:[%s3 + $0x80] sm:$0xff]
    %v2153 = vld [vmem:[%s3 + $0x88] sm:$0xff]
    %v2154 = vld [vmem:[%s3 + $0x90] sm:$0xff]
    %v2155 = vld [vmem:[%s3 + $0x98] sm:$0xff]
    %v2156 = vld [vmem:[%s3 + $0xa0] sm:$0xff]
    %v2157 = vld [vmem:[%s3 + $0xa8] sm:$0xff]
    %v2158 = vld [vmem:[%s3 + $0xb0] sm:$0xff]
    %v2159 = vld [vmem:[%s3 + $0xb8] sm:$0xff]
    %v2160 = vld [vmem:[%s3 + $0xc0] sm:$0xff]
    %v2161 = vld [vmem:[%s3 + $0xc8] sm:$0xff]
    %v2162 = vld [vmem:[%s3 + $0xd0] sm:$0xff]
    %v2163 = vld [vmem:[%s3 + $0xd8] sm:$0xff]
    %v2164 = vld [vmem:[%s3 + $0xe0] sm:$0xff]
    %v2165 = vld [vmem:[%s3 + $0xe8] sm:$0xff]
    %v2166 = vld [vmem:[%s3 + $0xf0] sm:$0xff]
    %v2167 = vld [vmem:[%s3 + $0xf8] sm:$0xff]
    %v2168 = vld [vmem:[%s4] sm:$0x3]
    %v2170 = vlaneseq
    %v2171 = vshrl.u32 %v2170, 7
    %v2172 = vsub.s32 0, %v2171
    %v2173 = vrot.slane %v2168, %v2172
    %v2174 = vlaneseq
    %v2175 = vshrl.u32 %v2174, 7
    %v2176 = vsub.s32 1, %v2175
    %v2177 = vrot.slane %v2168, %v2176
    %v2212 = vunpack.c.l.b16 %v2136
    %v2213 = vunpack.c.h.b16 %v2136
    %v2214 = vunpack.c.l.b16 %v2137
    %v2215 = vunpack.c.h.b16 %v2137
    %v2216 = vunpack.c.l.b16 %v2138
    %v2217 = vunpack.c.h.b16 %v2138
    %v2218 = vunpack.c.l.b16 %v2139
    %v2219 = vunpack.c.h.b16 %v2139
    %v2220 = vunpack.c.l.b16 %v2140
    %v2221 = vunpack.c.h.b16 %v2140
    %v2222 = vunpack.c.l.b16 %v2141
    %v2223 = vunpack.c.h.b16 %v2141
    %v2224 = vunpack.c.l.b16 %v2142
    %v2225 = vunpack.c.h.b16 %v2142
    %v2226 = vunpack.c.l.b16 %v2143
    %v2227 = vunpack.c.h.b16 %v2143
    %v2228 = vunpack.c.l.b16 %v2144
    %v2229 = vunpack.c.h.b16 %v2144
    %v2230 = vunpack.c.l.b16 %v2145
    %v2231 = vunpack.c.h.b16 %v2145
    %v2232 = vunpack.c.l.b16 %v2146
    %v2233 = vunpack.c.h.b16 %v2146
    %v2234 = vunpack.c.l.b16 %v2147
    %v2235 = vunpack.c.h.b16 %v2147
    %v2236 = vunpack.c.l.b16 %v2148
    %v2237 = vunpack.c.h.b16 %v2148
    %v2238 = vunpack.c.l.b16 %v2149
    %v2239 = vunpack.c.h.b16 %v2149
    %v2240 = vunpack.c.l.b16 %v2150
    %v2241 = vunpack.c.h.b16 %v2150
    %v2242 = vunpack.c.l.b16 %v2151
    %v2243 = vunpack.c.h.b16 %v2151
    %v2244 = vunpack.c.l.b16 %v2152
    %v2245 = vunpack.c.h.b16 %v2152
    %v2246 = vunpack.c.l.b16 %v2153
    %v2247 = vunpack.c.h.b16 %v2153
    %v2248 = vunpack.c.l.b16 %v2154
    %v2249 = vunpack.c.h.b16 %v2154
    %v2250 = vunpack.c.l.b16 %v2155
    %v2251 = vunpack.c.h.b16 %v2155
    %v2252 = vunpack.c.l.b16 %v2156
    %v2253 = vunpack.c.h.b16 %v2156
    %v2254 = vunpack.c.l.b16 %v2157
    %v2255 = vunpack.c.h.b16 %v2157
    %v2256 = vunpack.c.l.b16 %v2158
    %v2257 = vunpack.c.h.b16 %v2158
    %v2258 = vunpack.c.l.b16 %v2159
    %v2259 = vunpack.c.h.b16 %v2159
    %v2260 = vunpack.c.l.b16 %v2160
    %v2261 = vunpack.c.h.b16 %v2160
    %v2262 = vunpack.c.l.b16 %v2161
    %v2263 = vunpack.c.h.b16 %v2161
    %v2264 = vunpack.c.l.b16 %v2162
    %v2265 = vunpack.c.h.b16 %v2162
    %v2266 = vunpack.c.l.b16 %v2163
    %v2267 = vunpack.c.h.b16 %v2163
    %v2268 = vunpack.c.l.b16 %v2164
    %v2269 = vunpack.c.h.b16 %v2164
    %v2270 = vunpack.c.l.b16 %v2165
    %v2271 = vunpack.c.h.b16 %v2165
    %v2272 = vunpack.c.l.b16 %v2166
    %v2273 = vunpack.c.h.b16 %v2166
    %v2274 = vunpack.c.l.b16 %v2167
    %v2275 = vunpack.c.h.b16 %v2167
    %v2276 = vpack.c.b16 %v2214, %v2212
    %v2277 = vpack.c.b16 %v2215, %v2213
    %v2278 = vpack.c.b16 %v2218, %v2216
    %v2279 = vpack.c.b16 %v2219, %v2217
    %v2280 = vpack.c.b16 %v2222, %v2220
    %v2281 = vpack.c.b16 %v2223, %v2221
    %v2282 = vpack.c.b16 %v2226, %v2224
    %v2283 = vpack.c.b16 %v2227, %v2225
    %v2284 = vpack.c.b16 %v2230, %v2228
    %v2285 = vpack.c.b16 %v2231, %v2229
    %v2286 = vpack.c.b16 %v2234, %v2232
    %v2287 = vpack.c.b16 %v2235, %v2233
    %v2288 = vpack.c.b16 %v2238, %v2236
    %v2289 = vpack.c.b16 %v2239, %v2237
    %v2290 = vpack.c.b16 %v2242, %v2240
    %v2291 = vpack.c.b16 %v2243, %v2241
    %v2292 = vpack.c.b16 %v2246, %v2244
    %v2293 = vpack.c.b16 %v2247, %v2245
    %v2294 = vpack.c.b16 %v2250, %v2248
    %v2295 = vpack.c.b16 %v2251, %v2249
    %v2296 = vpack.c.b16 %v2254, %v2252
    %v2297 = vpack.c.b16 %v2255, %v2253
    %v2298 = vpack.c.b16 %v2258, %v2256
    %v2299 = vpack.c.b16 %v2259, %v2257
    %v2300 = vpack.c.b16 %v2262, %v2260
    %v2301 = vpack.c.b16 %v2263, %v2261
    %v2302 = vpack.c.b16 %v2266, %v2264
    %v2303 = vpack.c.b16 %v2267, %v2265
    %v2304 = vpack.c.b16 %v2270, %v2268
    %v2305 = vpack.c.b16 %v2271, %v2269
    %v2306 = vpack.c.b16 %v2274, %v2272
    %v2307 = vpack.c.b16 %v2275, %v2273
    %2340 = vmatprep.subr.bf16.mxu0 %v2291
    %2341 = vmatpush1.bf16.msra.mxu0 %v2290
    %2342 = vmatprep.subr.bf16.mxu0 %v2289
    %2343 = vmatpush1.bf16.msra.mxu0 %v2288
    %2344 = vmatprep.subr.bf16.mxu0 %v2287
    %2345 = vmatpush1.bf16.msra.mxu0 %v2286
    %2346 = vmatprep.subr.bf16.mxu0 %v2285
    %2347 = vmatpush1.bf16.msra.mxu0 %v2284
    %2348 = vmatprep.subr.bf16.mxu0 %v2283
    %2349 = vmatpush1.bf16.msra.mxu0 %v2282
    %2350 = vmatprep.subr.bf16.mxu0 %v2281
    %2351 = vmatpush1.bf16.msra.mxu0 %v2280
    %2352 = vmatprep.subr.bf16.mxu0 %v2279
    %2353 = vmatpush1.bf16.msra.mxu0 %v2278
    %2354 = vmatprep.subr.bf16.mxu0 %v2277
    %2355 = vmatpush1.bf16.msra.mxu0 %v2276
    %2356 = vmatprep.subr.bf16.mxu0 %v2307
    %2357 = vmatpush2.bf16.msra.mxu0 %v2306
    %2358 = vmatprep.subr.bf16.mxu0 %v2305
    %2359 = vmatpush2.bf16.msra.mxu0 %v2304
    %2360 = vmatprep.subr.bf16.mxu0 %v2303
    %2361 = vmatpush2.bf16.msra.mxu0 %v2302
    %2362 = vmatprep.subr.bf16.mxu0 %v2301
    %2363 = vmatpush2.bf16.msra.mxu0 %v2300
    %2364 = vmatprep.subr.bf16.mxu0 %v2299
    %2365 = vmatpush2.bf16.msra.mxu0 %v2298
    %2366 = vmatprep.subr.bf16.mxu0 %v2297
    %2367 = vmatpush2.bf16.msra.mxu0 %v2296
    %2368 = vmatprep.subr.bf16.mxu0 %v2295
    %2369 = vmatpush2.bf16.msra.mxu0 %v2294
    %2370 = vmatprep.subr.bf16.mxu0 %v2293
    %2371 = vmatpush2.bf16.msra.mxu0 %v2292
    %2372 = vmatprep.mubr.bf16.mxu0 %v2135
    %2373 = vmatmul.mubr.bf16.gmra.mxu0 %v2134
    %v2374 = vpop.f32.mrf.mxu0
    %v2375 = vadd.f32 %v2173, %v2374
    %v2376 = vpop.f32.mrf.mxu0
    %v2377 = vadd.f32 %v2177, %v2376
    %v2378 = vpop.f32.mrf.mxu0
    %v2379 = vadd.f32 %v2173, %v2378
    %v2380 = vpop.f32.mrf.mxu0
    %v2381 = vadd.f32 %v2177, %v2380
    %2382 = vdwg.mxu0
    %2383 = vst [vmem:[#allocation5] sm:$0xff] %v2375
    %2384 = vst.msk [vmem:[#allocation5 + $0x8] sm:$0xff] %vm524, %v2377
    %2385 = vst [vmem:[#allocation5 + $0x10] sm:$0xff] %v2379
    %2386 = vst.msk [vmem:[#allocation5 + $0x18] sm:$0xff] %vm524, %v2381
    %v2387 = vld [vmem:[%s5] sm:$0xff]
    %v2388 = vld [vmem:[%s5 + $0x8] sm:$0xff]
    %v2389 = vpack.c.bf16 %v2388, %v2387
    %v2390 = vld [vmem:[%s6] sm:$0xff]
    %v2391 = vld [vmem:[%s6 + $0x8] sm:$0xf]
    %v2392 = vld [vmem:[%s6 + $0xc] sm:$0xff]
    %v2393 = vld [vmem:[%s6 + $0x14] sm:$0xf]
    %v2394 = vld [vmem:[%s6 + $0x18] sm:$0xff]
    %v2395 = vld [vmem:[%s6 + $0x20] sm:$0xf]
    %v2396 = vld [vmem:[%s6 + $0x24] sm:$0xff]
    %v2397 = vld [vmem:[%s6 + $0x2c] sm:$0xf]
    %v2398 = vld [vmem:[%s6 + $0x30] sm:$0xff]
    %v2399 = vld [vmem:[%s6 + $0x38] sm:$0xf]
    %v2400 = vld [vmem:[%s6 + $0x3c] sm:$0xff]
    %v2401 = vld [vmem:[%s6 + $0x44] sm:$0xf]
    %v2402 = vld [vmem:[%s6 + $0x48] sm:$0xff]
    %v2403 = vld [vmem:[%s6 + $0x50] sm:$0xf]
    %v2404 = vld [vmem:[%s6 + $0x54] sm:$0xff]
    %v2405 = vld [vmem:[%s6 + $0x5c] sm:$0xf]
    %v2406 = vld [vmem:[%s6 + $0x60] sm:$0x11]
    %v2407 = vld [vmem:[%s6 + $0x68] sm:$0x1]
    %v2408 = vld [vmem:[%s7] sm:$0x7]
    %v2410 = vlaneseq
    %v2411 = vshrl.u32 %v2410, 7
    %v2412 = vsub.s32 0, %v2411
    %v2413 = vrot.slane %v2408, %v2412
    %v2414 = vlaneseq
    %v2415 = vshrl.u32 %v2414, 7
    %v2416 = vsub.s32 1, %v2415
    %v2417 = vrot.slane %v2408, %v2416
    %v2418 = vlaneseq
    %v2419 = vshrl.u32 %v2418, 7
    %v2420 = vsub.s32 2, %v2419
    %v2421 = vrot.slane %v2408, %v2420
    %v2443 = vunpack.c.l.b16 %v2390
    %v2444 = vunpack.c.h.b16 %v2390
    %v2445 = vunpack.c.l.b16 %v2391
    %v2446 = vunpack.c.l.b16 %v2392
    %v2447 = vunpack.c.h.b16 %v2392
    %v2448 = vunpack.c.l.b16 %v2393
    %v2449 = vunpack.c.l.b16 %v2394
    %v2450 = vunpack.c.h.b16 %v2394
    %v2451 = vunpack.c.l.b16 %v2395
    %v2452 = vunpack.c.l.b16 %v2396
    %v2453 = vunpack.c.h.b16 %v2396
    %v2454 = vunpack.c.l.b16 %v2397
    %v2455 = vunpack.c.l.b16 %v2398
    %v2456 = vunpack.c.h.b16 %v2398
    %v2457 = vunpack.c.l.b16 %v2399
    %v2458 = vunpack.c.l.b16 %v2400
    %v2459 = vunpack.c.h.b16 %v2400
    %v2460 = vunpack.c.l.b16 %v2401
    %v2461 = vunpack.c.l.b16 %v2402
    %v2462 = vunpack.c.h.b16 %v2402
    %v2463 = vunpack.c.l.b16 %v2403
    %v2464 = vunpack.c.l.b16 %v2404
    %v2465 = vunpack.c.h.b16 %v2404
    %v2466 = vunpack.c.l.b16 %v2405
    %v2467 = vunpack.c.l.b16 %v2406
    %v2468 = vunpack.c.h.b16 %v2406
    %v2469 = vunpack.c.l.b16 %v2407
    %v2470 = vpack.c.b16 %v2446, %v2443
    %v2471 = vpack.c.b16 %v2447, %v2444
    %v2472 = vpack.c.b16 %v2448, %v2445
    %v2473 = vpack.c.b16 %v2452, %v2449
    %v2474 = vpack.c.b16 %v2453, %v2450
    %v2475 = vpack.c.b16 %v2454, %v2451
    %v2476 = vpack.c.b16 %v2458, %v2455
    %v2477 = vpack.c.b16 %v2459, %v2456
    %v2478 = vpack.c.b16 %v2460, %v2457
    %v2479 = vpack.c.b16 %v2464, %v2461
    %v2480 = vpack.c.b16 %v2465, %v2462
    %v2481 = vpack.c.b16 %v2466, %v2463
    %v2482 = vpack.c.b16 %v2467, %v2467
    %v2483 = vpack.c.b16 %v2468, %v2468
    %v2484 = vpack.c.b16 %v2469, %v2469
    %vm2497 = vcmask 539648
    %v2499 = vsel %vm2497, %v2389, 0
    %vm2501 = vcmask 1040384
    %v2503 = vsel %vm2501, %v2482, 0
    %v2506 = vsel %vm2501, %v2483, 0
    %v2509 = vsel %vm2501, %v2484, 0
    %2511 = vmatprep.subr.bf16.mxu0 0
    %2512 = vmatpush1.bf16.msra.mxu0 0
    %2513 = vmatprep.subr.bf16.mxu0 0
    %2514 = vmatpush1.bf16.msra.mxu0 0
    %2515 = vmatprep.subr.bf16.mxu0 0
    %2516 = vmatpush1.bf16.msra.mxu0 0
    %2517 = vmatprep.subr.bf16.mxu0 %v2506
    %2518 = vmatpush1.bf16.msra.mxu0 %v2503
    %2519 = vmatprep.subr.bf16.mxu0 %v2480
    %2520 = vmatpush1.bf16.msra.mxu0 %v2479
    %2521 = vmatprep.subr.bf16.mxu0 %v2477
    %2522 = vmatpush1.bf16.msra.mxu0 %v2476
    %2523 = vmatprep.subr.bf16.mxu0 %v2474
    %2524 = vmatpush1.bf16.msra.mxu0 %v2473
    %2525 = vmatprep.subr.bf16.mxu0 %v2471
    %2526 = vmatpush1.bf16.msra.mxu0 %v2470
    %2527 = vmatprep.subr.bf16.mxu0 0
    %2528 = vmatpush2.bf16.msra.mxu0 0
    %2529 = vmatprep.subr.bf16.mxu0 0
    %2530 = vmatpush2.bf16.msra.mxu0 0
    %2531 = vmatprep.subr.bf16.mxu0 0
    %2532 = vmatpush2.bf16.msra.mxu0 0
    %2533 = vmatprep.subr.bf16.mxu0 0
    %2534 = vmatpush2.bf16.msra.mxu0 0
    %2535 = vmatprep.subr.bf16.mxu0 0
    %2536 = vmatpush2.bf16.msra.mxu0 0
    %2537 = vmatprep.subr.bf16.mxu0 0
    %2538 = vmatpush2.bf16.msra.mxu0 0
    %2539 = vmatprep.subr.bf16.mxu0 0
    %2540 = vmatpush2.bf16.msra.mxu0 0
    %2541 = vmatprep.subr.bf16.mxu0 0
    %2542 = vmatpush2.bf16.msra.mxu0 0
    %2543 = vmatprep.mubr.bf16.mxu0 0
    %2544 = vmatmul.mubr.bf16.gmra.mxu0 %v2499
    %v2545 = vpop.f32.mrf.mxu0
    %v2546 = vadd.f32 %v2413, %v2545
    %v2547 = vpop.f32.mrf.mxu0
    %v2548 = vadd.f32 %v2417, %v2547
    %v2549 = vpop.f32.mrf.mxu0
    %v2550 = vadd.f32 %v2413, %v2549
    %v2551 = vpop.f32.mrf.mxu0
    %v2552 = vadd.f32 %v2417, %v2551
    %2553 = vdwg.mxu0
    %2554 = vmatprep.subr.bf16.mxu0 0
    %2555 = vmatpush1.bf16.msra.mxu0 0
    %2556 = vmatprep.subr.bf16.mxu0 0
    %2557 = vmatpush1.bf16.msra.mxu0 0
    %2558 = vmatprep.subr.bf16.mxu0 0
    %2559 = vmatpush1.bf16.msra.mxu0 0
    %2560 = vmatprep.subr.bf16.mxu0 0
    %2561 = vmatpush1.bf16.msra.mxu0 %v2509
    %2562 = vmatprep.subr.bf16.mxu0 0
    %2563 = vmatpush1.bf16.msra.mxu0 %v2481
    %2564 = vmatprep.subr.bf16.mxu0 0
    %2565 = vmatpush1.bf16.msra.mxu0 %v2478
    %2566 = vmatprep.subr.bf16.mxu0 0
    %2567 = vmatpush1.bf16.msra.mxu0 %v2475
    %2568 = vmatprep.subr.bf16.mxu0 0
    %2569 = vmatpush1.bf16.msra.mxu0 %v2472
    %2570 = vmatprep.subr.bf16.mxu0 0
    %2571 = vmatpush2.bf16.msra.mxu0 0
    %2572 = vmatprep.subr.bf16.mxu0 0
    %2573 = vmatpush2.bf16.msra.mxu0 0
    %2574 = vmatprep.subr.bf16.mxu0 0
    %2575 = vmatpush2.bf16.msra.mxu0 0
    %2576 = vmatprep.subr.bf16.mxu0 0
    %2577 = vmatpush2.bf16.msra.mxu0 0
    %2578 = vmatprep.subr.bf16.mxu0 0
    %2579 = vmatpush2.bf16.msra.mxu0 0
    %2580 = vmatprep.subr.bf16.mxu0 0
    %2581 = vmatpush2.bf16.msra.mxu0 0
    %2582 = vmatprep.subr.bf16.mxu0 0
    %2583 = vmatpush2.bf16.msra.mxu0 0
    %2584 = vmatprep.subr.bf16.mxu0 0
    %2585 = vmatpush2.bf16.msra.mxu0 0
    %2586 = vmatprep.mubr.bf16.mxu0 0
    %2587 = vmatmul.mubr.bf16.gmra.mxu0 %v2499
    %v2588 = vpop.f32.mrf.mxu0
    %v2589 = vadd.f32 %v2421, %v2588
    %v2590 = vpop.f32.mrf.mxu0
    %v2591 = vpop.f32.mrf.mxu0
    %v2592 = vadd.f32 %v2421, %v2591
    %v2593 = vpop.f32.mrf.mxu0
    %2594 = vdwg.mxu0
    %v2595 = vmul.u32 %v677, 6
    %v2596 = vmul.u32 %v678, 6
    %v2597 = vmul.u32 %v679, 6
    %v2598 = vmul.u32 %v680, 6
    %v2599 = vmul.u32 %v681, 6
    %v2600 = vmul.u32 %v682, 6
    %v2601 = vmul.u32 %v683, 6
    %v2602 = vmul.u32 %v684, 6
    %v2603 = vmul.u32 %v685, 6
    %v2604 = vmul.u32 %v686, 6
    %v2605 = vmul.u32 %v687, 6
    %vm2606 = vcmp.ge.s32.totalorder %v675, %v2595
    %vm2607 = vcmp.ge.s32.totalorder %v675, %v2596
    %vm2608 = vcmp.ge.s32.totalorder %v675, %v2597
    %vm2609 = vcmp.ge.s32.totalorder %v675, %v2598
    %vm2610 = vcmp.ge.s32.totalorder %v675, %v2599
    %vm2611 = vcmp.ge.s32.totalorder %v675, %v2600
    %vm2612 = vcmp.ge.s32.totalorder %v675, %v2601
    %vm2613 = vcmp.ge.s32.totalorder %v675, %v2602
    %vm2614 = vcmp.ge.s32.totalorder %v675, %v2603
    %vm2615 = vcmp.ge.s32.totalorder %v675, %v2604
    %vm2616 = vcmp.ge.s32.totalorder %v675, %v2605
    %v2617 = vadd.s32 %v2595, 6
    %v2618 = vadd.s32 %v2596, 6
    %v2619 = vadd.s32 %v2597, 6
    %v2620 = vadd.s32 %v2598, 6
    %v2621 = vadd.s32 %v2599, 6
    %v2622 = vadd.s32 %v2600, 6
    %v2623 = vadd.s32 %v2601, 6
    %v2624 = vadd.s32 %v2602, 6
    %v2625 = vadd.s32 %v2603, 6
    %v2626 = vadd.s32 %v2604, 6
    %v2627 = vadd.s32 %v2605, 6
    %vm2628 = vcmp.lt.s32.totalorder %v675, %v2617
    %vm2629 = vcmp.lt.s32.totalorder %v675, %v2618
    %vm2630 = vcmp.lt.s32.totalorder %v675, %v2619
    %vm2631 = vcmp.lt.s32.totalorder %v675, %v2620
    %vm2632 = vcmp.lt.s32.totalorder %v675, %v2621
    %vm2633 = vcmp.lt.s32.totalorder %v675, %v2622
    %vm2634 = vcmp.lt.s32.totalorder %v675, %v2623
    %vm2635 = vcmp.lt.s32.totalorder %v675, %v2624
    %vm2636 = vcmp.lt.s32.totalorder %v675, %v2625
    %vm2637 = vcmp.lt.s32.totalorder %v675, %v2626
    %vm2638 = vcmp.lt.s32.totalorder %v675, %v2627
    %vm2639 = vmand %vm2606, %vm2628
    %vm2640 = vmand %vm2607, %vm2629
    %vm2641 = vmand %vm2608, %vm2630
    %vm2642 = vmand %vm2609, %vm2631
    %vm2643 = vmand %vm2610, %vm2632
    %vm2644 = vmand %vm2611, %vm2633
    %vm2645 = vmand %vm2612, %vm2634
    %vm2646 = vmand %vm2613, %vm2635
    %vm2647 = vmand %vm2614, %vm2636
    %vm2648 = vmand %vm2615, %vm2637
    %vm2649 = vmand %vm2616, %vm2638
    %v2650 = vsel %vm2639, 1, 0
    %v2651 = vsel %vm2640, 1, 0
    %v2652 = vsel %vm2641, 1, 0
    %v2653 = vsel %vm2642, 1, 0
    %v2654 = vsel %vm2643, 1, 0
    %v2655 = vsel %vm2644, 1, 0
    %v2656 = vsel %vm2645, 1, 0
    %v2657 = vsel %vm2646, 1, 0
    %v2658 = vsel %vm2647, 1, 0
    %v2659 = vsel %vm2648, 1, 0
    %v2660 = vsel %vm2649, 1, 0
    %v2661 = vcvt.s32.f32 %v2650
    %v2662 = vcvt.s32.f32 %v2651
    %v2663 = vcvt.s32.f32 %v2652
    %v2664 = vcvt.s32.f32 %v2653
    %v2665 = vcvt.s32.f32 %v2654
    %v2666 = vcvt.s32.f32 %v2655
    %v2667 = vcvt.s32.f32 %v2656
    %v2668 = vcvt.s32.f32 %v2657
    %v2669 = vcvt.s32.f32 %v2658
    %v2670 = vcvt.s32.f32 %v2659
    %v2671 = vcvt.s32.f32 %v2660
    %v2672 = vmul.f32 %v2546, %v2661
    %v2673 = vmul.f32 %v2546, %v2662
    %v2674 = vmul.f32 %v2546, %v2663
    %v2675 = vmul.f32 %v2546, %v2664
    %v2676 = vmul.f32 %v2546, %v2665
    %v2677 = vmul.f32 %v2546, %v2666
    %v2678 = vmul.f32 %v2546, %v2667
    %v2679 = vmul.f32 %v2546, %v2668
    %v2680 = vmul.f32 %v2546, %v2669
    %v2681 = vmul.f32 %v2546, %v2670
    %v2682 = vmul.f32 %v2546, %v2671
    %v2683 = vmul.f32 %v2550, %v2661
    %v2684 = vmul.f32 %v2550, %v2662
    %v2685 = vmul.f32 %v2550, %v2663
    %v2686 = vmul.f32 %v2550, %v2664
    %v2687 = vmul.f32 %v2550, %v2665
    %v2688 = vmul.f32 %v2550, %v2666
    %v2689 = vmul.f32 %v2550, %v2667
    %v2690 = vmul.f32 %v2550, %v2668
    %v2691 = vmul.f32 %v2550, %v2669
    %v2692 = vmul.f32 %v2550, %v2670
    %v2693 = vmul.f32 %v2550, %v2671
    %2694 = vmatprep.subr.mxu0 0.0
    %2695 = vmatpush1.xpose.msra.mxu0 0.0
    %2696 = vmatprep.subr.mxu0 0.0
    %2697 = vmatpush1.xpose.msra.mxu0 0.0
    %2698 = vmatprep.subr.mxu0 0.0
    %2699 = vmatpush1.xpose.msra.mxu0 0.0
    %2700 = vmatprep.subr.mxu0 0.0
    %2701 = vmatpush1.xpose.msra.mxu0 0.0
    %2702 = vmatprep.subr.mxu0 0.0
    %2703 = vmatpush1.xpose.msra.mxu0 0.0
    %2704 = vmatprep.subr.mxu0 0.0
    %2705 = vmatpush1.xpose.msra.mxu0 0.0
    %2706 = vmatprep.subr.mxu0 0.0
    %2707 = vmatpush1.xpose.msra.mxu0 0.0
    %2708 = vmatprep.subr.mxu0 0.0
    %2709 = vmatpush1.xpose.msra.mxu0 0.0
    %2710 = vmatprep.subr.mxu0 0.0
    %2711 = vmatpush1.xpose.msra.mxu0 0.0
    %2712 = vmatprep.subr.mxu0 0.0
    %2713 = vmatpush1.xpose.msra.mxu0 0.0
    %2714 = vmatprep.subr.mxu0 0.0
    %2715 = vmatpush1.xpose.msra.mxu0 0.0
    %2716 = vmatprep.subr.mxu0 0.0
    %2717 = vmatpush1.xpose.msra.mxu0 0.0
    %2718 = vmatprep.subr.mxu0 0.0
    %2719 = vmatpush1.xpose.msra.mxu0 0.0
    %2720 = vmatprep.subr.mxu0 0.0
    %2721 = vmatpush1.xpose.msra.mxu0 0.0
    %2722 = vmatprep.subr.mxu0 0.0
    %2723 = vmatpush1.xpose.msra.mxu0 0.0
    %2724 = vmatprep.subr.mxu0 0.0
    %2725 = vmatpush1.xpose.msra.mxu0 %v2548
    %2726 = vmatprep.subr.mxu0 0.0
    %2727 = vmatpush2.xpose.msra.mxu0 0.0
    %2728 = vmatprep.subr.mxu0 0.0
    %2729 = vmatpush2.xpose.msra.mxu0 0.0
    %2730 = vmatprep.subr.mxu0 0.0
    %2731 = vmatpush2.xpose.msra.mxu0 0.0
    %2732 = vmatprep.subr.mxu0 0.0
    %2733 = vmatpush2.xpose.msra.mxu0 0.0
    %2734 = vmatprep.subr.mxu0 0.0
    %2735 = vmatpush2.xpose.msra.mxu0 0.0
    %2736 = vmatprep.subr.mxu0 0.0
    %2737 = vmatpush2.xpose.msra.mxu0 0.0
    %2738 = vmatprep.subr.mxu0 0.0
    %2739 = vmatpush2.xpose.msra.mxu0 0.0
    %2740 = vmatprep.subr.mxu0 0.0
    %2741 = vmatpush2.xpose.msra.mxu0 0.0
    %2742 = vmatprep.subr.mxu0 0.0
    %2743 = vmatpush2.xpose.msra.mxu0 0.0
    %2744 = vmatprep.subr.mxu0 0.0
    %2745 = vmatpush2.xpose.msra.mxu0 0.0
    %2746 = vmatprep.subr.mxu0 0.0
    %2747 = vmatpush2.xpose.msra.mxu0 0.0
    %2748 = vmatprep.subr.mxu0 0.0
    %2749 = vmatpush2.xpose.msra.mxu0 0.0
    %2750 = vmatprep.subr.mxu0 0.0
    %2751 = vmatpush2.xpose.msra.mxu0 0.0
    %2752 = vmatprep.subr.mxu0 0.0
    %2753 = vmatpush2.xpose.msra.mxu0 0.0
    %2754 = vmatprep.subr.mxu0 0.0
    %2755 = vmatpush2.xpose.msra.mxu0 0.0
    %2756 = vmatprep.subr.mxu0 0.0
    %2757 = vmatpush2.xpose.msra.mxu0 0.0
    %2758 = vmatprep.mubr.f32.mxu0 0.0
    %2759 = vmatmul.mubr.f32.gmra.mxu0 %v2672
    %v2760 = vpop.f32.mrf.mxu0
    %v2761 = vadd.f32 0.0, %v2760
    %v2762 = vpop.f32.mrf.mxu0
    %2763 = vmatprep.mubr.f32.mxu0 0.0
    %2764 = vmatmul.mubr.f32.gmra.mxu0 %v2673
    %v2765 = vpop.f32.mrf.mxu0
    %v2766 = vadd.f32 0.0, %v2765
    %v2767 = vpop.f32.mrf.mxu0
    %2768 = vmatprep.mubr.f32.mxu0 0.0
    %2769 = vmatmul.mubr.f32.gmra.mxu0 %v2674
    %v2770 = vpop.f32.mrf.mxu0
    %v2771 = vadd.f32 0.0, %v2770
    %v2772 = vpop.f32.mrf.mxu0
    %2773 = vmatprep.mubr.f32.mxu0 0.0
    %2774 = vmatmul.mubr.f32.gmra.mxu0 %v2675
    %v2775 = vpop.f32.mrf.mxu0
    %v2776 = vadd.f32 0.0, %v2775
    %v2777 = vpop.f32.mrf.mxu0
    %2778 = vmatprep.mubr.f32.mxu0 0.0
    %2779 = vmatmul.mubr.f32.gmra.mxu0 %v2676
    %v2780 = vpop.f32.mrf.mxu0
    %v2781 = vadd.f32 0.0, %v2780
    %v2782 = vpop.f32.mrf.mxu0
    %2783 = vmatprep.mubr.f32.mxu0 0.0
    %2784 = vmatmul.mubr.f32.gmra.mxu0 %v2677
    %v2785 = vpop.f32.mrf.mxu0
    %v2786 = vadd.f32 0.0, %v2785
    %v2787 = vpop.f32.mrf.mxu0
    %2788 = vmatprep.mubr.f32.mxu0 0.0
    %2789 = vmatmul.mubr.f32.gmra.mxu0 %v2678
    %v2790 = vpop.f32.mrf.mxu0
    %v2791 = vadd.f32 0.0, %v2790
    %v2792 = vpop.f32.mrf.mxu0
    %2793 = vmatprep.mubr.f32.mxu0 0.0
    %2794 = vmatmul.mubr.f32.gmra.mxu0 %v2679
    %v2795 = vpop.f32.mrf.mxu0
    %v2796 = vadd.f32 0.0, %v2795
    %v2797 = vpop.f32.mrf.mxu0
    %2798 = vmatprep.mubr.f32.mxu0 0.0
    %2799 = vmatmul.mubr.f32.gmra.mxu0 %v2680
    %v2800 = vpop.f32.mrf.mxu0
    %v2801 = vadd.f32 0.0, %v2800
    %v2802 = vpop.f32.mrf.mxu0
    %2803 = vmatprep.mubr.f32.mxu0 0.0
    %2804 = vmatmul.mubr.f32.gmra.mxu0 %v2681
    %v2805 = vpop.f32.mrf.mxu0
    %v2806 = vadd.f32 0.0, %v2805
    %v2807 = vpop.f32.mrf.mxu0
    %2808 = vmatprep.mubr.f32.mxu0 0.0
    %2809 = vmatmul.mubr.f32.gmra.mxu0 %v2682
    %v2810 = vpop.f32.mrf.mxu0
    %v2811 = vadd.f32 0.0, %v2810
    %v2812 = vpop.f32.mrf.mxu0
    %2813 = vdwg.mxu0
    %2814 = vmatprep.subr.mxu0 0.0
    %2815 = vmatpush1.xpose.msra.mxu0 0.0
    %2816 = vmatprep.subr.mxu0 0.0
    %2817 = vmatpush1.xpose.msra.mxu0 0.0
    %2818 = vmatprep.subr.mxu0 0.0
    %2819 = vmatpush1.xpose.msra.mxu0 0.0
    %2820 = vmatprep.subr.mxu0 0.0
    %2821 = vmatpush1.xpose.msra.mxu0 0.0
    %2822 = vmatprep.subr.mxu0 0.0
    %2823 = vmatpush1.xpose.msra.mxu0 0.0
    %2824 = vmatprep.subr.mxu0 0.0
    %2825 = vmatpush1.xpose.msra.mxu0 0.0
    %2826 = vmatprep.subr.mxu0 0.0
    %2827 = vmatpush1.xpose.msra.mxu0 0.0
    %2828 = vmatprep.subr.mxu0 0.0
    %2829 = vmatpush1.xpose.msra.mxu0 0.0
    %2830 = vmatprep.subr.mxu0 0.0
    %2831 = vmatpush1.xpose.msra.mxu0 0.0
    %2832 = vmatprep.subr.mxu0 0.0
    %2833 = vmatpush1.xpose.msra.mxu0 0.0
    %2834 = vmatprep.subr.mxu0 0.0
    %2835 = vmatpush1.xpose.msra.mxu0 0.0
    %2836 = vmatprep.subr.mxu0 0.0
    %2837 = vmatpush1.xpose.msra.mxu0 0.0
    %2838 = vmatprep.subr.mxu0 0.0
    %2839 = vmatpush1.xpose.msra.mxu0 0.0
    %2840 = vmatprep.subr.mxu0 0.0
    %2841 = vmatpush1.xpose.msra.mxu0 0.0
    %2842 = vmatprep.subr.mxu0 0.0
    %2843 = vmatpush1.xpose.msra.mxu0 0.0
    %2844 = vmatprep.subr.mxu0 0.0
    %2845 = vmatpush1.xpose.msra.mxu0 %v2552
    %2846 = vmatprep.subr.mxu0 0.0
    %2847 = vmatpush2.xpose.msra.mxu0 0.0
    %2848 = vmatprep.subr.mxu0 0.0
    %2849 = vmatpush2.xpose.msra.mxu0 0.0
    %2850 = vmatprep.subr.mxu0 0.0
    %2851 = vmatpush2.xpose.msra.mxu0 0.0
    %2852 = vmatprep.subr.mxu0 0.0
    %2853 = vmatpush2.xpose.msra.mxu0 0.0
    %2854 = vmatprep.subr.mxu0 0.0
    %2855 = vmatpush2.xpose.msra.mxu0 0.0
    %2856 = vmatprep.subr.mxu0 0.0
    %2857 = vmatpush2.xpose.msra.mxu0 0.0
    %2858 = vmatprep.subr.mxu0 0.0
    %2859 = vmatpush2.xpose.msra.mxu0 0.0
    %2860 = vmatprep.subr.mxu0 0.0
    %2861 = vmatpush2.xpose.msra.mxu0 0.0
    %2862 = vmatprep.subr.mxu0 0.0
    %2863 = vmatpush2.xpose.msra.mxu0 0.0
    %2864 = vmatprep.subr.mxu0 0.0
    %2865 = vmatpush2.xpose.msra.mxu0 0.0
    %2866 = vmatprep.subr.mxu0 0.0
    %2867 = vmatpush2.xpose.msra.mxu0 0.0
    %2868 = vmatprep.subr.mxu0 0.0
    %2869 = vmatpush2.xpose.msra.mxu0 0.0
    %2870 = vmatprep.subr.mxu0 0.0
    %2871 = vmatpush2.xpose.msra.mxu0 0.0
    %2872 = vmatprep.subr.mxu0 0.0
    %2873 = vmatpush2.xpose.msra.mxu0 0.0
    %2874 = vmatprep.subr.mxu0 0.0
    %2875 = vmatpush2.xpose.msra.mxu0 0.0
    %2876 = vmatprep.subr.mxu0 0.0
    %2877 = vmatpush2.xpose.msra.mxu0 0.0
    %2878 = vmatprep.mubr.f32.mxu0 0.0
    %2879 = vmatmul.mubr.f32.gmra.mxu0 %v2683
    %v2880 = vpop.f32.mrf.mxu0
    %v2881 = vadd.f32 0.0, %v2880
    %v2882 = vpop.f32.mrf.mxu0
    %2883 = vmatprep.mubr.f32.mxu0 0.0
    %2884 = vmatmul.mubr.f32.gmra.mxu0 %v2684
    %v2885 = vpop.f32.mrf.mxu0
    %v2886 = vadd.f32 0.0, %v2885
    %v2887 = vpop.f32.mrf.mxu0
    %2888 = vmatprep.mubr.f32.mxu0 0.0
    %2889 = vmatmul.mubr.f32.gmra.mxu0 %v2685
    %v2890 = vpop.f32.mrf.mxu0
    %v2891 = vadd.f32 0.0, %v2890
    %v2892 = vpop.f32.mrf.mxu0
    %2893 = vmatprep.mubr.f32.mxu0 0.0
    %2894 = vmatmul.mubr.f32.gmra.mxu0 %v2686
    %v2895 = vpop.f32.mrf.mxu0
    %v2896 = vadd.f32 0.0, %v2895
    %v2897 = vpop.f32.mrf.mxu0
    %2898 = vmatprep.mubr.f32.mxu0 0.0
    %2899 = vmatmul.mubr.f32.gmra.mxu0 %v2687
    %v2900 = vpop.f32.mrf.mxu0
    %v2901 = vadd.f32 0.0, %v2900
    %v2902 = vpop.f32.mrf.mxu0
    %2903 = vmatprep.mubr.f32.mxu0 0.0
    %2904 = vmatmul.mubr.f32.gmra.mxu0 %v2688
    %v2905 = vpop.f32.mrf.mxu0
    %v2906 = vadd.f32 0.0, %v2905
    %v2907 = vpop.f32.mrf.mxu0
    %2908 = vmatprep.mubr.f32.mxu0 0.0
    %2909 = vmatmul.mubr.f32.gmra.mxu0 %v2689
    %v2910 = vpop.f32.mrf.mxu0
    %v2911 = vadd.f32 0.0, %v2910
    %v2912 = vpop.f32.mrf.mxu0
    %2913 = vmatprep.mubr.f32.mxu0 0.0
    %2914 = vmatmul.mubr.f32.gmra.mxu0 %v2690
    %v2915 = vpop.f32.mrf.mxu0
    %v2916 = vadd.f32 0.0, %v2915
    %v2917 = vpop.f32.mrf.mxu0
    %2918 = vmatprep.mubr.f32.mxu0 0.0
    %2919 = vmatmul.mubr.f32.gmra.mxu0 %v2691
    %v2920 = vpop.f32.mrf.mxu0
    %v2921 = vadd.f32 0.0, %v2920
    %v2922 = vpop.f32.mrf.mxu0
    %2923 = vmatprep.mubr.f32.mxu0 0.0
    %2924 = vmatmul.mubr.f32.gmra.mxu0 %v2692
    %v2925 = vpop.f32.mrf.mxu0
    %v2926 = vadd.f32 0.0, %v2925
    %v2927 = vpop.f32.mrf.mxu0
    %2928 = vmatprep.mubr.f32.mxu0 0.0
    %2929 = vmatmul.mubr.f32.gmra.mxu0 %v2693
    %v2930 = vpop.f32.mrf.mxu0
    %v2931 = vadd.f32 0.0, %v2930
    %v2932 = vpop.f32.mrf.mxu0
    %2933 = vdwg.mxu0
    %v2934 = vsel %vm1239, %v2761, -inf
    %2935 = vmax.xlane.f32.xlu0 %v2934
    %v2936 = vpop.xlane.xlu0 %2935
    %v2937 = vsel %vm1239, %v2766, -inf
    %2938 = vmax.xlane.f32.xlu0 %v2937
    %v2939 = vpop.xlane.xlu0 %2938
    %v2940 = vsel %vm1239, %v2771, -inf
    %2941 = vmax.xlane.f32.xlu0 %v2940
    %v2942 = vpop.xlane.xlu0 %2941
    %v2943 = vsel %vm1239, %v2776, -inf
    %2944 = vmax.xlane.f32.xlu0 %v2943
    %v2945 = vpop.xlane.xlu0 %2944
    %v2946 = vsel %vm1239, %v2781, -inf
    %2947 = vmax.xlane.f32.xlu0 %v2946
    %v2948 = vpop.xlane.xlu0 %2947
    %v2949 = vsel %vm1239, %v2786, -inf
    %2950 = vmax.xlane.f32.xlu0 %v2949
    %v2951 = vpop.xlane.xlu0 %2950
    %v2952 = vsel %vm1239, %v2791, -inf
    %2953 = vmax.xlane.f32.xlu0 %v2952
    %v2954 = vpop.xlane.xlu0 %2953
    %v2955 = vsel %vm1239, %v2796, -inf
    %2956 = vmax.xlane.f32.xlu0 %v2955
    %v2957 = vpop.xlane.xlu0 %2956
    %v2958 = vsel %vm1239, %v2801, -inf
    %2959 = vmax.xlane.f32.xlu0 %v2958
    %v2960 = vpop.xlane.xlu0 %2959
    %v2961 = vsel %vm1239, %v2806, -inf
    %2962 = vmax.xlane.f32.xlu0 %v2961
    %v2963 = vpop.xlane.xlu0 %2962
    %v2964 = vsel %vm1239, %v2811, -inf
    %2965 = vmax.xlane.f32.xlu0 %v2964
    %v2966 = vpop.xlane.xlu0 %2965
    %v2967 = vsel %vm1239, %v2881, -inf
    %2968 = vmax.xlane.f32.xlu0 %v2967
    %v2969 = vpop.xlane.xlu0 %2968
    %v2970 = vsel %vm1239, %v2886, -inf
    %2971 = vmax.xlane.f32.xlu0 %v2970
    %v2972 = vpop.xlane.xlu0 %2971
    %v2973 = vsel %vm1239, %v2891, -inf
    %2974 = vmax.xlane.f32.xlu0 %v2973
    %v2975 = vpop.xlane.xlu0 %2974
    %v2976 = vsel %vm1239, %v2896, -inf
    %2977 = vmax.xlane.f32.xlu0 %v2976
    %v2978 = vpop.xlane.xlu0 %2977
    %v2979 = vsel %vm1239, %v2901, -inf
    %2980 = vmax.xlane.f32.xlu0 %v2979
    %v2981 = vpop.xlane.xlu0 %2980
    %v2982 = vsel %vm1239, %v2906, -inf
    %2983 = vmax.xlane.f32.xlu0 %v2982
    %v2984 = vpop.xlane.xlu0 %2983
    %v2985 = vsel %vm1239, %v2911, -inf
    %2986 = vmax.xlane.f32.xlu0 %v2985
    %v2987 = vpop.xlane.xlu0 %2986
    %v2988 = vsel %vm1239, %v2916, -inf
    %2989 = vmax.xlane.f32.xlu0 %v2988
    %v2990 = vpop.xlane.xlu0 %2989
    %v2991 = vsel %vm1239, %v2921, -inf
    %2992 = vmax.xlane.f32.xlu0 %v2991
    %v2993 = vpop.xlane.xlu0 %2992
    %v2994 = vsel %vm1239, %v2926, -inf
    %2995 = vmax.xlane.f32.xlu0 %v2994
    %v2996 = vpop.xlane.xlu0 %2995
    %v2997 = vsel %vm1239, %v2931, -inf
    %2998 = vmax.xlane.f32.xlu0 %v2997
    %v2999 = vpop.xlane.xlu0 %2998
    %v3000 = vsub.f32 %v2761, %v2936
    %v3001 = vsub.f32 %v2766, %v2939
    %v3002 = vsub.f32 %v2771, %v2942
    %v3003 = vsub.f32 %v2776, %v2945
    %v3004 = vsub.f32 %v2781, %v2948
    %v3005 = vsub.f32 %v2786, %v2951
    %v3006 = vsub.f32 %v2791, %v2954
    %v3007 = vsub.f32 %v2796, %v2957
    %v3008 = vsub.f32 %v2801, %v2960
    %v3009 = vsub.f32 %v2806, %v2963
    %v3010 = vsub.f32 %v2811, %v2966
    %v3011 = vsub.f32 %v2881, %v2969
    %v3012 = vsub.f32 %v2886, %v2972
    %v3013 = vsub.f32 %v2891, %v2975
    %v3014 = vsub.f32 %v2896, %v2978
    %v3015 = vsub.f32 %v2901, %v2981
    %v3016 = vsub.f32 %v2906, %v2984
    %v3017 = vsub.f32 %v2911, %v2987
    %v3018 = vsub.f32 %v2916, %v2990
    %v3019 = vsub.f32 %v2921, %v2993
    %v3020 = vsub.f32 %v2926, %v2996
    %v3021 = vsub.f32 %v2931, %v2999
    %v3022 = vmul.f32 %v3000, 1.442695
    %v3023 = vpow.pop %v3022
    %v3024 = vmul.f32 %v3001, 1.442695
    %v3025 = vpow.pop %v3024
    %v3026 = vmul.f32 %v3002, 1.442695
    %v3027 = vpow.pop %v3026
    %v3028 = vmul.f32 %v3003, 1.442695
    %v3029 = vpow.pop %v3028
    %v3030 = vmul.f32 %v3004, 1.442695
    %v3031 = vpow.pop %v3030
    %v3032 = vmul.f32 %v3005, 1.442695
    %v3033 = vpow.pop %v3032
    %v3034 = vmul.f32 %v3006, 1.442695
    %v3035 = vpow.pop %v3034
    %v3036 = vmul.f32 %v3007, 1.442695
    %v3037 = vpow.pop %v3036
    %v3038 = vmul.f32 %v3008, 1.442695
    %v3039 = vpow.pop %v3038
    %v3040 = vmul.f32 %v3009, 1.442695
    %v3041 = vpow.pop %v3040
    %v3042 = vmul.f32 %v3010, 1.442695
    %v3043 = vpow.pop %v3042
    %v3044 = vmul.f32 %v3011, 1.442695
    %v3045 = vpow.pop %v3044
    %v3046 = vmul.f32 %v3012, 1.442695
    %v3047 = vpow.pop %v3046
    %v3048 = vmul.f32 %v3013, 1.442695
    %v3049 = vpow.pop %v3048
    %v3050 = vmul.f32 %v3014, 1.442695
    %v3051 = vpow.pop %v3050
    %v3052 = vmul.f32 %v3015, 1.442695
    %v3053 = vpow.pop %v3052
    %v3054 = vmul.f32 %v3016, 1.442695
    %v3055 = vpow.pop %v3054
    %v3056 = vmul.f32 %v3017, 1.442695
    %v3057 = vpow.pop %v3056
    %v3058 = vmul.f32 %v3018, 1.442695
    %v3059 = vpow.pop %v3058
    %v3060 = vmul.f32 %v3019, 1.442695
    %v3061 = vpow.pop %v3060
    %v3062 = vmul.f32 %v3020, 1.442695
    %v3063 = vpow.pop %v3062
    %v3064 = vmul.f32 %v3021, 1.442695
    %v3065 = vpow.pop %v3064
    %v3066 = vsel %vm1239, %v3023, 0.0
    %3067 = vadd.xlane.f32.xlu0 %v3066
    %v3068 = vpop.xlane.xlu0 %3067
    %v3069 = vsel %vm1239, %v3025, 0.0
    %3070 = vadd.xlane.f32.xlu0 %v3069
    %v3071 = vpop.xlane.xlu0 %3070
    %v3072 = vsel %vm1239, %v3027, 0.0
    %3073 = vadd.xlane.f32.xlu0 %v3072
    %v3074 = vpop.xlane.xlu0 %3073
    %v3075 = vsel %vm1239, %v3029, 0.0
    %3076 = vadd.xlane.f32.xlu0 %v3075
    %v3077 = vpop.xlane.xlu0 %3076
    %v3078 = vsel %vm1239, %v3031, 0.0
    %3079 = vadd.xlane.f32.xlu0 %v3078
    %v3080 = vpop.xlane.xlu0 %3079
    %v3081 = vsel %vm1239, %v3033, 0.0
    %3082 = vadd.xlane.f32.xlu0 %v3081
    %v3083 = vpop.xlane.xlu0 %3082
    %v3084 = vsel %vm1239, %v3035, 0.0
    %3085 = vadd.xlane.f32.xlu0 %v3084
    %v3086 = vpop.xlane.xlu0 %3085
    %v3087 = vsel %vm1239, %v3037, 0.0
    %3088 = vadd.xlane.f32.xlu0 %v3087
    %v3089 = vpop.xlane.xlu0 %3088
    %v3090 = vsel %vm1239, %v3039, 0.0
    %3091 = vadd.xlane.f32.xlu0 %v3090
    %v3092 = vpop.xlane.xlu0 %3091
    %v3093 = vsel %vm1239, %v3041, 0.0
    %3094 = vadd.xlane.f32.xlu0 %v3093
    %v3095 = vpop.xlane.xlu0 %3094
    %v3096 = vsel %vm1239, %v3043, 0.0
    %3097 = vadd.xlane.f32.xlu0 %v3096
    %v3098 = vpop.xlane.xlu0 %3097
    %v3099 = vsel %vm1239, %v3045, 0.0
    %3100 = vadd.xlane.f32.xlu0 %v3099
    %v3101 = vpop.xlane.xlu0 %3100
    %v3102 = vsel %vm1239, %v3047, 0.0
    %3103 = vadd.xlane.f32.xlu0 %v3102
    %v3104 = vpop.xlane.xlu0 %3103
    %v3105 = vsel %vm1239, %v3049, 0.0
    %3106 = vadd.xlane.f32.xlu0 %v3105
    %v3107 = vpop.xlane.xlu0 %3106
    %v3108 = vsel %vm1239, %v3051, 0.0
    %3109 = vadd.xlane.f32.xlu0 %v3108
    %v3110 = vpop.xlane.xlu0 %3109
    %v3111 = vsel %vm1239, %v3053, 0.0
    %3112 = vadd.xlane.f32.xlu0 %v3111
    %v3113 = vpop.xlane.xlu0 %3112
    %v3114 = vsel %vm1239, %v3055, 0.0
    %3115 = vadd.xlane.f32.xlu0 %v3114
    %v3116 = vpop.xlane.xlu0 %3115
    %v3117 = vsel %vm1239, %v3057, 0.0
    %3118 = vadd.xlane.f32.xlu0 %v3117
    %v3119 = vpop.xlane.xlu0 %3118
    %v3120 = vsel %vm1239, %v3059, 0.0
    %3121 = vadd.xlane.f32.xlu0 %v3120
    %v3122 = vpop.xlane.xlu0 %3121
    %v3123 = vsel %vm1239, %v3061, 0.0
    %3124 = vadd.xlane.f32.xlu0 %v3123
    %v3125 = vpop.xlane.xlu0 %3124
    %v3126 = vsel %vm1239, %v3063, 0.0
    %3127 = vadd.xlane.f32.xlu0 %v3126
    %v3128 = vpop.xlane.xlu0 %3127
    %v3129 = vsel %vm1239, %v3065, 0.0
    %3130 = vadd.xlane.f32.xlu0 %v3129
    %v3131 = vpop.xlane.xlu0 %3130
    %v3132 = vrcp.pop %v3068
    %v3133 = vrcp.pop %v3071
    %v3134 = vrcp.pop %v3074
    %v3135 = vrcp.pop %v3077
    %v3136 = vrcp.pop %v3080
    %v3137 = vrcp.pop %v3083
    %v3138 = vrcp.pop %v3086
    %v3139 = vrcp.pop %v3089
    %v3140 = vrcp.pop %v3092
    %v3141 = vrcp.pop %v3095
    %v3142 = vrcp.pop %v3098
    %v3143 = vrcp.pop %v3101
    %v3144 = vrcp.pop %v3104
    %v3145 = vrcp.pop %v3107
    %v3146 = vrcp.pop %v3110
    %v3147 = vrcp.pop %v3113
    %v3148 = vrcp.pop %v3116
    %v3149 = vrcp.pop %v3119
    %v3150 = vrcp.pop %v3122
    %v3151 = vrcp.pop %v3125
    %v3152 = vrcp.pop %v3128
    %v3153 = vrcp.pop %v3131
    %v3154 = vmul.f32 %v3023, %v3132
    %v3155 = vmul.f32 %v3025, %v3133
    %v3156 = vmul.f32 %v3027, %v3134
    %v3157 = vmul.f32 %v3029, %v3135
    %v3158 = vmul.f32 %v3031, %v3136
    %v3159 = vmul.f32 %v3033, %v3137
    %v3160 = vmul.f32 %v3035, %v3138
    %v3161 = vmul.f32 %v3037, %v3139
    %v3162 = vmul.f32 %v3039, %v3140
    %v3163 = vmul.f32 %v3041, %v3141
    %v3164 = vmul.f32 %v3043, %v3142
    %v3165 = vmul.f32 %v3045, %v3143
    %v3166 = vmul.f32 %v3047, %v3144
    %v3167 = vmul.f32 %v3049, %v3145
    %v3168 = vmul.f32 %v3051, %v3146
    %v3169 = vmul.f32 %v3053, %v3147
    %v3170 = vmul.f32 %v3055, %v3148
    %v3171 = vmul.f32 %v3057, %v3149
    %v3172 = vmul.f32 %v3059, %v3150
    %v3173 = vmul.f32 %v3061, %v3151
    %v3174 = vmul.f32 %v3063, %v3152
    %v3175 = vmul.f32 %v3065, %v3153
    %v3177 = vsel %vm1239, %v3154, 0
    %v3180 = vsel %vm1239, %v3155, 0
    %v3183 = vsel %vm1239, %v3156, 0
    %v3186 = vsel %vm1239, %v3157, 0
    %v3189 = vsel %vm1239, %v3158, 0
    %v3192 = vsel %vm1239, %v3159, 0
    %v3195 = vsel %vm1239, %v3160, 0
    %v3198 = vsel %vm1239, %v3161, 0
    %v3201 = vsel %vm1239, %v3162, 0
    %v3204 = vsel %vm1239, %v3163, 0
    %v3207 = vsel %vm1239, %v3164, 0
    %3209 = vmatprep.subr.mxu0 0.0
    %3210 = vmatpush1.msra.mxu0 0.0
    %3211 = vmatprep.subr.mxu0 0.0
    %3212 = vmatpush1.msra.mxu0 0.0
    %3213 = vmatprep.subr.mxu0 0.0
    %3214 = vmatpush1.msra.mxu0 0.0
    %3215 = vmatprep.subr.mxu0 0.0
    %3216 = vmatpush1.msra.mxu0 0.0
    %3217 = vmatprep.subr.mxu0 0.0
    %3218 = vmatpush1.msra.mxu0 0.0
    %3219 = vmatprep.subr.mxu0 0.0
    %3220 = vmatpush1.msra.mxu0 0.0
    %3221 = vmatprep.subr.mxu0 0.0
    %3222 = vmatpush1.msra.mxu0 0.0
    %3223 = vmatprep.subr.mxu0 0.0
    %3224 = vmatpush1.msra.mxu0 0.0
    %3225 = vmatprep.subr.mxu0 0.0
    %3226 = vmatpush1.msra.mxu0 0.0
    %3227 = vmatprep.subr.mxu0 0.0
    %3228 = vmatpush1.msra.mxu0 0.0
    %3229 = vmatprep.subr.mxu0 0.0
    %3230 = vmatpush1.msra.mxu0 0.0
    %3231 = vmatprep.subr.mxu0 0.0
    %3232 = vmatpush1.msra.mxu0 0.0
    %3233 = vmatprep.subr.mxu0 0.0
    %3234 = vmatpush1.msra.mxu0 0.0
    %3235 = vmatprep.subr.mxu0 0.0
    %3236 = vmatpush1.msra.mxu0 0.0
    %3237 = vmatprep.subr.mxu0 0.0
    %3238 = vmatpush1.msra.mxu0 0.0
    %3239 = vmatprep.subr.mxu0 0.0
    %3240 = vmatpush1.msra.mxu0 %v2589
    %3241 = vmatprep.subr.mxu0 0.0
    %3242 = vmatpush2.msra.mxu0 0.0
    %3243 = vmatprep.subr.mxu0 0.0
    %3244 = vmatpush2.msra.mxu0 0.0
    %3245 = vmatprep.subr.mxu0 0.0
    %3246 = vmatpush2.msra.mxu0 0.0
    %3247 = vmatprep.subr.mxu0 0.0
    %3248 = vmatpush2.msra.mxu0 0.0
    %3249 = vmatprep.subr.mxu0 0.0
    %3250 = vmatpush2.msra.mxu0 0.0
    %3251 = vmatprep.subr.mxu0 0.0
    %3252 = vmatpush2.msra.mxu0 0.0
    %3253 = vmatprep.subr.mxu0 0.0
    %3254 = vmatpush2.msra.mxu0 0.0
    %3255 = vmatprep.subr.mxu0 0.0
    %3256 = vmatpush2.msra.mxu0 0.0
    %3257 = vmatprep.subr.mxu0 0.0
    %3258 = vmatpush2.msra.mxu0 0.0
    %3259 = vmatprep.subr.mxu0 0.0
    %3260 = vmatpush2.msra.mxu0 0.0
    %3261 = vmatprep.subr.mxu0 0.0
    %3262 = vmatpush2.msra.mxu0 0.0
    %3263 = vmatprep.subr.mxu0 0.0
    %3264 = vmatpush2.msra.mxu0 0.0
    %3265 = vmatprep.subr.mxu0 0.0
    %3266 = vmatpush2.msra.mxu0 0.0
    %3267 = vmatprep.subr.mxu0 0.0
    %3268 = vmatpush2.msra.mxu0 0.0
    %3269 = vmatprep.subr.mxu0 0.0
    %3270 = vmatpush2.msra.mxu0 0.0
    %3271 = vmatprep.subr.mxu0 0.0
    %3272 = vmatpush2.msra.mxu0 0.0
    %3273 = vmatprep.mubr.f32.mxu0 0.0
    %3274 = vmatmul.mubr.f32.gmra.mxu0 %v3177
    %v3275 = vpop.f32.mrf.mxu0
    %v3276 = vadd.f32 0.0, %v3275
    %v3277 = vpop.f32.mrf.mxu0
    %3278 = vmatprep.mubr.f32.mxu0 0.0
    %3279 = vmatmul.mubr.f32.gmra.mxu0 %v3180
    %v3280 = vpop.f32.mrf.mxu0
    %v3281 = vadd.f32 0.0, %v3280
    %v3282 = vpop.f32.mrf.mxu0
    %3283 = vmatprep.mubr.f32.mxu0 0.0
    %3284 = vmatmul.mubr.f32.gmra.mxu0 %v3183
    %v3285 = vpop.f32.mrf.mxu0
    %v3286 = vadd.f32 0.0, %v3285
    %v3287 = vpop.f32.mrf.mxu0
    %3288 = vmatprep.mubr.f32.mxu0 0.0
    %3289 = vmatmul.mubr.f32.gmra.mxu0 %v3186
    %v3290 = vpop.f32.mrf.mxu0
    %v3291 = vadd.f32 0.0, %v3290
    %v3292 = vpop.f32.mrf.mxu0
    %3293 = vmatprep.mubr.f32.mxu0 0.0
    %3294 = vmatmul.mubr.f32.gmra.mxu0 %v3189
    %v3295 = vpop.f32.mrf.mxu0
    %v3296 = vadd.f32 0.0, %v3295
    %v3297 = vpop.f32.mrf.mxu0
    %3298 = vmatprep.mubr.f32.mxu0 0.0
    %3299 = vmatmul.mubr.f32.gmra.mxu0 %v3192
    %v3300 = vpop.f32.mrf.mxu0
    %v3301 = vadd.f32 0.0, %v3300
    %v3302 = vpop.f32.mrf.mxu0
    %3303 = vmatprep.mubr.f32.mxu0 0.0
    %3304 = vmatmul.mubr.f32.gmra.mxu0 %v3195
    %v3305 = vpop.f32.mrf.mxu0
    %v3306 = vadd.f32 0.0, %v3305
    %v3307 = vpop.f32.mrf.mxu0
    %3308 = vmatprep.mubr.f32.mxu0 0.0
    %3309 = vmatmul.mubr.f32.gmra.mxu0 %v3198
    %v3310 = vpop.f32.mrf.mxu0
    %v3311 = vadd.f32 0.0, %v3310
    %v3312 = vpop.f32.mrf.mxu0
    %3313 = vmatprep.mubr.f32.mxu0 0.0
    %3314 = vmatmul.mubr.f32.gmra.mxu0 %v3201
    %v3315 = vpop.f32.mrf.mxu0
    %v3316 = vadd.f32 0.0, %v3315
    %v3317 = vpop.f32.mrf.mxu0
    %3318 = vmatprep.mubr.f32.mxu0 0.0
    %3319 = vmatmul.mubr.f32.gmra.mxu0 %v3204
    %v3320 = vpop.f32.mrf.mxu0
    %v3321 = vadd.f32 0.0, %v3320
    %v3322 = vpop.f32.mrf.mxu0
    %3323 = vmatprep.mubr.f32.mxu0 0.0
    %3324 = vmatmul.mubr.f32.gmra.mxu0 %v3207
    %v3325 = vpop.f32.mrf.mxu0
    %v3326 = vadd.f32 0.0, %v3325
    %v3327 = vpop.f32.mrf.mxu0
    %3328 = vdwg.mxu0
    %v3330 = vsel %vm1239, %v3165, 0
    %v3333 = vsel %vm1239, %v3166, 0
    %v3336 = vsel %vm1239, %v3167, 0
    %v3339 = vsel %vm1239, %v3168, 0
    %v3342 = vsel %vm1239, %v3169, 0
    %v3345 = vsel %vm1239, %v3170, 0
    %v3348 = vsel %vm1239, %v3171, 0
    %v3351 = vsel %vm1239, %v3172, 0
    %v3354 = vsel %vm1239, %v3173, 0
    %v3357 = vsel %vm1239, %v3174, 0
    %v3360 = vsel %vm1239, %v3175, 0
    %3362 = vmatprep.subr.mxu0 0.0
    %3363 = vmatpush1.msra.mxu0 0.0
    %3364 = vmatprep.subr.mxu0 0.0
    %3365 = vmatpush1.msra.mxu0 0.0
    %3366 = vmatprep.subr.mxu0 0.0
    %3367 = vmatpush1.msra.mxu0 0.0
    %3368 = vmatprep.subr.mxu0 0.0
    %3369 = vmatpush1.msra.mxu0 0.0
    %3370 = vmatprep.subr.mxu0 0.0
    %3371 = vmatpush1.msra.mxu0 0.0
    %3372 = vmatprep.subr.mxu0 0.0
    %3373 = vmatpush1.msra.mxu0 0.0
    %3374 = vmatprep.subr.mxu0 0.0
    %3375 = vmatpush1.msra.mxu0 0.0
    %3376 = vmatprep.subr.mxu0 0.0
    %3377 = vmatpush1.msra.mxu0 0.0
    %3378 = vmatprep.subr.mxu0 0.0
    %3379 = vmatpush1.msra.mxu0 0.0
    %3380 = vmatprep.subr.mxu0 0.0
    %3381 = vmatpush1.msra.mxu0 0.0
    %3382 = vmatprep.subr.mxu0 0.0
    %3383 = vmatpush1.msra.mxu0 0.0
    %3384 = vmatprep.subr.mxu0 0.0
    %3385 = vmatpush1.msra.mxu0 0.0
    %3386 = vmatprep.subr.mxu0 0.0
    %3387 = vmatpush1.msra.mxu0 0.0
    %3388 = vmatprep.subr.mxu0 0.0
    %3389 = vmatpush1.msra.mxu0 0.0
    %3390 = vmatprep.subr.mxu0 0.0
    %3391 = vmatpush1.msra.mxu0 0.0
    %3392 = vmatprep.subr.mxu0 0.0
    %3393 = vmatpush1.msra.mxu0 %v2592
    %3394 = vmatprep.subr.mxu0 0.0
    %3395 = vmatpush2.msra.mxu0 0.0
    %3396 = vmatprep.subr.mxu0 0.0
    %3397 = vmatpush2.msra.mxu0 0.0
    %3398 = vmatprep.subr.mxu0 0.0
    %3399 = vmatpush2.msra.mxu0 0.0
    %3400 = vmatprep.subr.mxu0 0.0
    %3401 = vmatpush2.msra.mxu0 0.0
    %3402 = vmatprep.subr.mxu0 0.0
    %3403 = vmatpush2.msra.mxu0 0.0
    %3404 = vmatprep.subr.mxu0 0.0
    %3405 = vmatpush2.msra.mxu0 0.0
    %3406 = vmatprep.subr.mxu0 0.0
    %3407 = vmatpush2.msra.mxu0 0.0
    %3408 = vmatprep.subr.mxu0 0.0
    %3409 = vmatpush2.msra.mxu0 0.0
    %3410 = vmatprep.subr.mxu0 0.0
    %3411 = vmatpush2.msra.mxu0 0.0
    %3412 = vmatprep.subr.mxu0 0.0
    %3413 = vmatpush2.msra.mxu0 0.0
    %3414 = vmatprep.subr.mxu0 0.0
    %3415 = vmatpush2.msra.mxu0 0.0
    %3416 = vmatprep.subr.mxu0 0.0
    %3417 = vmatpush2.msra.mxu0 0.0
    %3418 = vmatprep.subr.mxu0 0.0
    %3419 = vmatpush2.msra.mxu0 0.0
    %3420 = vmatprep.subr.mxu0 0.0
    %3421 = vmatpush2.msra.mxu0 0.0
    %3422 = vmatprep.subr.mxu0 0.0
    %3423 = vmatpush2.msra.mxu0 0.0
    %3424 = vmatprep.subr.mxu0 0.0
    %3425 = vmatpush2.msra.mxu0 0.0
    %3426 = vmatprep.mubr.f32.mxu0 0.0
    %3427 = vmatmul.mubr.f32.gmra.mxu0 %v3330
    %v3428 = vpop.f32.mrf.mxu0
    %v3429 = vadd.f32 0.0, %v3428
    %v3430 = vpop.f32.mrf.mxu0
    %3431 = vmatprep.mubr.f32.mxu0 0.0
    %3432 = vmatmul.mubr.f32.gmra.mxu0 %v3333
    %v3433 = vpop.f32.mrf.mxu0
    %v3434 = vadd.f32 0.0, %v3433
    %v3435 = vpop.f32.mrf.mxu0
    %3436 = vmatprep.mubr.f32.mxu0 0.0
    %3437 = vmatmul.mubr.f32.gmra.mxu0 %v3336
    %v3438 = vpop.f32.mrf.mxu0
    %v3439 = vadd.f32 0.0, %v3438
    %v3440 = vpop.f32.mrf.mxu0
    %3441 = vmatprep.mubr.f32.mxu0 0.0
    %3442 = vmatmul.mubr.f32.gmra.mxu0 %v3339
    %v3443 = vpop.f32.mrf.mxu0
    %v3444 = vadd.f32 0.0, %v3443
    %v3445 = vpop.f32.mrf.mxu0
    %3446 = vmatprep.mubr.f32.mxu0 0.0
    %3447 = vmatmul.mubr.f32.gmra.mxu0 %v3342
    %v3448 = vpop.f32.mrf.mxu0
    %v3449 = vadd.f32 0.0, %v3448
    %v3450 = vpop.f32.mrf.mxu0
    %3451 = vmatprep.mubr.f32.mxu0 0.0
    %3452 = vmatmul.mubr.f32.gmra.mxu0 %v3345
    %v3453 = vpop.f32.mrf.mxu0
    %v3454 = vadd.f32 0.0, %v3453
    %v3455 = vpop.f32.mrf.mxu0
    %3456 = vmatprep.mubr.f32.mxu0 0.0
    %3457 = vmatmul.mubr.f32.gmra.mxu0 %v3348
    %v3458 = vpop.f32.mrf.mxu0
    %v3459 = vadd.f32 0.0, %v3458
    %v3460 = vpop.f32.mrf.mxu0
    %3461 = vmatprep.mubr.f32.mxu0 0.0
    %3462 = vmatmul.mubr.f32.gmra.mxu0 %v3351
    %v3463 = vpop.f32.mrf.mxu0
    %v3464 = vadd.f32 0.0, %v3463
    %v3465 = vpop.f32.mrf.mxu0
    %3466 = vmatprep.mubr.f32.mxu0 0.0
    %3467 = vmatmul.mubr.f32.gmra.mxu0 %v3354
    %v3468 = vpop.f32.mrf.mxu0
    %v3469 = vadd.f32 0.0, %v3468
    %v3470 = vpop.f32.mrf.mxu0
    %3471 = vmatprep.mubr.f32.mxu0 0.0
    %3472 = vmatmul.mubr.f32.gmra.mxu0 %v3357
    %v3473 = vpop.f32.mrf.mxu0
    %v3474 = vadd.f32 0.0, %v3473
    %v3475 = vpop.f32.mrf.mxu0
    %3476 = vmatprep.mubr.f32.mxu0 0.0
    %3477 = vmatmul.mubr.f32.gmra.mxu0 %v3360
    %v3478 = vpop.f32.mrf.mxu0
    %v3479 = vadd.f32 0.0, %v3478
    %v3480 = vpop.f32.mrf.mxu0
    %3481 = vdwg.mxu0
    %v3482 = vmul.f32 %v3276, %v2661
    %v3483 = vmul.f32 %v3281, %v2662
    %v3484 = vmul.f32 %v3286, %v2663
    %v3485 = vmul.f32 %v3291, %v2664
    %v3486 = vmul.f32 %v3296, %v2665
    %v3487 = vmul.f32 %v3301, %v2666
    %v3488 = vmul.f32 %v3306, %v2667
    %v3489 = vmul.f32 %v3311, %v2668
    %v3490 = vmul.f32 %v3316, %v2669
    %v3491 = vmul.f32 %v3321, %v2670
    %v3492 = vmul.f32 %v3326, %v2671
    %v3493 = vmul.f32 %v3429, %v2661
    %v3494 = vmul.f32 %v3434, %v2662
    %v3495 = vmul.f32 %v3439, %v2663
    %v3496 = vmul.f32 %v3444, %v2664
    %v3497 = vmul.f32 %v3449, %v2665
    %v3498 = vmul.f32 %v3454, %v2666
    %v3499 = vmul.f32 %v3459, %v2667
    %v3500 = vmul.f32 %v3464, %v2668
    %v3501 = vmul.f32 %v3469, %v2669
    %v3502 = vmul.f32 %v3474, %v2670
    %v3503 = vmul.f32 %v3479, %v2671
    %v3504 = vadd.f32 %v3482, %v3483
    %v3505 = vadd.f32 %v3504, %v3484
    %v3506 = vadd.f32 %v3505, %v3485
    %v3507 = vadd.f32 %v3506, %v3486
    %v3508 = vadd.f32 %v3507, %v3487
    %v3509 = vadd.f32 %v3508, %v3488
    %v3510 = vadd.f32 %v3509, %v3489
    %v3511 = vadd.f32 %v3510, %v3490
    %v3512 = vadd.f32 %v3511, %v3491
    %v3513 = vadd.f32 %v3512, %v3492
    %v3514 = vadd.f32 %v3493, %v3494
    %v3515 = vadd.f32 %v3514, %v3495
    %v3516 = vadd.f32 %v3515, %v3496
    %v3517 = vadd.f32 %v3516, %v3497
    %v3518 = vadd.f32 %v3517, %v3498
    %v3519 = vadd.f32 %v3518, %v3499
    %v3520 = vadd.f32 %v3519, %v3500
    %v3521 = vadd.f32 %v3520, %v3501
    %v3522 = vadd.f32 %v3521, %v3502
    %v3523 = vadd.f32 %v3522, %v3503
    %v3524 = vpack.c.bf16 %v3523, %v3513
    %v3525 = vld [vmem:[%s8] sm:$0xf]
    %v3526 = vld [vmem:[%s8 + $0x4] sm:$0xf]
    %v3527 = vld [vmem:[%s8 + $0x8] sm:$0xf]
    %v3528 = vld [vmem:[%s8 + $0xc] sm:$0xf]
    %v3529 = vld [vmem:[%s8 + $0x10] sm:$0xf]
    %v3530 = vld [vmem:[%s8 + $0x14] sm:$0xf]
    %v3531 = vld [vmem:[%s8 + $0x18] sm:$0xf]
    %v3532 = vld [vmem:[%s8 + $0x1c] sm:$0xf]
    %v3533 = vld [vmem:[%s8 + $0x20] sm:$0xf]
    %v3534 = vld [vmem:[%s8 + $0x24] sm:$0xf]
    %v3535 = vld [vmem:[%s8 + $0x28] sm:$0xf]
    %v3536 = vld [vmem:[%s8 + $0x2c] sm:$0xf]
    %v3537 = vld [vmem:[%s8 + $0x30] sm:$0xf]
    %v3538 = vld [vmem:[%s8 + $0x34] sm:$0xf]
    %v3539 = vld [vmem:[%s8 + $0x38] sm:$0xf]
    %v3540 = vld [vmem:[%s8 + $0x3c] sm:$0xf]
    %v3541 = vld [vmem:[%s9] sm:$0x1]
    %v3543 = vlaneseq
    %v3544 = vshrl.u32 %v3543, 7
    %v3545 = vsub.s32 0, %v3544
    %v3546 = vrot.slane %v3541, %v3545
    %v3564 = vunpack.c.l.b16 %v3525
    %v3565 = vunpack.c.l.b16 %v3526
    %v3566 = vunpack.c.l.b16 %v3527
    %v3567 = vunpack.c.l.b16 %v3528
    %v3568 = vunpack.c.l.b16 %v3529
    %v3569 = vunpack.c.l.b16 %v3530
    %v3570 = vunpack.c.l.b16 %v3531
    %v3571 = vunpack.c.l.b16 %v3532
    %v3572 = vunpack.c.l.b16 %v3533
    %v3573 = vunpack.c.l.b16 %v3534
    %v3574 = vunpack.c.l.b16 %v3535
    %v3575 = vunpack.c.l.b16 %v3536
    %v3576 = vunpack.c.l.b16 %v3537
    %v3577 = vunpack.c.l.b16 %v3538
    %v3578 = vunpack.c.l.b16 %v3539
    %v3579 = vunpack.c.l.b16 %v3540
    %v3580 = vpack.c.b16 %v3565, %v3564
    %v3581 = vpack.c.b16 %v3567, %v3566
    %v3582 = vpack.c.b16 %v3569, %v3568
    %v3583 = vpack.c.b16 %v3571, %v3570
    %v3584 = vpack.c.b16 %v3573, %v3572
    %v3585 = vpack.c.b16 %v3575, %v3574
    %v3586 = vpack.c.b16 %v3577, %v3576
    %v3587 = vpack.c.b16 %v3579, %v3578
    %3596 = vmatprep.subr.bf16.mxu0 0
    %3597 = vmatpush1.bf16.msra.mxu0 %v3587
    %3598 = vmatprep.subr.bf16.mxu0 0
    %3599 = vmatpush1.bf16.msra.mxu0 %v3586
    %3600 = vmatprep.subr.bf16.mxu0 0
    %3601 = vmatpush1.bf16.msra.mxu0 %v3585
    %3602 = vmatprep.subr.bf16.mxu0 0
    %3603 = vmatpush1.bf16.msra.mxu0 %v3584
    %3604 = vmatprep.subr.bf16.mxu0 0
    %3605 = vmatpush1.bf16.msra.mxu0 %v3583
    %3606 = vmatprep.subr.bf16.mxu0 0
    %3607 = vmatpush1.bf16.msra.mxu0 %v3582
    %3608 = vmatprep.subr.bf16.mxu0 0
    %3609 = vmatpush1.bf16.msra.mxu0 %v3581
    %3610 = vmatprep.subr.bf16.mxu0 0
    %3611 = vmatpush1.bf16.msra.mxu0 %v3580
    %3612 = vmatprep.subr.bf16.mxu0 0
    %3613 = vmatpush2.bf16.msra.mxu0 0
    %3614 = vmatprep.subr.bf16.mxu0 0
    %3615 = vmatpush2.bf16.msra.mxu0 0
    %3616 = vmatprep.subr.bf16.mxu0 0
    %3617 = vmatpush2.bf16.msra.mxu0 0
    %3618 = vmatprep.subr.bf16.mxu0 0
    %3619 = vmatpush2.bf16.msra.mxu0 0
    %3620 = vmatprep.subr.bf16.mxu0 0
    %3621 = vmatpush2.bf16.msra.mxu0 0
    %3622 = vmatprep.subr.bf16.mxu0 0
    %3623 = vmatpush2.bf16.msra.mxu0 0
    %3624 = vmatprep.subr.bf16.mxu0 0
    %3625 = vmatpush2.bf16.msra.mxu0 0
    %3626 = vmatprep.subr.bf16.mxu0 0
    %3627 = vmatpush2.bf16.msra.mxu0 0
    %3628 = vmatprep.mubr.bf16.mxu0 0
    %3629 = vmatmul.mubr.bf16.gmra.mxu0 %v3524
    %v3630 = vpop.f32.mrf.mxu0
    %v3631 = vadd.f32 %v3546, %v3630
    %v3632 = vpop.f32.mrf.mxu0
    %v3633 = vpop.f32.mrf.mxu0
    %v3634 = vadd.f32 %v3546, %v3633
    %v3635 = vpop.f32.mrf.mxu0
    %3636 = vdwg.mxu0
    %3637 = vst.msk [vmem:[#allocation6] sm:$0xff] %vm2497, %v3631
    %3638 = vst.msk [vmem:[#allocation6 + $0x8] sm:$0xff] %vm2497, %v3634
    // Predicated region
    $region46: #{tpu_custom_call.1} parent=1 // pred_check
      _
    $region47: #{tpu_custom_call.1} parent=1 // pred_check_branch
      %3640 = sbr.rel (0) target = $region49
    $region48: #{tpu_custom_call.1} parent=1 // pred_region
      %s3642 = ssub.s32 512, 512
      %3643 = vsyncadd [#allocation4], %s3642
      %s3644 = sshll.u32 [#allocation5], 4
      %s3645 = int_to_ptr.vmem [resolvable:$true] %s3644
      %3650 = dma.vmem_to_hbm [thread:$0]  %s3645, 512, %s10, [#allocation4], 256, 256, 16
    $region49: #{tpu_custom_call.1} parent=1 // pred_fallthru
      _
    // Predicated region
    $region50: #{tpu_custom_call.1} parent=1 // pred_check
      _
    $region51: #{tpu_custom_call.1} parent=1 // pred_check_branch
      %3652 = sbr.rel (0) target = $region53
    $region52: #{tpu_custom_call.1} parent=1 // pred_region
      %s3654 = ssub.s32 256, 256
      %3655 = vsyncadd [#allocation7], %s3654
      %s3656 = sshll.u32 [#allocation6], 4
      %s3657 = int_to_ptr.vmem [resolvable:$true] %s3656
      %3662 = dma.vmem_to_hbm [thread:$0]  %s3657, 256, %s11, [#allocation7], 128, 128, 8
    $region53: #{tpu_custom_call.1} parent=1 // pred_fallthru
      _
    // Predicated region
    $region54: #{tpu_custom_call.1} parent=1 // pred_check
      _
    $region55: #{tpu_custom_call.1} parent=1 // pred_check_branch
      %3664 = sbr.rel (0) target = $region57
    $region56: #{tpu_custom_call.1} parent=1 // pred_region
      %3665 = dma.done [#allocation4], 512
    $region57: #{tpu_custom_call.1} parent=1 // pred_fallthru
      _
    // Predicated region
    $region58: #{tpu_custom_call.1} parent=1 // pred_check
      _
    $region59: #{tpu_custom_call.1} parent=1 // pred_check_branch
      %3667 = sbr.rel (0) target = $region61
    $region60: #{tpu_custom_call.1} parent=1 // pred_region
      %3668 = dma.done [#allocation7], 256
    $region61: #{tpu_custom_call.1} parent=1 // pred_fallthru
      _
    %3669 = vsyncpa [#allocation3], 1
    %3670 = vsyncpa [#allocation4], 1
    %3671 = vsyncpa [#allocation7], 1

</llo_original>
